<compile_context>
chip_gen: v5e
topology: v5e:2x2
jax: 0.10.0
libtpu: 0.0.40
codegen_flags: <defaults>
</compile_context>

<pallas_src>
import functools

import jax
import jax.numpy as jnp
from jax.experimental import pallas as pl
from jax.experimental.pallas import tpu as pltpu


def _round_up(x, m):
    return -(-x // m) * m


def _rnn_chunk_kernel(t_chunk,
                      mem_ref, x_ref, y_ref, tr_ref,
                      wm_ref, wx_ref, bh_ref, wy_ref, by_ref,
                      pred_ref, loss_ref, hidden_ref,
                      h_carry_ref):
    """One grid step = T_CHUNK timesteps of one batch block."""
    c = pl.program_id(1)

    @pl.when(c == 0)
    def _():
        h_carry_ref[...] = mem_ref[...]          # memory seeds the recurrence

    block_b = h_carry_ref.shape[0]
    col = jax.lax.broadcasted_iota(jnp.int32, (block_b, t_chunk), 1)

    def step(tt, carry):
        h, p_acc, l_acc = carry
        x_t = x_ref[tt]                          # (Bb, n_input)
        y_t = y_ref[tt]                          # (Bb, n_questions)
        tr_t = tr_ref[tt]                        # (Bb, 1)

        # hidden = tanh(lin_m(memory) + lin_x(input_x)); bias bh = bm + bx.
        h = jnp.tanh(
            jnp.dot(h, wm_ref[...], preferred_element_type=jnp.float32)
            + jnp.dot(x_t, wx_ref[...], preferred_element_type=jnp.float32)
            + bh_ref[...])
        hidden_ref[tt] = h.astype(hidden_ref.dtype)

        # pred_output = sigmoid(lin_y(hidden)); dropout == identity in eval mode.
        # TODO(synk): training-mode dropout (pltpu.prng_*) not implemented.
        logits = (jnp.dot(h, wy_ref[...], preferred_element_type=jnp.float32)
                  + by_ref[...])
        p = jnp.sum(jax.nn.sigmoid(logits) * y_t, axis=1, keepdims=True)   # (Bb, 1)

        # BCELoss(reduction='none') with PyTorch's -100 clamp on the log terms.
        log_p = jnp.maximum(jnp.log(p), -100.0)
        log_1mp = jnp.maximum(jnp.log(1.0 - p), -100.0)
        l = -(tr_t * log_p + (1.0 - tr_t) * log_1mp)                       # (Bb, 1)

        # Scatter column tt of the small, register-resident chunk accumulators.
        hit = col == tt
        return h, jnp.where(hit, p, p_acc), jnp.where(hit, l, l_acc)

    init = (h_carry_ref[...],
            jnp.zeros((block_b, t_chunk), jnp.float32),
            jnp.zeros((block_b, t_chunk), jnp.float32))
    h_fin, p_chunk, l_chunk = jax.lax.fori_loop(0, t_chunk, step, init, unroll=True)

    h_carry_ref[...] = h_fin                     # carry to the next chunk
    # One dense, time-major chunk store (transpose rides the otherwise-idle XLU).
    pred_ref[...] = p_chunk.T
    loss_ref[...] = l_chunk.T


@functools.partial(jax.jit, static_argnames=("block_b", "t_chunk"))
def rnn_layer_sequence_forward(memory, xs, ys, truths, params,
                               block_b=None, t_chunk=8):
    """Run RNNLayer.forward over T fused timesteps (memory_{t+1} = hidden_t).

    memory : (B, n_hidden)   initial memory
    xs     : (T, B, n_input)
    ys     : (T, B, n_questions)
    truths : (T, B)
    Returns preds (T, B), losses (T, B), hiddens (T, B, n_hidden).
    """
    T, B, n_input = xs.shape
    n_hidden = memory.shape[1]
    n_questions = ys.shape[2]
    wm, wx, bh, wy, by = (params["wm"], params["wx"], params["bh"],
                          params["wy"], params["by"])

    # --- batch block size: fill the MXU M dim, keep >=2 blocks for v7x megacore.
    if block_b is None:
        if B >= 256:
            half = _round_up(B, 128) // 2
            block_b = min(512, max(128, (half // 128) * 128))
        elif B >= 128:
            block_b = 128
        else:
            block_b = _round_up(B, 8)

    # --- timestep chunk: amortize per-grid-step overhead over T_CHUNK steps.
    if T <= t_chunk:
        t_chunk = T                      # single chunk spans the whole (short) T
    else:
        t_chunk = _round_up(t_chunk, 8)  # sublane-tile constraint on pred/loss blocks
    t_pad = _round_up(T, t_chunk)

    # --- padding (batch to block_b, time to t_chunk); pads are sliced off at the end.
    b_pad = _round_up(B, block_b)
    if b_pad != B:
        pad = b_pad - B
        memory = jnp.pad(memory, ((0, pad), (0, 0)))
        xs = jnp.pad(xs, ((0, 0), (0, pad), (0, 0)))
        ys = jnp.pad(ys, ((0, 0), (0, pad), (0, 0)))
        truths = jnp.pad(truths, ((0, 0), (0, pad)))
    if t_pad != T:
        pad = t_pad - T
        xs = jnp.pad(xs, ((0, pad), (0, 0), (0, 0)))
        ys = jnp.pad(ys, ((0, pad), (0, 0), (0, 0)))
        truths = jnp.pad(truths, ((0, pad), (0, 0)))
    truths = truths[..., None].astype(jnp.float32)        # (t_pad, b_pad, 1)

    # --- explicit VMEM budget (double-buffered streams + resident weights + outputs).
    def tile_bytes(*dims):
        lead = 1
        for d in dims[:-2]:
            lead *= d
        return lead * _round_up(dims[-2], 8) * _round_up(dims[-1], 128) * 4

    streamed = 2 * (tile_bytes(t_chunk, block_b, n_input)
                    + tile_bytes(t_chunk, block_b, n_questions)
                    + tile_bytes(t_chunk, block_b, 1)
                    + tile_bytes(t_chunk, block_b, n_hidden))      # hidden out
    chunk_out = 2 * 2 * tile_bytes(t_chunk, block_b)               # pred + loss
    resident = 2 * (tile_bytes(block_b, n_hidden)                  # memory block
                    + tile_bytes(n_hidden, n_hidden)
                    + tile_bytes(n_input, n_hidden)
                    + tile_bytes(n_hidden, n_questions)
                    + tile_bytes(1, n_hidden) + tile_bytes(1, n_questions))
    scratch = tile_bytes(block_b, n_hidden)
    vmem_limit = int(min(max(streamed + chunk_out + resident + scratch + (4 << 20),
                             32 << 20),
                         64 << 20))                                # v7x-safe cap

    kernel = functools.partial(_rnn_chunk_kernel, t_chunk)
    const2 = lambda b, c: (0, 0)

    preds, losses, hiddens = pl.pallas_call(
        kernel,
        out_shape=(
            jax.ShapeDtypeStruct((t_pad, b_pad), jnp.float32),             # pred (time-major)
            jax.ShapeDtypeStruct((t_pad, b_pad), jnp.float32),             # loss (time-major)
            jax.ShapeDtypeStruct((t_pad, b_pad, n_hidden), jnp.float32),   # hidden
        ),
        grid_spec=pltpu.PrefetchScalarGridSpec(
            num_scalar_prefetch=0,
            grid=(b_pad // block_b, t_pad // t_chunk),
            in_specs=[
                pl.BlockSpec((block_b, n_hidden), lambda b, c: (b, 0)),                 # memory
                pl.BlockSpec((t_chunk, block_b, n_input), lambda b, c: (c, b, 0)),      # x chunk
                pl.BlockSpec((t_chunk, block_b, n_questions), lambda b, c: (c, b, 0)),  # y chunk
                pl.BlockSpec((t_chunk, block_b, 1), lambda b, c: (c, b, 0)),            # truth chunk
                pl.BlockSpec(wm.shape, const2),        # weights / biases: DMA'd once,
                pl.BlockSpec(wx.shape, const2),        # VMEM-resident across the grid
                pl.BlockSpec(bh.shape, const2),
                pl.BlockSpec(wy.shape, const2),
                pl.BlockSpec(by.shape, const2),
            ],
            out_specs=(
                pl.BlockSpec((t_chunk, block_b), lambda b, c: (c, b)),
                pl.BlockSpec((t_chunk, block_b), lambda b, c: (c, b)),
                pl.BlockSpec((t_chunk, block_b, n_hidden), lambda b, c: (c, b, 0)),
            ),
            scratch_shapes=[pltpu.VMEM((block_b, n_hidden), jnp.float32)],  # hidden carry
        ),
        compiler_params=pltpu.CompilerParams(
            dimension_semantics=("parallel", "arbitrary"),
            vmem_limit_bytes=vmem_limit),
    )(memory, xs, ys, truths, wm, wx, bh, wy, by)

    return preds[:T, :B], losses[:T, :B], hiddens[:T, :B, :]


def rnn_layer_forward(memory, input_x, input_y, truth, params):
    """Single-step forward matching RNNLayer.forward (eval mode)."""
    B = memory.shape[0]
    truth_seq = (jnp.zeros((1, B), jnp.float32) if truth is None
                 else jnp.asarray(truth, jnp.float32).reshape(1, B))
    preds, losses, hiddens = rnn_layer_sequence_forward(
        memory, input_x[None], input_y[None], truth_seq, params)
    return preds[0], (None if truth is None else losses[0]), hiddens[0]


def init_params(key, n_input, n_hidden, n_questions):
    """nn.Linear-style U(-1/sqrt(fan_in), 1/sqrt(fan_in)) init, weights stored (in, out)."""
    ks = jax.random.split(key, 6)

    def linear(kw, kb, fan_in, fan_out):
        bound = 1.0 / jnp.sqrt(fan_in)
        w = jax.random.uniform(kw, (fan_in, fan_out), jnp.float32, -bound, bound)
        b = jax.random.uniform(kb, (1, fan_out), jnp.float32, -bound, bound)
        return w, b

    wm, bm = linear(ks[0], ks[1], n_hidden, n_hidden)
    wx, bx = linear(ks[2], ks[3], n_input, n_hidden)
    wy, by = linear(ks[4], ks[5], n_hidden, n_questions)
    return {"wm": wm, "bm": bm, "wx": wx, "bx": bx, "wy": wy, "by": by}


def prepare_params(params):
    """Kernel-side params: lin_m / lin_x biases pre-summed (bh = bm + bx).

    Weights stay f32 for exact parity with the PyTorch module; bf16 storage with
    f32 MXU accumulation is an easy v6e/v7x follow-up (widen test tolerances).
    """
    return {"wm": params["wm"], "wx": params["wx"],
            "bh": params["bm"] + params["bx"],
            "wy": params["wy"], "by": params["by"]}


if __name__ == "__main__":
    # Small shapes; T=20 with t_chunk=8 exercises the multi-chunk carry + T padding.
    B, T, n_input, n_hidden, n_questions = 16, 20, 16, 32, 24

    key = jax.random.PRNGKey(0)
    k_par, k_mem, k_x, k_y, k_t = jax.random.split(key, 5)

    raw = init_params(k_par, n_input, n_hidden, n_questions)
    params = prepare_params(raw)

    memory0 = jax.random.normal(k_mem, (B, n_hidden), jnp.float32)
    xs = jax.random.normal(k_x, (T, B, n_input), jnp.float32)
    q_ids = jax.random.randint(k_y, (T, B), 0, n_questions)
    ys = jax.nn.one_hot(q_ids, n_questions, dtype=jnp.float32)     # one-hot like DKT
    truths = jax.random.bernoulli(k_t, 0.5, (T, B)).astype(jnp.float32)

    preds, losses, hiddens = rnn_layer_sequence_forward(memory0, xs, ys, truths, params)
    jax.block_until_ready((preds, losses, hiddens))

    # --- pure-JAX reference: the PyTorch module applied step by step, with the
    #     DKT recurrence memory_{t+1} = hidden_t --------------------------------
    def ref_step(mem, x, y, tr):
        h = jnp.tanh(mem @ raw["wm"] + raw["bm"] + x @ raw["wx"] + raw["bx"])
        p = jnp.sum(jax.nn.sigmoid(h @ raw["wy"] + raw["by"]) * y, axis=1)
        l = -(tr * jnp.maximum(jnp.log(p), -100.0)
              + (1.0 - tr) * jnp.maximum(jnp.log(1.0 - p), -100.0))
        return h, p, l

    mem = memory0
    p_list, l_list, h_list = [], [], []
    for t in range(T):
        h_t, p_t, l_t = ref_step(mem, xs[t], ys[t], truths[t])
        p_list.append(p_t); l_list.append(l_t); h_list.append(h_t)
        mem = h_t
    p_ref = jnp.stack(p_list); l_ref = jnp.stack(l_list); h_ref = jnp.stack(h_list)

    assert preds.shape == (T, B) and losses.shape == (T, B)
    assert hiddens.shape == (T, B, n_hidden)
    assert jnp.allclose(preds, p_ref, atol=1e-4)
    assert jnp.allclose(losses, l_ref, atol=1e-4)
    assert jnp.allclose(hiddens, h_ref, atol=1e-4)

    # Single-step wrapper parity with the original module signature.
    pred1, loss1, hidden1 = rnn_layer_forward(memory0, xs[0], ys[0], truths[0], params)
    jax.block_until_ready((pred1, loss1, hidden1))
    assert jnp.allclose(pred1, p_ref[0], atol=1e-4)
    assert jnp.allclose(loss1, l_ref[0], atol=1e-4)
    assert jnp.allclose(hidden1, h_ref[0], atol=1e-4)

    print("KERNEL_OK")
</pallas_src>

<mosaic_0001>
module attributes {stable_mosaic.version = 11 : i64} {
  func.func @_rnn_chunk_kernel(%arg0: i32, %arg1: i32, %arg2: memref<16x32xf32, #tpu.memory_space<vmem>>, %arg3: memref<8x16x16xf32, #tpu.memory_space<vmem>>, %arg4: memref<8x16x24xf32, #tpu.memory_space<vmem>>, %arg5: memref<8x16x1xf32, #tpu.memory_space<vmem>>, %arg6: memref<32x32xf32, #tpu.memory_space<vmem>>, %arg7: memref<16x32xf32, #tpu.memory_space<vmem>>, %arg8: memref<1x32xf32, #tpu.memory_space<vmem>>, %arg9: memref<32x24xf32, #tpu.memory_space<vmem>>, %arg10: memref<1x24xf32, #tpu.memory_space<vmem>>, %arg11: memref<8x16xf32, #tpu.memory_space<vmem>>, %arg12: memref<8x16xf32, #tpu.memory_space<vmem>>, %arg13: memref<8x16x32xf32, #tpu.memory_space<vmem>>, %arg14: memref<16x32xf32, #tpu.memory_space<vmem>>) attributes {dimension_semantics = [#tpu.dimension_semantics<parallel>, #tpu.dimension_semantics<arbitrary>], iteration_bounds = array<i64: 1, 3>, scalar_prefetch = 0 : i64, scratch_operands = 1 : i64, tpu.core_type = #tpu.core_type<tc>, window_params = [{transform_indices = @transform_0, window_bounds = array<i64: 16, 32>}, {transform_indices = @transform_1, window_bounds = array<i64: 8, 16, 16>}, {transform_indices = @transform_2, window_bounds = array<i64: 8, 16, 24>}, {transform_indices = @transform_3, window_bounds = array<i64: 8, 16, 1>}, {pipeline_mode = #tpu.pipeline_mode<synchronous>, transform_indices = @transform_4, window_bounds = array<i64: 32, 32>}, {pipeline_mode = #tpu.pipeline_mode<synchronous>, transform_indices = @transform_5, window_bounds = array<i64: 16, 32>}, {pipeline_mode = #tpu.pipeline_mode<synchronous>, transform_indices = @transform_6, window_bounds = array<i64: 1, 32>}, {pipeline_mode = #tpu.pipeline_mode<synchronous>, transform_indices = @transform_7, window_bounds = array<i64: 32, 24>}, {pipeline_mode = #tpu.pipeline_mode<synchronous>, transform_indices = @transform_8, window_bounds = array<i64: 1, 24>}, {transform_indices = @transform_9, window_bounds = array<i64: 8, 16>}, {transform_indices = @transform_10, window_bounds = array<i64: 8, 16>}, {transform_indices = @transform_11, window_bounds = array<i64: 8, 16, 32>}]} {
    %c0_i32 = arith.constant 0 : i32
    %0 = arith.cmpi eq, %arg1, %c0_i32 : i32
    %1 = arith.extui %0 : i1 to i32
    %c0_i32_0 = arith.constant 0 : i32
    %2 = arith.cmpi ne, %1, %c0_i32_0 : i32
    scf.if %2 {
      %c0_234 = arith.constant 0 : index
      %c0_235 = arith.constant 0 : index
      %476 = vector.load %arg2[%c0_234, %c0_235] : memref<16x32xf32, #tpu.memory_space<vmem>>, vector<16x32xf32>
      %c0_236 = arith.constant 0 : index
      %c0_237 = arith.constant 0 : index
      %477 = vector.load %arg14[%c0_236, %c0_237] : memref<16x32xf32, #tpu.memory_space<vmem>>, vector<16x32xf32>
      tpu.vector_store %arg14[%c0_236, %c0_237], %476 {strides = array<i32>} : memref<16x32xf32, #tpu.memory_space<vmem>>, vector<16x32xf32>,
    } else {
    }
    %3 = tpu.iota {dimensions = array<i32: 1>} : vector<16x8xi32>
    %c0 = arith.constant 0 : index
    %c0_1 = arith.constant 0 : index
    %4 = vector.load %arg14[%c0, %c0_1] : memref<16x32xf32, #tpu.memory_space<vmem>>, vector<16x32xf32>
    %cst = arith.constant 0.000000e+00 : f32
    %5 = vector.broadcast %cst : f32 to vector<16x8xf32>
    %cst_2 = arith.constant 0.000000e+00 : f32
    %6 = vector.broadcast %cst_2 : f32 to vector<16x8xf32>
    %c0_i32_3 = arith.constant 0 : i32
    %7 = arith.index_cast %c0_i32_3 : i32 to index
    %c0_4 = arith.constant 0 : index
    %c0_5 = arith.constant 0 : index
    %8 = vector.load %arg3[%7, %c0_4, %c0_5] : memref<8x16x16xf32, #tpu.memory_space<vmem>>, vector<1x16x16xf32>
    %9 = vector.shape_cast %8 : vector<1x16x16xf32> to vector<16x16xf32>
    %10 = arith.index_cast %c0_i32_3 : i32 to index
    %c0_6 = arith.constant 0 : index
    %c0_7 = arith.constant 0 : index
    %11 = vector.load %arg4[%10, %c0_6, %c0_7] : memref<8x16x24xf32, #tpu.memory_space<vmem>>, vector<1x16x24xf32>
    %12 = vector.shape_cast %11 : vector<1x16x24xf32> to vector<16x24xf32>
    %13 = arith.index_cast %c0_i32_3 : i32 to index
    %c0_8 = arith.constant 0 : index
    %c0_9 = arith.constant 0 : index
    %14 = vector.load %arg5[%13, %c0_8, %c0_9] : memref<8x16x1xf32, #tpu.memory_space<vmem>>, vector<1x16x1xf32>
    %15 = vector.shape_cast %14 : vector<1x16x1xf32> to vector<16x1xf32>
    %c0_10 = arith.constant 0 : index
    %c0_11 = arith.constant 0 : index
    %16 = vector.load %arg6[%c0_10, %c0_11] : memref<32x32xf32, #tpu.memory_space<vmem>>, vector<32x32xf32>
    %cst_12 = arith.constant dense<0.000000e+00> : vector<16x32xf32>
    %17 = tpu.matmul %4, %16, %cst_12 {dimension_numbers = #tpu.dot_dimension_numbers<[1], [0], [0], [1], [0, 0, 1, 1], [], []>} : vector<16x32xf32>, vector<32x32xf32>, vector<16x32xf32> -> vector<16x32xf32>
    %c0_13 = arith.constant 0 : index
    %c0_14 = arith.constant 0 : index
    %18 = vector.load %arg7[%c0_13, %c0_14] : memref<16x32xf32, #tpu.memory_space<vmem>>, vector<16x32xf32>
    %cst_15 = arith.constant dense<0.000000e+00> : vector<16x32xf32>
    %19 = tpu.matmul %9, %18, %cst_15 {dimension_numbers = #tpu.dot_dimension_numbers<[1], [0], [0], [1], [0, 0, 1, 1], [], []>} : vector<16x16xf32>, vector<16x32xf32>, vector<16x32xf32> -> vector<16x32xf32>
    %20 = arith.addf %17, %19 : vector<16x32xf32>
    %c0_16 = arith.constant 0 : index
    %c0_17 = arith.constant 0 : index
    %21 = vector.load %arg8[%c0_16, %c0_17] : memref<1x32xf32, #tpu.memory_space<vmem>>, vector<1x32xf32>
    %22 = vector.broadcast %21 : vector<1x32xf32> to vector<16x32xf32>
    %23 = arith.addf %20, %22 : vector<16x32xf32>
    %24 = math.tanh %23 : vector<16x32xf32>
    %25 = arith.index_cast %c0_i32_3 : i32 to index
    %c0_18 = arith.constant 0 : index
    %c0_19 = arith.constant 0 : index
    %26 = vector.load %arg13[%25, %c0_18, %c0_19] : memref<8x16x32xf32, #tpu.memory_space<vmem>>, vector<1x16x32xf32>
    %27 = vector.shape_cast %26 : vector<1x16x32xf32> to vector<16x32xf32>
    %28 = vector.shape_cast %24 : vector<16x32xf32> to vector<1x16x32xf32>
    tpu.vector_store %arg13[%25, %c0_18, %c0_19], %28 {strides = array<i32>} : memref<8x16x32xf32, #tpu.memory_space<vmem>>, vector<1x16x32xf32>,
    %c0_20 = arith.constant 0 : index
    %c0_21 = arith.constant 0 : index
    %29 = vector.load %arg9[%c0_20, %c0_21] : memref<32x24xf32, #tpu.memory_space<vmem>>, vector<32x24xf32>
    %cst_22 = arith.constant dense<0.000000e+00> : vector<16x24xf32>
    %30 = tpu.matmul %24, %29, %cst_22 {dimension_numbers = #tpu.dot_dimension_numbers<[1], [0], [0], [1], [0, 0, 1, 1], [], []>} : vector<16x32xf32>, vector<32x24xf32>, vector<16x24xf32> -> vector<16x24xf32>
    %c0_23 = arith.constant 0 : index
    %c0_24 = arith.constant 0 : index
    %31 = vector.load %arg10[%c0_23, %c0_24] : memref<1x24xf32, #tpu.memory_space<vmem>>, vector<1x24xf32>
    %32 = vector.broadcast %31 : vector<1x24xf32> to vector<16x24xf32>
    %33 = arith.addf %30, %32 : vector<16x24xf32>
    %34 = arith.negf %33 : vector<16x24xf32>
    %35 = math.exp %34 : vector<16x24xf32>
    %cst_25 = arith.constant 1.000000e+00 : f32
    %36 = vector.broadcast %cst_25 : f32 to vector<16x24xf32>
    %37 = arith.addf %36, %35 : vector<16x24xf32>
    %38 = arith.divf %36, %37 : vector<16x24xf32>
    %39 = arith.mulf %38, %12 : vector<16x24xf32>
    %cst_26 = arith.constant dense<0.000000e+00> : vector<16xf32>
    %40 = vector.multi_reduction <add>, %39, %cst_26 [1] : vector<16x24xf32> to vector<16xf32>
    %41 = vector.shape_cast %40 : vector<16xf32> to vector<16x1xf32>
    %42 = math.log %41 : vector<16x1xf32>
    %cst_27 = arith.constant -1.000000e+02 : f32
    %43 = vector.broadcast %cst_27 : f32 to vector<16x1xf32>
    %44 = arith.maximumf %42, %43 : vector<16x1xf32>
    %cst_28 = arith.constant 1.000000e+00 : f32
    %45 = vector.broadcast %cst_28 : f32 to vector<16x1xf32>
    %46 = arith.subf %45, %41 : vector<16x1xf32>
    %47 = math.log %46 : vector<16x1xf32>
    %cst_29 = arith.constant -1.000000e+02 : f32
    %48 = vector.broadcast %cst_29 : f32 to vector<16x1xf32>
    %49 = arith.maximumf %47, %48 : vector<16x1xf32>
    %50 = arith.mulf %15, %44 : vector<16x1xf32>
    %cst_30 = arith.constant 1.000000e+00 : f32
    %51 = vector.broadcast %cst_30 : f32 to vector<16x1xf32>
    %52 = arith.subf %51, %15 : vector<16x1xf32>
    %53 = arith.mulf %52, %49 : vector<16x1xf32>
    %54 = arith.addf %50, %53 : vector<16x1xf32>
    %cst_31 = arith.constant 0.000000e+00 : f32
    %55 = vector.broadcast %cst_31 : f32 to vector<16x1xf32>
    %56 = arith.subf %55, %54 : vector<16x1xf32>
    %57 = vector.broadcast %c0_i32_3 : i32 to vector<16x8xi32>
    %58 = arith.cmpi eq, %3, %57 : vector<16x8xi32>
    %59 = vector.shape_cast %41 : vector<16x1xf32> to vector<16x1xf32>
    %60 = vector.broadcast %59 : vector<16x1xf32> to vector<16x8xf32>
    %61 = arith.select %58, %60, %5 : vector<16x8xi1>, vector<16x8xf32>
    %62 = vector.shape_cast %56 : vector<16x1xf32> to vector<16x1xf32>
    %63 = vector.broadcast %62 : vector<16x1xf32> to vector<16x8xf32>
    %64 = arith.select %58, %63, %6 : vector<16x8xi1>, vector<16x8xf32>
    %c1_i32 = arith.constant 1 : i32
    %65 = arith.index_cast %c1_i32 : i32 to index
    %c0_32 = arith.constant 0 : index
    %c0_33 = arith.constant 0 : index
    %66 = vector.load %arg3[%65, %c0_32, %c0_33] : memref<8x16x16xf32, #tpu.memory_space<vmem>>, vector<1x16x16xf32>
    %67 = vector.shape_cast %66 : vector<1x16x16xf32> to vector<16x16xf32>
    %68 = arith.index_cast %c1_i32 : i32 to index
    %c0_34 = arith.constant 0 : index
    %c0_35 = arith.constant 0 : index
    %69 = vector.load %arg4[%68, %c0_34, %c0_35] : memref<8x16x24xf32, #tpu.memory_space<vmem>>, vector<1x16x24xf32>
    %70 = vector.shape_cast %69 : vector<1x16x24xf32> to vector<16x24xf32>
    %71 = arith.index_cast %c1_i32 : i32 to index
    %c0_36 = arith.constant 0 : index
    %c0_37 = arith.constant 0 : index
    %72 = vector.load %arg5[%71, %c0_36, %c0_37] : memref<8x16x1xf32, #tpu.memory_space<vmem>>, vector<1x16x1xf32>
    %73 = vector.shape_cast %72 : vector<1x16x1xf32> to vector<16x1xf32>
    %c0_38 = arith.constant 0 : index
    %c0_39 = arith.constant 0 : index
    %74 = vector.load %arg6[%c0_38, %c0_39] : memref<32x32xf32, #tpu.memory_space<vmem>>, vector<32x32xf32>
    %cst_40 = arith.constant dense<0.000000e+00> : vector<16x32xf32>
    %75 = tpu.matmul %24, %74, %cst_40 {dimension_numbers = #tpu.dot_dimension_numbers<[1], [0], [0], [1], [0, 0, 1, 1], [], []>} : vector<16x32xf32>, vector<32x32xf32>, vector<16x32xf32> -> vector<16x32xf32>
    %c0_41 = arith.constant 0 : index
    %c0_42 = arith.constant 0 : index
    %76 = vector.load %arg7[%c0_41, %c0_42] : memref<16x32xf32, #tpu.memory_space<vmem>>, vector<16x32xf32>
    %cst_43 = arith.constant dense<0.000000e+00> : vector<16x32xf32>
    %77 = tpu.matmul %67, %76, %cst_43 {dimension_numbers = #tpu.dot_dimension_numbers<[1], [0], [0], [1], [0, 0, 1, 1], [], []>} : vector<16x16xf32>, vector<16x32xf32>, vector<16x32xf32> -> vector<16x32xf32>
    %78 = arith.addf %75, %77 : vector<16x32xf32>
    %c0_44 = arith.constant 0 : index
    %c0_45 = arith.constant 0 : index
    %79 = vector.load %arg8[%c0_44, %c0_45] : memref<1x32xf32, #tpu.memory_space<vmem>>, vector<1x32xf32>
    %80 = vector.broadcast %79 : vector<1x32xf32> to vector<16x32xf32>
    %81 = arith.addf %78, %80 : vector<16x32xf32>
    %82 = math.tanh %81 : vector<16x32xf32>
    %83 = arith.index_cast %c1_i32 : i32 to index
    %c0_46 = arith.constant 0 : index
    %c0_47 = arith.constant 0 : index
    %84 = vector.load %arg13[%83, %c0_46, %c0_47] : memref<8x16x32xf32, #tpu.memory_space<vmem>>, vector<1x16x32xf32>
    %85 = vector.shape_cast %84 : vector<1x16x32xf32> to vector<16x32xf32>
    %86 = vector.shape_cast %82 : vector<16x32xf32> to vector<1x16x32xf32>
    tpu.vector_store %arg13[%83, %c0_46, %c0_47], %86 {strides = array<i32>} : memref<8x16x32xf32, #tpu.memory_space<vmem>>, vector<1x16x32xf32>,
    %c0_48 = arith.constant 0 : index
    %c0_49 = arith.constant 0 : index
    %87 = vector.load %arg9[%c0_48, %c0_49] : memref<32x24xf32, #tpu.memory_space<vmem>>, vector<32x24xf32>
    %cst_50 = arith.constant dense<0.000000e+00> : vector<16x24xf32>
    %88 = tpu.matmul %82, %87, %cst_50 {dimension_numbers = #tpu.dot_dimension_numbers<[1], [0], [0], [1], [0, 0, 1, 1], [], []>} : vector<16x32xf32>, vector<32x24xf32>, vector<16x24xf32> -> vector<16x24xf32>
    %c0_51 = arith.constant 0 : index
    %c0_52 = arith.constant 0 : index
    %89 = vector.load %arg10[%c0_51, %c0_52] : memref<1x24xf32, #tpu.memory_space<vmem>>, vector<1x24xf32>
    %90 = vector.broadcast %89 : vector<1x24xf32> to vector<16x24xf32>
    %91 = arith.addf %88, %90 : vector<16x24xf32>
    %92 = arith.negf %91 : vector<16x24xf32>
    %93 = math.exp %92 : vector<16x24xf32>
    %cst_53 = arith.constant 1.000000e+00 : f32
    %94 = vector.broadcast %cst_53 : f32 to vector<16x24xf32>
    %95 = arith.addf %94, %93 : vector<16x24xf32>
    %96 = arith.divf %94, %95 : vector<16x24xf32>
    %97 = arith.mulf %96, %70 : vector<16x24xf32>
    %cst_54 = arith.constant dense<0.000000e+00> : vector<16xf32>
    %98 = vector.multi_reduction <add>, %97, %cst_54 [1] : vector<16x24xf32> to vector<16xf32>
    %99 = vector.shape_cast %98 : vector<16xf32> to vector<16x1xf32>
    %100 = math.log %99 : vector<16x1xf32>
    %cst_55 = arith.constant -1.000000e+02 : f32
    %101 = vector.broadcast %cst_55 : f32 to vector<16x1xf32>
    %102 = arith.maximumf %100, %101 : vector<16x1xf32>
    %cst_56 = arith.constant 1.000000e+00 : f32
    %103 = vector.broadcast %cst_56 : f32 to vector<16x1xf32>
    %104 = arith.subf %103, %99 : vector<16x1xf32>
    %105 = math.log %104 : vector<16x1xf32>
    %cst_57 = arith.constant -1.000000e+02 : f32
    %106 = vector.broadcast %cst_57 : f32 to vector<16x1xf32>
    %107 = arith.maximumf %105, %106 : vector<16x1xf32>
    %108 = arith.mulf %73, %102 : vector<16x1xf32>
    %cst_58 = arith.constant 1.000000e+00 : f32
    %109 = vector.broadcast %cst_58 : f32 to vector<16x1xf32>
    %110 = arith.subf %109, %73 : vector<16x1xf32>
    %111 = arith.mulf %110, %107 : vector<16x1xf32>
    %112 = arith.addf %108, %111 : vector<16x1xf32>
    %cst_59 = arith.constant 0.000000e+00 : f32
    %113 = vector.broadcast %cst_59 : f32 to vector<16x1xf32>
    %114 = arith.subf %113, %112 : vector<16x1xf32>
    %115 = vector.broadcast %c1_i32 : i32 to vector<16x8xi32>
    %116 = arith.cmpi eq, %3, %115 : vector<16x8xi32>
    %117 = vector.shape_cast %99 : vector<16x1xf32> to vector<16x1xf32>
    %118 = vector.broadcast %117 : vector<16x1xf32> to vector<16x8xf32>
    %119 = arith.select %116, %118, %61 : vector<16x8xi1>, vector<16x8xf32>
    %120 = vector.shape_cast %114 : vector<16x1xf32> to vector<16x1xf32>
    %121 = vector.broadcast %120 : vector<16x1xf32> to vector<16x8xf32>
    %122 = arith.select %116, %121, %64 : vector<16x8xi1>, vector<16x8xf32>
    %c2_i32 = arith.constant 2 : i32
    %123 = arith.index_cast %c2_i32 : i32 to index
    %c0_60 = arith.constant 0 : index
    %c0_61 = arith.constant 0 : index
    %124 = vector.load %arg3[%123, %c0_60, %c0_61] : memref<8x16x16xf32, #tpu.memory_space<vmem>>, vector<1x16x16xf32>
    %125 = vector.shape_cast %124 : vector<1x16x16xf32> to vector<16x16xf32>
    %126 = arith.index_cast %c2_i32 : i32 to index
    %c0_62 = arith.constant 0 : index
    %c0_63 = arith.constant 0 : index
    %127 = vector.load %arg4[%126, %c0_62, %c0_63] : memref<8x16x24xf32, #tpu.memory_space<vmem>>, vector<1x16x24xf32>
    %128 = vector.shape_cast %127 : vector<1x16x24xf32> to vector<16x24xf32>
    %129 = arith.index_cast %c2_i32 : i32 to index
    %c0_64 = arith.constant 0 : index
    %c0_65 = arith.constant 0 : index
    %130 = vector.load %arg5[%129, %c0_64, %c0_65] : memref<8x16x1xf32, #tpu.memory_space<vmem>>, vector<1x16x1xf32>
    %131 = vector.shape_cast %130 : vector<1x16x1xf32> to vector<16x1xf32>
    %c0_66 = arith.constant 0 : index
    %c0_67 = arith.constant 0 : index
    %132 = vector.load %arg6[%c0_66, %c0_67] : memref<32x32xf32, #tpu.memory_space<vmem>>, vector<32x32xf32>
    %cst_68 = arith.constant dense<0.000000e+00> : vector<16x32xf32>
    %133 = tpu.matmul %82, %132, %cst_68 {dimension_numbers = #tpu.dot_dimension_numbers<[1], [0], [0], [1], [0, 0, 1, 1], [], []>} : vector<16x32xf32>, vector<32x32xf32>, vector<16x32xf32> -> vector<16x32xf32>
    %c0_69 = arith.constant 0 : index
    %c0_70 = arith.constant 0 : index
    %134 = vector.load %arg7[%c0_69, %c0_70] : memref<16x32xf32, #tpu.memory_space<vmem>>, vector<16x32xf32>
    %cst_71 = arith.constant dense<0.000000e+00> : vector<16x32xf32>
    %135 = tpu.matmul %125, %134, %cst_71 {dimension_numbers = #tpu.dot_dimension_numbers<[1], [0], [0], [1], [0, 0, 1, 1], [], []>} : vector<16x16xf32>, vector<16x32xf32>, vector<16x32xf32> -> vector<16x32xf32>
    %136 = arith.addf %133, %135 : vector<16x32xf32>
    %c0_72 = arith.constant 0 : index
    %c0_73 = arith.constant 0 : index
    %137 = vector.load %arg8[%c0_72, %c0_73] : memref<1x32xf32, #tpu.memory_space<vmem>>, vector<1x32xf32>
    %138 = vector.broadcast %137 : vector<1x32xf32> to vector<16x32xf32>
    %139 = arith.addf %136, %138 : vector<16x32xf32>
    %140 = math.tanh %139 : vector<16x32xf32>
    %141 = arith.index_cast %c2_i32 : i32 to index
    %c0_74 = arith.constant 0 : index
    %c0_75 = arith.constant 0 : index
    %142 = vector.load %arg13[%141, %c0_74, %c0_75] : memref<8x16x32xf32, #tpu.memory_space<vmem>>, vector<1x16x32xf32>
    %143 = vector.shape_cast %142 : vector<1x16x32xf32> to vector<16x32xf32>
    %144 = vector.shape_cast %140 : vector<16x32xf32> to vector<1x16x32xf32>
    tpu.vector_store %arg13[%141, %c0_74, %c0_75], %144 {strides = array<i32>} : memref<8x16x32xf32, #tpu.memory_space<vmem>>, vector<1x16x32xf32>,
    %c0_76 = arith.constant 0 : index
    %c0_77 = arith.constant 0 : index
    %145 = vector.load %arg9[%c0_76, %c0_77] : memref<32x24xf32, #tpu.memory_space<vmem>>, vector<32x24xf32>
    %cst_78 = arith.constant dense<0.000000e+00> : vector<16x24xf32>
    %146 = tpu.matmul %140, %145, %cst_78 {dimension_numbers = #tpu.dot_dimension_numbers<[1], [0], [0], [1], [0, 0, 1, 1], [], []>} : vector<16x32xf32>, vector<32x24xf32>, vector<16x24xf32> -> vector<16x24xf32>
    %c0_79 = arith.constant 0 : index
    %c0_80 = arith.constant 0 : index
    %147 = vector.load %arg10[%c0_79, %c0_80] : memref<1x24xf32, #tpu.memory_space<vmem>>, vector<1x24xf32>
    %148 = vector.broadcast %147 : vector<1x24xf32> to vector<16x24xf32>
    %149 = arith.addf %146, %148 : vector<16x24xf32>
    %150 = arith.negf %149 : vector<16x24xf32>
    %151 = math.exp %150 : vector<16x24xf32>
    %cst_81 = arith.constant 1.000000e+00 : f32
    %152 = vector.broadcast %cst_81 : f32 to vector<16x24xf32>
    %153 = arith.addf %152, %151 : vector<16x24xf32>
    %154 = arith.divf %152, %153 : vector<16x24xf32>
    %155 = arith.mulf %154, %128 : vector<16x24xf32>
    %cst_82 = arith.constant dense<0.000000e+00> : vector<16xf32>
    %156 = vector.multi_reduction <add>, %155, %cst_82 [1] : vector<16x24xf32> to vector<16xf32>
    %157 = vector.shape_cast %156 : vector<16xf32> to vector<16x1xf32>
    %158 = math.log %157 : vector<16x1xf32>
    %cst_83 = arith.constant -1.000000e+02 : f32
    %159 = vector.broadcast %cst_83 : f32 to vector<16x1xf32>
    %160 = arith.maximumf %158, %159 : vector<16x1xf32>
    %cst_84 = arith.constant 1.000000e+00 : f32
    %161 = vector.broadcast %cst_84 : f32 to vector<16x1xf32>
    %162 = arith.subf %161, %157 : vector<16x1xf32>
    %163 = math.log %162 : vector<16x1xf32>
    %cst_85 = arith.constant -1.000000e+02 : f32
    %164 = vector.broadcast %cst_85 : f32 to vector<16x1xf32>
    %165 = arith.maximumf %163, %164 : vector<16x1xf32>
    %166 = arith.mulf %131, %160 : vector<16x1xf32>
    %cst_86 = arith.constant 1.000000e+00 : f32
    %167 = vector.broadcast %cst_86 : f32 to vector<16x1xf32>
    %168 = arith.subf %167, %131 : vector<16x1xf32>
    %169 = arith.mulf %168, %165 : vector<16x1xf32>
    %170 = arith.addf %166, %169 : vector<16x1xf32>
    %cst_87 = arith.constant 0.000000e+00 : f32
    %171 = vector.broadcast %cst_87 : f32 to vector<16x1xf32>
    %172 = arith.subf %171, %170 : vector<16x1xf32>
    %173 = vector.broadcast %c2_i32 : i32 to vector<16x8xi32>
    %174 = arith.cmpi eq, %3, %173 : vector<16x8xi32>
    %175 = vector.shape_cast %157 : vector<16x1xf32> to vector<16x1xf32>
    %176 = vector.broadcast %175 : vector<16x1xf32> to vector<16x8xf32>
    %177 = arith.select %174, %176, %119 : vector<16x8xi1>, vector<16x8xf32>
    %178 = vector.shape_cast %172 : vector<16x1xf32> to vector<16x1xf32>
    %179 = vector.broadcast %178 : vector<16x1xf32> to vector<16x8xf32>
    %180 = arith.select %174, %179, %122 : vector<16x8xi1>, vector<16x8xf32>
    %c3_i32 = arith.constant 3 : i32
    %181 = arith.index_cast %c3_i32 : i32 to index
    %c0_88 = arith.constant 0 : index
    %c0_89 = arith.constant 0 : index
    %182 = vector.load %arg3[%181, %c0_88, %c0_89] : memref<8x16x16xf32, #tpu.memory_space<vmem>>, vector<1x16x16xf32>
    %183 = vector.shape_cast %182 : vector<1x16x16xf32> to vector<16x16xf32>
    %184 = arith.index_cast %c3_i32 : i32 to index
    %c0_90 = arith.constant 0 : index
    %c0_91 = arith.constant 0 : index
    %185 = vector.load %arg4[%184, %c0_90, %c0_91] : memref<8x16x24xf32, #tpu.memory_space<vmem>>, vector<1x16x24xf32>
    %186 = vector.shape_cast %185 : vector<1x16x24xf32> to vector<16x24xf32>
    %187 = arith.index_cast %c3_i32 : i32 to index
    %c0_92 = arith.constant 0 : index
    %c0_93 = arith.constant 0 : index
    %188 = vector.load %arg5[%187, %c0_92, %c0_93] : memref<8x16x1xf32, #tpu.memory_space<vmem>>, vector<1x16x1xf32>
    %189 = vector.shape_cast %188 : vector<1x16x1xf32> to vector<16x1xf32>
    %c0_94 = arith.constant 0 : index
    %c0_95 = arith.constant 0 : index
    %190 = vector.load %arg6[%c0_94, %c0_95] : memref<32x32xf32, #tpu.memory_space<vmem>>, vector<32x32xf32>
    %cst_96 = arith.constant dense<0.000000e+00> : vector<16x32xf32>
    %191 = tpu.matmul %140, %190, %cst_96 {dimension_numbers = #tpu.dot_dimension_numbers<[1], [0], [0], [1], [0, 0, 1, 1], [], []>} : vector<16x32xf32>, vector<32x32xf32>, vector<16x32xf32> -> vector<16x32xf32>
    %c0_97 = arith.constant 0 : index
    %c0_98 = arith.constant 0 : index
    %192 = vector.load %arg7[%c0_97, %c0_98] : memref<16x32xf32, #tpu.memory_space<vmem>>, vector<16x32xf32>
    %cst_99 = arith.constant dense<0.000000e+00> : vector<16x32xf32>
    %193 = tpu.matmul %183, %192, %cst_99 {dimension_numbers = #tpu.dot_dimension_numbers<[1], [0], [0], [1], [0, 0, 1, 1], [], []>} : vector<16x16xf32>, vector<16x32xf32>, vector<16x32xf32> -> vector<16x32xf32>
    %194 = arith.addf %191, %193 : vector<16x32xf32>
    %c0_100 = arith.constant 0 : index
    %c0_101 = arith.constant 0 : index
    %195 = vector.load %arg8[%c0_100, %c0_101] : memref<1x32xf32, #tpu.memory_space<vmem>>, vector<1x32xf32>
    %196 = vector.broadcast %195 : vector<1x32xf32> to vector<16x32xf32>
    %197 = arith.addf %194, %196 : vector<16x32xf32>
    %198 = math.tanh %197 : vector<16x32xf32>
    %199 = arith.index_cast %c3_i32 : i32 to index
    %c0_102 = arith.constant 0 : index
    %c0_103 = arith.constant 0 : index
    %200 = vector.load %arg13[%199, %c0_102, %c0_103] : memref<8x16x32xf32, #tpu.memory_space<vmem>>, vector<1x16x32xf32>
    %201 = vector.shape_cast %200 : vector<1x16x32xf32> to vector<16x32xf32>
    %202 = vector.shape_cast %198 : vector<16x32xf32> to vector<1x16x32xf32>
    tpu.vector_store %arg13[%199, %c0_102, %c0_103], %202 {strides = array<i32>} : memref<8x16x32xf32, #tpu.memory_space<vmem>>, vector<1x16x32xf32>,
    %c0_104 = arith.constant 0 : index
    %c0_105 = arith.constant 0 : index
    %203 = vector.load %arg9[%c0_104, %c0_105] : memref<32x24xf32, #tpu.memory_space<vmem>>, vector<32x24xf32>
    %cst_106 = arith.constant dense<0.000000e+00> : vector<16x24xf32>
    %204 = tpu.matmul %198, %203, %cst_106 {dimension_numbers = #tpu.dot_dimension_numbers<[1], [0], [0], [1], [0, 0, 1, 1], [], []>} : vector<16x32xf32>, vector<32x24xf32>, vector<16x24xf32> -> vector<16x24xf32>
    %c0_107 = arith.constant 0 : index
    %c0_108 = arith.constant 0 : index
    %205 = vector.load %arg10[%c0_107, %c0_108] : memref<1x24xf32, #tpu.memory_space<vmem>>, vector<1x24xf32>
    %206 = vector.broadcast %205 : vector<1x24xf32> to vector<16x24xf32>
    %207 = arith.addf %204, %206 : vector<16x24xf32>
    %208 = arith.negf %207 : vector<16x24xf32>
    %209 = math.exp %208 : vector<16x24xf32>
    %cst_109 = arith.constant 1.000000e+00 : f32
    %210 = vector.broadcast %cst_109 : f32 to vector<16x24xf32>
    %211 = arith.addf %210, %209 : vector<16x24xf32>
    %212 = arith.divf %210, %211 : vector<16x24xf32>
    %213 = arith.mulf %212, %186 : vector<16x24xf32>
    %cst_110 = arith.constant dense<0.000000e+00> : vector<16xf32>
    %214 = vector.multi_reduction <add>, %213, %cst_110 [1] : vector<16x24xf32> to vector<16xf32>
    %215 = vector.shape_cast %214 : vector<16xf32> to vector<16x1xf32>
    %216 = math.log %215 : vector<16x1xf32>
    %cst_111 = arith.constant -1.000000e+02 : f32
    %217 = vector.broadcast %cst_111 : f32 to vector<16x1xf32>
    %218 = arith.maximumf %216, %217 : vector<16x1xf32>
    %cst_112 = arith.constant 1.000000e+00 : f32
    %219 = vector.broadcast %cst_112 : f32 to vector<16x1xf32>
    %220 = arith.subf %219, %215 : vector<16x1xf32>
    %221 = math.log %220 : vector<16x1xf32>
    %cst_113 = arith.constant -1.000000e+02 : f32
    %222 = vector.broadcast %cst_113 : f32 to vector<16x1xf32>
    %223 = arith.maximumf %221, %222 : vector<16x1xf32>
    %224 = arith.mulf %189, %218 : vector<16x1xf32>
    %cst_114 = arith.constant 1.000000e+00 : f32
    %225 = vector.broadcast %cst_114 : f32 to vector<16x1xf32>
    %226 = arith.subf %225, %189 : vector<16x1xf32>
    %227 = arith.mulf %226, %223 : vector<16x1xf32>
    %228 = arith.addf %224, %227 : vector<16x1xf32>
    %cst_115 = arith.constant 0.000000e+00 : f32
    %229 = vector.broadcast %cst_115 : f32 to vector<16x1xf32>
    %230 = arith.subf %229, %228 : vector<16x1xf32>
    %231 = vector.broadcast %c3_i32 : i32 to vector<16x8xi32>
    %232 = arith.cmpi eq, %3, %231 : vector<16x8xi32>
    %233 = vector.shape_cast %215 : vector<16x1xf32> to vector<16x1xf32>
    %234 = vector.broadcast %233 : vector<16x1xf32> to vector<16x8xf32>
    %235 = arith.select %232, %234, %177 : vector<16x8xi1>, vector<16x8xf32>
    %236 = vector.shape_cast %230 : vector<16x1xf32> to vector<16x1xf32>
    %237 = vector.broadcast %236 : vector<16x1xf32> to vector<16x8xf32>
    %238 = arith.select %232, %237, %180 : vector<16x8xi1>, vector<16x8xf32>
    %c4_i32 = arith.constant 4 : i32
    %239 = arith.index_cast %c4_i32 : i32 to index
    %c0_116 = arith.constant 0 : index
    %c0_117 = arith.constant 0 : index
    %240 = vector.load %arg3[%239, %c0_116, %c0_117] : memref<8x16x16xf32, #tpu.memory_space<vmem>>, vector<1x16x16xf32>
    %241 = vector.shape_cast %240 : vector<1x16x16xf32> to vector<16x16xf32>
    %242 = arith.index_cast %c4_i32 : i32 to index
    %c0_118 = arith.constant 0 : index
    %c0_119 = arith.constant 0 : index
    %243 = vector.load %arg4[%242, %c0_118, %c0_119] : memref<8x16x24xf32, #tpu.memory_space<vmem>>, vector<1x16x24xf32>
    %244 = vector.shape_cast %243 : vector<1x16x24xf32> to vector<16x24xf32>
    %245 = arith.index_cast %c4_i32 : i32 to index
    %c0_120 = arith.constant 0 : index
    %c0_121 = arith.constant 0 : index
    %246 = vector.load %arg5[%245, %c0_120, %c0_121] : memref<8x16x1xf32, #tpu.memory_space<vmem>>, vector<1x16x1xf32>
    %247 = vector.shape_cast %246 : vector<1x16x1xf32> to vector<16x1xf32>
    %c0_122 = arith.constant 0 : index
    %c0_123 = arith.constant 0 : index
    %248 = vector.load %arg6[%c0_122, %c0_123] : memref<32x32xf32, #tpu.memory_space<vmem>>, vector<32x32xf32>
    %cst_124 = arith.constant dense<0.000000e+00> : vector<16x32xf32>
    %249 = tpu.matmul %198, %248, %cst_124 {dimension_numbers = #tpu.dot_dimension_numbers<[1], [0], [0], [1], [0, 0, 1, 1], [], []>} : vector<16x32xf32>, vector<32x32xf32>, vector<16x32xf32> -> vector<16x32xf32>
    %c0_125 = arith.constant 0 : index
    %c0_126 = arith.constant 0 : index
    %250 = vector.load %arg7[%c0_125, %c0_126] : memref<16x32xf32, #tpu.memory_space<vmem>>, vector<16x32xf32>
    %cst_127 = arith.constant dense<0.000000e+00> : vector<16x32xf32>
    %251 = tpu.matmul %241, %250, %cst_127 {dimension_numbers = #tpu.dot_dimension_numbers<[1], [0], [0], [1], [0, 0, 1, 1], [], []>} : vector<16x16xf32>, vector<16x32xf32>, vector<16x32xf32> -> vector<16x32xf32>
    %252 = arith.addf %249, %251 : vector<16x32xf32>
    %c0_128 = arith.constant 0 : index
    %c0_129 = arith.constant 0 : index
    %253 = vector.load %arg8[%c0_128, %c0_129] : memref<1x32xf32, #tpu.memory_space<vmem>>, vector<1x32xf32>
    %254 = vector.broadcast %253 : vector<1x32xf32> to vector<16x32xf32>
    %255 = arith.addf %252, %254 : vector<16x32xf32>
    %256 = math.tanh %255 : vector<16x32xf32>
    %257 = arith.index_cast %c4_i32 : i32 to index
    %c0_130 = arith.constant 0 : index
    %c0_131 = arith.constant 0 : index
    %258 = vector.load %arg13[%257, %c0_130, %c0_131] : memref<8x16x32xf32, #tpu.memory_space<vmem>>, vector<1x16x32xf32>
    %259 = vector.shape_cast %258 : vector<1x16x32xf32> to vector<16x32xf32>
    %260 = vector.shape_cast %256 : vector<16x32xf32> to vector<1x16x32xf32>
    tpu.vector_store %arg13[%257, %c0_130, %c0_131], %260 {strides = array<i32>} : memref<8x16x32xf32, #tpu.memory_space<vmem>>, vector<1x16x32xf32>,
    %c0_132 = arith.constant 0 : index
    %c0_133 = arith.constant 0 : index
    %261 = vector.load %arg9[%c0_132, %c0_133] : memref<32x24xf32, #tpu.memory_space<vmem>>, vector<32x24xf32>
    %cst_134 = arith.constant dense<0.000000e+00> : vector<16x24xf32>
    %262 = tpu.matmul %256, %261, %cst_134 {dimension_numbers = #tpu.dot_dimension_numbers<[1], [0], [0], [1], [0, 0, 1, 1], [], []>} : vector<16x32xf32>, vector<32x24xf32>, vector<16x24xf32> -> vector<16x24xf32>
    %c0_135 = arith.constant 0 : index
    %c0_136 = arith.constant 0 : index
    %263 = vector.load %arg10[%c0_135, %c0_136] : memref<1x24xf32, #tpu.memory_space<vmem>>, vector<1x24xf32>
    %264 = vector.broadcast %263 : vector<1x24xf32> to vector<16x24xf32>
    %265 = arith.addf %262, %264 : vector<16x24xf32>
    %266 = arith.negf %265 : vector<16x24xf32>
    %267 = math.exp %266 : vector<16x24xf32>
    %cst_137 = arith.constant 1.000000e+00 : f32
    %268 = vector.broadcast %cst_137 : f32 to vector<16x24xf32>
    %269 = arith.addf %268, %267 : vector<16x24xf32>
    %270 = arith.divf %268, %269 : vector<16x24xf32>
    %271 = arith.mulf %270, %244 : vector<16x24xf32>
    %cst_138 = arith.constant dense<0.000000e+00> : vector<16xf32>
    %272 = vector.multi_reduction <add>, %271, %cst_138 [1] : vector<16x24xf32> to vector<16xf32>
    %273 = vector.shape_cast %272 : vector<16xf32> to vector<16x1xf32>
    %274 = math.log %273 : vector<16x1xf32>
    %cst_139 = arith.constant -1.000000e+02 : f32
    %275 = vector.broadcast %cst_139 : f32 to vector<16x1xf32>
    %276 = arith.maximumf %274, %275 : vector<16x1xf32>
    %cst_140 = arith.constant 1.000000e+00 : f32
    %277 = vector.broadcast %cst_140 : f32 to vector<16x1xf32>
    %278 = arith.subf %277, %273 : vector<16x1xf32>
    %279 = math.log %278 : vector<16x1xf32>
    %cst_141 = arith.constant -1.000000e+02 : f32
    %280 = vector.broadcast %cst_141 : f32 to vector<16x1xf32>
    %281 = arith.maximumf %279, %280 : vector<16x1xf32>
    %282 = arith.mulf %247, %276 : vector<16x1xf32>
    %cst_142 = arith.constant 1.000000e+00 : f32
    %283 = vector.broadcast %cst_142 : f32 to vector<16x1xf32>
    %284 = arith.subf %283, %247 : vector<16x1xf32>
    %285 = arith.mulf %284, %281 : vector<16x1xf32>
    %286 = arith.addf %282, %285 : vector<16x1xf32>
    %cst_143 = arith.constant 0.000000e+00 : f32
    %287 = vector.broadcast %cst_143 : f32 to vector<16x1xf32>
    %288 = arith.subf %287, %286 : vector<16x1xf32>
    %289 = vector.broadcast %c4_i32 : i32 to vector<16x8xi32>
    %290 = arith.cmpi eq, %3, %289 : vector<16x8xi32>
    %291 = vector.shape_cast %273 : vector<16x1xf32> to vector<16x1xf32>
    %292 = vector.broadcast %291 : vector<16x1xf32> to vector<16x8xf32>
    %293 = arith.select %290, %292, %235 : vector<16x8xi1>, vector<16x8xf32>
    %294 = vector.shape_cast %288 : vector<16x1xf32> to vector<16x1xf32>
    %295 = vector.broadcast %294 : vector<16x1xf32> to vector<16x8xf32>
    %296 = arith.select %290, %295, %238 : vector<16x8xi1>, vector<16x8xf32>
    %c5_i32 = arith.constant 5 : i32
    %297 = arith.index_cast %c5_i32 : i32 to index
    %c0_144 = arith.constant 0 : index
    %c0_145 = arith.constant 0 : index
    %298 = vector.load %arg3[%297, %c0_144, %c0_145] : memref<8x16x16xf32, #tpu.memory_space<vmem>>, vector<1x16x16xf32>
    %299 = vector.shape_cast %298 : vector<1x16x16xf32> to vector<16x16xf32>
    %300 = arith.index_cast %c5_i32 : i32 to index
    %c0_146 = arith.constant 0 : index
    %c0_147 = arith.constant 0 : index
    %301 = vector.load %arg4[%300, %c0_146, %c0_147] : memref<8x16x24xf32, #tpu.memory_space<vmem>>, vector<1x16x24xf32>
    %302 = vector.shape_cast %301 : vector<1x16x24xf32> to vector<16x24xf32>
    %303 = arith.index_cast %c5_i32 : i32 to index
    %c0_148 = arith.constant 0 : index
    %c0_149 = arith.constant 0 : index
    %304 = vector.load %arg5[%303, %c0_148, %c0_149] : memref<8x16x1xf32, #tpu.memory_space<vmem>>, vector<1x16x1xf32>
    %305 = vector.shape_cast %304 : vector<1x16x1xf32> to vector<16x1xf32>
    %c0_150 = arith.constant 0 : index
    %c0_151 = arith.constant 0 : index
    %306 = vector.load %arg6[%c0_150, %c0_151] : memref<32x32xf32, #tpu.memory_space<vmem>>, vector<32x32xf32>
    %cst_152 = arith.constant dense<0.000000e+00> : vector<16x32xf32>
    %307 = tpu.matmul %256, %306, %cst_152 {dimension_numbers = #tpu.dot_dimension_numbers<[1], [0], [0], [1], [0, 0, 1, 1], [], []>} : vector<16x32xf32>, vector<32x32xf32>, vector<16x32xf32> -> vector<16x32xf32>
    %c0_153 = arith.constant 0 : index
    %c0_154 = arith.constant 0 : index
    %308 = vector.load %arg7[%c0_153, %c0_154] : memref<16x32xf32, #tpu.memory_space<vmem>>, vector<16x32xf32>
    %cst_155 = arith.constant dense<0.000000e+00> : vector<16x32xf32>
    %309 = tpu.matmul %299, %308, %cst_155 {dimension_numbers = #tpu.dot_dimension_numbers<[1], [0], [0], [1], [0, 0, 1, 1], [], []>} : vector<16x16xf32>, vector<16x32xf32>, vector<16x32xf32> -> vector<16x32xf32>
    %310 = arith.addf %307, %309 : vector<16x32xf32>
    %c0_156 = arith.constant 0 : index
    %c0_157 = arith.constant 0 : index
    %311 = vector.load %arg8[%c0_156, %c0_157] : memref<1x32xf32, #tpu.memory_space<vmem>>, vector<1x32xf32>
    %312 = vector.broadcast %311 : vector<1x32xf32> to vector<16x32xf32>
    %313 = arith.addf %310, %312 : vector<16x32xf32>
    %314 = math.tanh %313 : vector<16x32xf32>
    %315 = arith.index_cast %c5_i32 : i32 to index
    %c0_158 = arith.constant 0 : index
    %c0_159 = arith.constant 0 : index
    %316 = vector.load %arg13[%315, %c0_158, %c0_159] : memref<8x16x32xf32, #tpu.memory_space<vmem>>, vector<1x16x32xf32>
    %317 = vector.shape_cast %316 : vector<1x16x32xf32> to vector<16x32xf32>
    %318 = vector.shape_cast %314 : vector<16x32xf32> to vector<1x16x32xf32>
    tpu.vector_store %arg13[%315, %c0_158, %c0_159], %318 {strides = array<i32>} : memref<8x16x32xf32, #tpu.memory_space<vmem>>, vector<1x16x32xf32>,
    %c0_160 = arith.constant 0 : index
    %c0_161 = arith.constant 0 : index
    %319 = vector.load %arg9[%c0_160, %c0_161] : memref<32x24xf32, #tpu.memory_space<vmem>>, vector<32x24xf32>
    %cst_162 = arith.constant dense<0.000000e+00> : vector<16x24xf32>
    %320 = tpu.matmul %314, %319, %cst_162 {dimension_numbers = #tpu.dot_dimension_numbers<[1], [0], [0], [1], [0, 0, 1, 1], [], []>} : vector<16x32xf32>, vector<32x24xf32>, vector<16x24xf32> -> vector<16x24xf32>
    %c0_163 = arith.constant 0 : index
    %c0_164 = arith.constant 0 : index
    %321 = vector.load %arg10[%c0_163, %c0_164] : memref<1x24xf32, #tpu.memory_space<vmem>>, vector<1x24xf32>
    %322 = vector.broadcast %321 : vector<1x24xf32> to vector<16x24xf32>
    %323 = arith.addf %320, %322 : vector<16x24xf32>
    %324 = arith.negf %323 : vector<16x24xf32>
    %325 = math.exp %324 : vector<16x24xf32>
    %cst_165 = arith.constant 1.000000e+00 : f32
    %326 = vector.broadcast %cst_165 : f32 to vector<16x24xf32>
    %327 = arith.addf %326, %325 : vector<16x24xf32>
    %328 = arith.divf %326, %327 : vector<16x24xf32>
    %329 = arith.mulf %328, %302 : vector<16x24xf32>
    %cst_166 = arith.constant dense<0.000000e+00> : vector<16xf32>
    %330 = vector.multi_reduction <add>, %329, %cst_166 [1] : vector<16x24xf32> to vector<16xf32>
    %331 = vector.shape_cast %330 : vector<16xf32> to vector<16x1xf32>
    %332 = math.log %331 : vector<16x1xf32>
    %cst_167 = arith.constant -1.000000e+02 : f32
    %333 = vector.broadcast %cst_167 : f32 to vector<16x1xf32>
    %334 = arith.maximumf %332, %333 : vector<16x1xf32>
    %cst_168 = arith.constant 1.000000e+00 : f32
    %335 = vector.broadcast %cst_168 : f32 to vector<16x1xf32>
    %336 = arith.subf %335, %331 : vector<16x1xf32>
    %337 = math.log %336 : vector<16x1xf32>
    %cst_169 = arith.constant -1.000000e+02 : f32
    %338 = vector.broadcast %cst_169 : f32 to vector<16x1xf32>
    %339 = arith.maximumf %337, %338 : vector<16x1xf32>
    %340 = arith.mulf %305, %334 : vector<16x1xf32>
    %cst_170 = arith.constant 1.000000e+00 : f32
    %341 = vector.broadcast %cst_170 : f32 to vector<16x1xf32>
    %342 = arith.subf %341, %305 : vector<16x1xf32>
    %343 = arith.mulf %342, %339 : vector<16x1xf32>
    %344 = arith.addf %340, %343 : vector<16x1xf32>
    %cst_171 = arith.constant 0.000000e+00 : f32
    %345 = vector.broadcast %cst_171 : f32 to vector<16x1xf32>
    %346 = arith.subf %345, %344 : vector<16x1xf32>
    %347 = vector.broadcast %c5_i32 : i32 to vector<16x8xi32>
    %348 = arith.cmpi eq, %3, %347 : vector<16x8xi32>
    %349 = vector.shape_cast %331 : vector<16x1xf32> to vector<16x1xf32>
    %350 = vector.broadcast %349 : vector<16x1xf32> to vector<16x8xf32>
    %351 = arith.select %348, %350, %293 : vector<16x8xi1>, vector<16x8xf32>
    %352 = vector.shape_cast %346 : vector<16x1xf32> to vector<16x1xf32>
    %353 = vector.broadcast %352 : vector<16x1xf32> to vector<16x8xf32>
    %354 = arith.select %348, %353, %296 : vector<16x8xi1>, vector<16x8xf32>
    %c6_i32 = arith.constant 6 : i32
    %355 = arith.index_cast %c6_i32 : i32 to index
    %c0_172 = arith.constant 0 : index
    %c0_173 = arith.constant 0 : index
    %356 = vector.load %arg3[%355, %c0_172, %c0_173] : memref<8x16x16xf32, #tpu.memory_space<vmem>>, vector<1x16x16xf32>
    %357 = vector.shape_cast %356 : vector<1x16x16xf32> to vector<16x16xf32>
    %358 = arith.index_cast %c6_i32 : i32 to index
    %c0_174 = arith.constant 0 : index
    %c0_175 = arith.constant 0 : index
    %359 = vector.load %arg4[%358, %c0_174, %c0_175] : memref<8x16x24xf32, #tpu.memory_space<vmem>>, vector<1x16x24xf32>
    %360 = vector.shape_cast %359 : vector<1x16x24xf32> to vector<16x24xf32>
    %361 = arith.index_cast %c6_i32 : i32 to index
    %c0_176 = arith.constant 0 : index
    %c0_177 = arith.constant 0 : index
    %362 = vector.load %arg5[%361, %c0_176, %c0_177] : memref<8x16x1xf32, #tpu.memory_space<vmem>>, vector<1x16x1xf32>
    %363 = vector.shape_cast %362 : vector<1x16x1xf32> to vector<16x1xf32>
    %c0_178 = arith.constant 0 : index
    %c0_179 = arith.constant 0 : index
    %364 = vector.load %arg6[%c0_178, %c0_179] : memref<32x32xf32, #tpu.memory_space<vmem>>, vector<32x32xf32>
    %cst_180 = arith.constant dense<0.000000e+00> : vector<16x32xf32>
    %365 = tpu.matmul %314, %364, %cst_180 {dimension_numbers = #tpu.dot_dimension_numbers<[1], [0], [0], [1], [0, 0, 1, 1], [], []>} : vector<16x32xf32>, vector<32x32xf32>, vector<16x32xf32> -> vector<16x32xf32>
    %c0_181 = arith.constant 0 : index
    %c0_182 = arith.constant 0 : index
    %366 = vector.load %arg7[%c0_181, %c0_182] : memref<16x32xf32, #tpu.memory_space<vmem>>, vector<16x32xf32>
    %cst_183 = arith.constant dense<0.000000e+00> : vector<16x32xf32>
    %367 = tpu.matmul %357, %366, %cst_183 {dimension_numbers = #tpu.dot_dimension_numbers<[1], [0], [0], [1], [0, 0, 1, 1], [], []>} : vector<16x16xf32>, vector<16x32xf32>, vector<16x32xf32> -> vector<16x32xf32>
    %368 = arith.addf %365, %367 : vector<16x32xf32>
    %c0_184 = arith.constant 0 : index
    %c0_185 = arith.constant 0 : index
    %369 = vector.load %arg8[%c0_184, %c0_185] : memref<1x32xf32, #tpu.memory_space<vmem>>, vector<1x32xf32>
    %370 = vector.broadcast %369 : vector<1x32xf32> to vector<16x32xf32>
    %371 = arith.addf %368, %370 : vector<16x32xf32>
    %372 = math.tanh %371 : vector<16x32xf32>
    %373 = arith.index_cast %c6_i32 : i32 to index
    %c0_186 = arith.constant 0 : index
    %c0_187 = arith.constant 0 : index
    %374 = vector.load %arg13[%373, %c0_186, %c0_187] : memref<8x16x32xf32, #tpu.memory_space<vmem>>, vector<1x16x32xf32>
    %375 = vector.shape_cast %374 : vector<1x16x32xf32> to vector<16x32xf32>
    %376 = vector.shape_cast %372 : vector<16x32xf32> to vector<1x16x32xf32>
    tpu.vector_store %arg13[%373, %c0_186, %c0_187], %376 {strides = array<i32>} : memref<8x16x32xf32, #tpu.memory_space<vmem>>, vector<1x16x32xf32>,
    %c0_188 = arith.constant 0 : index
    %c0_189 = arith.constant 0 : index
    %377 = vector.load %arg9[%c0_188, %c0_189] : memref<32x24xf32, #tpu.memory_space<vmem>>, vector<32x24xf32>
    %cst_190 = arith.constant dense<0.000000e+00> : vector<16x24xf32>
    %378 = tpu.matmul %372, %377, %cst_190 {dimension_numbers = #tpu.dot_dimension_numbers<[1], [0], [0], [1], [0, 0, 1, 1], [], []>} : vector<16x32xf32>, vector<32x24xf32>, vector<16x24xf32> -> vector<16x24xf32>
    %c0_191 = arith.constant 0 : index
    %c0_192 = arith.constant 0 : index
    %379 = vector.load %arg10[%c0_191, %c0_192] : memref<1x24xf32, #tpu.memory_space<vmem>>, vector<1x24xf32>
    %380 = vector.broadcast %379 : vector<1x24xf32> to vector<16x24xf32>
    %381 = arith.addf %378, %380 : vector<16x24xf32>
    %382 = arith.negf %381 : vector<16x24xf32>
    %383 = math.exp %382 : vector<16x24xf32>
    %cst_193 = arith.constant 1.000000e+00 : f32
    %384 = vector.broadcast %cst_193 : f32 to vector<16x24xf32>
    %385 = arith.addf %384, %383 : vector<16x24xf32>
    %386 = arith.divf %384, %385 : vector<16x24xf32>
    %387 = arith.mulf %386, %360 : vector<16x24xf32>
    %cst_194 = arith.constant dense<0.000000e+00> : vector<16xf32>
    %388 = vector.multi_reduction <add>, %387, %cst_194 [1] : vector<16x24xf32> to vector<16xf32>
    %389 = vector.shape_cast %388 : vector<16xf32> to vector<16x1xf32>
    %390 = math.log %389 : vector<16x1xf32>
    %cst_195 = arith.constant -1.000000e+02 : f32
    %391 = vector.broadcast %cst_195 : f32 to vector<16x1xf32>
    %392 = arith.maximumf %390, %391 : vector<16x1xf32>
    %cst_196 = arith.constant 1.000000e+00 : f32
    %393 = vector.broadcast %cst_196 : f32 to vector<16x1xf32>
    %394 = arith.subf %393, %389 : vector<16x1xf32>
    %395 = math.log %394 : vector<16x1xf32>
    %cst_197 = arith.constant -1.000000e+02 : f32
    %396 = vector.broadcast %cst_197 : f32 to vector<16x1xf32>
    %397 = arith.maximumf %395, %396 : vector<16x1xf32>
    %398 = arith.mulf %363, %392 : vector<16x1xf32>
    %cst_198 = arith.constant 1.000000e+00 : f32
    %399 = vector.broadcast %cst_198 : f32 to vector<16x1xf32>
    %400 = arith.subf %399, %363 : vector<16x1xf32>
    %401 = arith.mulf %400, %397 : vector<16x1xf32>
    %402 = arith.addf %398, %401 : vector<16x1xf32>
    %cst_199 = arith.constant 0.000000e+00 : f32
    %403 = vector.broadcast %cst_199 : f32 to vector<16x1xf32>
    %404 = arith.subf %403, %402 : vector<16x1xf32>
    %405 = vector.broadcast %c6_i32 : i32 to vector<16x8xi32>
    %406 = arith.cmpi eq, %3, %405 : vector<16x8xi32>
    %407 = vector.shape_cast %389 : vector<16x1xf32> to vector<16x1xf32>
    %408 = vector.broadcast %407 : vector<16x1xf32> to vector<16x8xf32>
    %409 = arith.select %406, %408, %351 : vector<16x8xi1>, vector<16x8xf32>
    %410 = vector.shape_cast %404 : vector<16x1xf32> to vector<16x1xf32>
    %411 = vector.broadcast %410 : vector<16x1xf32> to vector<16x8xf32>
    %412 = arith.select %406, %411, %354 : vector<16x8xi1>, vector<16x8xf32>
    %c7_i32 = arith.constant 7 : i32
    %413 = arith.index_cast %c7_i32 : i32 to index
    %c0_200 = arith.constant 0 : index
    %c0_201 = arith.constant 0 : index
    %414 = vector.load %arg3[%413, %c0_200, %c0_201] : memref<8x16x16xf32, #tpu.memory_space<vmem>>, vector<1x16x16xf32>
    %415 = vector.shape_cast %414 : vector<1x16x16xf32> to vector<16x16xf32>
    %416 = arith.index_cast %c7_i32 : i32 to index
    %c0_202 = arith.constant 0 : index
    %c0_203 = arith.constant 0 : index
    %417 = vector.load %arg4[%416, %c0_202, %c0_203] : memref<8x16x24xf32, #tpu.memory_space<vmem>>, vector<1x16x24xf32>
    %418 = vector.shape_cast %417 : vector<1x16x24xf32> to vector<16x24xf32>
    %419 = arith.index_cast %c7_i32 : i32 to index
    %c0_204 = arith.constant 0 : index
    %c0_205 = arith.constant 0 : index
    %420 = vector.load %arg5[%419, %c0_204, %c0_205] : memref<8x16x1xf32, #tpu.memory_space<vmem>>, vector<1x16x1xf32>
    %421 = vector.shape_cast %420 : vector<1x16x1xf32> to vector<16x1xf32>
    %c0_206 = arith.constant 0 : index
    %c0_207 = arith.constant 0 : index
    %422 = vector.load %arg6[%c0_206, %c0_207] : memref<32x32xf32, #tpu.memory_space<vmem>>, vector<32x32xf32>
    %cst_208 = arith.constant dense<0.000000e+00> : vector<16x32xf32>
    %423 = tpu.matmul %372, %422, %cst_208 {dimension_numbers = #tpu.dot_dimension_numbers<[1], [0], [0], [1], [0, 0, 1, 1], [], []>} : vector<16x32xf32>, vector<32x32xf32>, vector<16x32xf32> -> vector<16x32xf32>
    %c0_209 = arith.constant 0 : index
    %c0_210 = arith.constant 0 : index
    %424 = vector.load %arg7[%c0_209, %c0_210] : memref<16x32xf32, #tpu.memory_space<vmem>>, vector<16x32xf32>
    %cst_211 = arith.constant dense<0.000000e+00> : vector<16x32xf32>
    %425 = tpu.matmul %415, %424, %cst_211 {dimension_numbers = #tpu.dot_dimension_numbers<[1], [0], [0], [1], [0, 0, 1, 1], [], []>} : vector<16x16xf32>, vector<16x32xf32>, vector<16x32xf32> -> vector<16x32xf32>
    %426 = arith.addf %423, %425 : vector<16x32xf32>
    %c0_212 = arith.constant 0 : index
    %c0_213 = arith.constant 0 : index
    %427 = vector.load %arg8[%c0_212, %c0_213] : memref<1x32xf32, #tpu.memory_space<vmem>>, vector<1x32xf32>
    %428 = vector.broadcast %427 : vector<1x32xf32> to vector<16x32xf32>
    %429 = arith.addf %426, %428 : vector<16x32xf32>
    %430 = math.tanh %429 : vector<16x32xf32>
    %431 = arith.index_cast %c7_i32 : i32 to index
    %c0_214 = arith.constant 0 : index
    %c0_215 = arith.constant 0 : index
    %432 = vector.load %arg13[%431, %c0_214, %c0_215] : memref<8x16x32xf32, #tpu.memory_space<vmem>>, vector<1x16x32xf32>
    %433 = vector.shape_cast %432 : vector<1x16x32xf32> to vector<16x32xf32>
    %434 = vector.shape_cast %430 : vector<16x32xf32> to vector<1x16x32xf32>
    tpu.vector_store %arg13[%431, %c0_214, %c0_215], %434 {strides = array<i32>} : memref<8x16x32xf32, #tpu.memory_space<vmem>>, vector<1x16x32xf32>,
    %c0_216 = arith.constant 0 : index
    %c0_217 = arith.constant 0 : index
    %435 = vector.load %arg9[%c0_216, %c0_217] : memref<32x24xf32, #tpu.memory_space<vmem>>, vector<32x24xf32>
    %cst_218 = arith.constant dense<0.000000e+00> : vector<16x24xf32>
    %436 = tpu.matmul %430, %435, %cst_218 {dimension_numbers = #tpu.dot_dimension_numbers<[1], [0], [0], [1], [0, 0, 1, 1], [], []>} : vector<16x32xf32>, vector<32x24xf32>, vector<16x24xf32> -> vector<16x24xf32>
    %c0_219 = arith.constant 0 : index
    %c0_220 = arith.constant 0 : index
    %437 = vector.load %arg10[%c0_219, %c0_220] : memref<1x24xf32, #tpu.memory_space<vmem>>, vector<1x24xf32>
    %438 = vector.broadcast %437 : vector<1x24xf32> to vector<16x24xf32>
    %439 = arith.addf %436, %438 : vector<16x24xf32>
    %440 = arith.negf %439 : vector<16x24xf32>
    %441 = math.exp %440 : vector<16x24xf32>
    %cst_221 = arith.constant 1.000000e+00 : f32
    %442 = vector.broadcast %cst_221 : f32 to vector<16x24xf32>
    %443 = arith.addf %442, %441 : vector<16x24xf32>
    %444 = arith.divf %442, %443 : vector<16x24xf32>
    %445 = arith.mulf %444, %418 : vector<16x24xf32>
    %cst_222 = arith.constant dense<0.000000e+00> : vector<16xf32>
    %446 = vector.multi_reduction <add>, %445, %cst_222 [1] : vector<16x24xf32> to vector<16xf32>
    %447 = vector.shape_cast %446 : vector<16xf32> to vector<16x1xf32>
    %448 = math.log %447 : vector<16x1xf32>
    %cst_223 = arith.constant -1.000000e+02 : f32
    %449 = vector.broadcast %cst_223 : f32 to vector<16x1xf32>
    %450 = arith.maximumf %448, %449 : vector<16x1xf32>
    %cst_224 = arith.constant 1.000000e+00 : f32
    %451 = vector.broadcast %cst_224 : f32 to vector<16x1xf32>
    %452 = arith.subf %451, %447 : vector<16x1xf32>
    %453 = math.log %452 : vector<16x1xf32>
    %cst_225 = arith.constant -1.000000e+02 : f32
    %454 = vector.broadcast %cst_225 : f32 to vector<16x1xf32>
    %455 = arith.maximumf %453, %454 : vector<16x1xf32>
    %456 = arith.mulf %421, %450 : vector<16x1xf32>
    %cst_226 = arith.constant 1.000000e+00 : f32
    %457 = vector.broadcast %cst_226 : f32 to vector<16x1xf32>
    %458 = arith.subf %457, %421 : vector<16x1xf32>
    %459 = arith.mulf %458, %455 : vector<16x1xf32>
    %460 = arith.addf %456, %459 : vector<16x1xf32>
    %cst_227 = arith.constant 0.000000e+00 : f32
    %461 = vector.broadcast %cst_227 : f32 to vector<16x1xf32>
    %462 = arith.subf %461, %460 : vector<16x1xf32>
    %463 = vector.broadcast %c7_i32 : i32 to vector<16x8xi32>
    %464 = arith.cmpi eq, %3, %463 : vector<16x8xi32>
    %465 = vector.shape_cast %447 : vector<16x1xf32> to vector<16x1xf32>
    %466 = vector.broadcast %465 : vector<16x1xf32> to vector<16x8xf32>
    %467 = arith.select %464, %466, %409 : vector<16x8xi1>, vector<16x8xf32>
    %468 = vector.shape_cast %462 : vector<16x1xf32> to vector<16x1xf32>
    %469 = vector.broadcast %468 : vector<16x1xf32> to vector<16x8xf32>
    %470 = arith.select %464, %469, %412 : vector<16x8xi1>, vector<16x8xf32>
    %c8_i32 = arith.constant 8 : i32
    %c0_228 = arith.constant 0 : index
    %c0_229 = arith.constant 0 : index
    %471 = vector.load %arg14[%c0_228, %c0_229] : memref<16x32xf32, #tpu.memory_space<vmem>>, vector<16x32xf32>
    tpu.vector_store %arg14[%c0_228, %c0_229], %430 {strides = array<i32>} : memref<16x32xf32, #tpu.memory_space<vmem>>, vector<16x32xf32>,
    %472 = tpu.transpose %467, [1, 0] : vector<16x8xf32> -> vector<8x16xf32>
    %c0_230 = arith.constant 0 : index
    %c0_231 = arith.constant 0 : index
    %473 = vector.load %arg11[%c0_230, %c0_231] : memref<8x16xf32, #tpu.memory_space<vmem>>, vector<8x16xf32>
    tpu.vector_store %arg11[%c0_230, %c0_231], %472 {strides = array<i32>} : memref<8x16xf32, #tpu.memory_space<vmem>>, vector<8x16xf32>,
    %474 = tpu.transpose %470, [1, 0] : vector<16x8xf32> -> vector<8x16xf32>
    %c0_232 = arith.constant 0 : index
    %c0_233 = arith.constant 0 : index
    %475 = vector.load %arg12[%c0_232, %c0_233] : memref<8x16xf32, #tpu.memory_space<vmem>>, vector<8x16xf32>
    tpu.vector_store %arg12[%c0_232, %c0_233], %474 {strides = array<i32>} : memref<8x16xf32, #tpu.memory_space<vmem>>, vector<8x16xf32>,
    return
  }
  func.func @transform_0(%arg0: i32, %arg1: i32) -> (i32, i32) {
    %c0_i32 = arith.constant 0 : i32
    %c0_i32_0 = arith.constant 0 : i32
    return %arg0, %c0_i32 : i32, i32
  }
  func.func @transform_1(%arg0: i32, %arg1: i32) -> (i32, i32, i32) {
    %c0_i32 = arith.constant 0 : i32
    %c0_i32_0 = arith.constant 0 : i32
    return %arg1, %arg0, %c0_i32 : i32, i32, i32
  }
  func.func @transform_2(%arg0: i32, %arg1: i32) -> (i32, i32, i32) {
    %c0_i32 = arith.constant 0 : i32
    %c0_i32_0 = arith.constant 0 : i32
    return %arg1, %arg0, %c0_i32 : i32, i32, i32
  }
  func.func @transform_3(%arg0: i32, %arg1: i32) -> (i32, i32, i32) {
    %c0_i32 = arith.constant 0 : i32
    %c0_i32_0 = arith.constant 0 : i32
    return %arg1, %arg0, %c0_i32 : i32, i32, i32
  }
  func.func @transform_4(%arg0: i32, %arg1: i32) -> (i32, i32) {
    %c0_i32 = arith.constant 0 : i32
    %c0_i32_0 = arith.constant 0 : i32
    %c0_i32_1 = arith.constant 0 : i32
    return %c0_i32, %c0_i32_0 : i32, i32
  }
  func.func @transform_5(%arg0: i32, %arg1: i32) -> (i32, i32) {
    %c0_i32 = arith.constant 0 : i32
    %c0_i32_0 = arith.constant 0 : i32
    %c0_i32_1 = arith.constant 0 : i32
    return %c0_i32, %c0_i32_0 : i32, i32
  }
  func.func @transform_6(%arg0: i32, %arg1: i32) -> (i32, i32) {
    %c0_i32 = arith.constant 0 : i32
    %c0_i32_0 = arith.constant 0 : i32
    %c0_i32_1 = arith.constant 0 : i32
    return %c0_i32, %c0_i32_0 : i32, i32
  }
  func.func @transform_7(%arg0: i32, %arg1: i32) -> (i32, i32) {
    %c0_i32 = arith.constant 0 : i32
    %c0_i32_0 = arith.constant 0 : i32
    %c0_i32_1 = arith.constant 0 : i32
    return %c0_i32, %c0_i32_0 : i32, i32
  }
  func.func @transform_8(%arg0: i32, %arg1: i32) -> (i32, i32) {
    %c0_i32 = arith.constant 0 : i32
    %c0_i32_0 = arith.constant 0 : i32
    %c0_i32_1 = arith.constant 0 : i32
    return %c0_i32, %c0_i32_0 : i32, i32
  }
  func.func @transform_9(%arg0: i32, %arg1: i32) -> (i32, i32) {
    %c0_i32 = arith.constant 0 : i32
    return %arg1, %arg0 : i32, i32
  }
  func.func @transform_10(%arg0: i32, %arg1: i32) -> (i32, i32) {
    %c0_i32 = arith.constant 0 : i32
    return %arg1, %arg0 : i32, i32
  }
  func.func @transform_11(%arg0: i32, %arg1: i32) -> (i32, i32, i32) {
    %c0_i32 = arith.constant 0 : i32
    %c0_i32_0 = arith.constant 0 : i32
    return %arg1, %arg0, %c0_i32 : i32, i32, i32
  }
}

</mosaic_0001>

<llo_original>
// kernel: rnn_layer_sequence_forward.1
$region0: #{rnn_layer_sequence_forward.1}
  #allocation0 [shape = 'u32[]', space=smem, size = 0x4, offset = 0x4, fixed_abs, tag = 'smem constant byte address 0x4 - core index']
  #allocation1 [shape = 'u32[72,128]{1,0:T(1,128)}', space=vmem, size = 0x9000, scoped, tag = 'internal scratch']
  #allocation2 [shape = 'f32[16,32]{1,0:T(8,128)}', space=vmem, size = 0x2000, scoped, tag = 'scratch operand']
  %s0 = inlined_call_operand.vmem [shape: f32[16,32], index: 0, kind: input, shape index: {}]
  %s1 = inlined_call_operand.vmem [shape: f32[24,16,16], index: 1, kind: input, shape index: {}]
  %s2 = inlined_call_operand.vmem [shape: f32[24,16,24], index: 2, kind: input, shape index: {}]
  %s3 = inlined_call_operand.vmem [shape: f32[24,16,1], index: 3, kind: input, shape index: {}]
  %s4 = inlined_call_operand.vmem [shape: f32[32,32], index: 4, kind: input, shape index: {}]
  %s5 = inlined_call_operand.vmem [shape: f32[16,32], index: 5, kind: input, shape index: {}]
  %s6 = inlined_call_operand.vmem [shape: f32[1,32], index: 6, kind: input, shape index: {}]
  %s7 = inlined_call_operand.vmem [shape: f32[32,24], index: 7, kind: input, shape index: {}]
  %s8 = inlined_call_operand.vmem [shape: f32[1,24], index: 8, kind: input, shape index: {}]
  %s9 = inlined_call_operand.vmem [shape: f32[24,16], index: 9, kind: output, shape index: {0}]
  %s10 = inlined_call_operand.vmem [shape: f32[24,16], index: 10, kind: output, shape index: {1}]
  %s11 = inlined_call_operand.vmem [shape: f32[24,16,32], index: 11, kind: output, shape index: {2}]
  %12 = xla_tuple %s9, %s10, %s11
  %s13 = sld [smem:[#allocation0]]
  $region89: #{rnn_layer_sequence_forward.1} parent=0
    _
  %s15 = ssub.s32 1, %s13
  %s16 = scalar_select 0, %s15, %s13
  loop: start=0, step=1, limit=5
  $region2: #{rnn_layer_sequence_forward.1} parent=0 // loop_pre_header
    _
  $region3: #{rnn_layer_sequence_forward.1} parent=0 // loop_header
    %s18 = sphi 0, %s22
    %p19 = scmp.ge.s32.totalorder %s18, 5
    %s25 = sphi 0, %s37
    %s26 = sphi 0, %s33
    %s27 = sphi 0, %s25
    %s28 = sphi 0, %s26
    %s29 = sphi 0, %s27
    %s30 = sphi 0, %s28
    %s40 = sphi 0, %s42
    %s43 = sphi 0, %s40
    %s44 = sphi 0, %s43
    %s60 = sphi 0, %s44
    %s68 = sphi 0, %s70
    %s71 = sphi 0, %s68
    %s72 = sphi 0, %s71
    %s88 = sphi 0, %s72
    %s96 = sphi 0, %s98
    %s99 = sphi 0, %s96
    %s100 = sphi 0, %s99
    %s116 = sphi 0, %s100
    %s124 = sphi 0, %s126
    %s127 = sphi 0, %s124
    %s128 = sphi 0, %s127
    %s144 = sphi 0, %s128
    %s148 = sphi 0, %s148
    %s150 = sphi 0, %s148
    %s151 = sphi 0, %s150
    %s165 = sphi 0, %s151
    %s169 = sphi 0, %s169
    %s171 = sphi 0, %s169
    %s172 = sphi 0, %s171
    %s186 = sphi 0, %s172
    %s190 = sphi 0, %s190
    %s192 = sphi 0, %s190
    %s193 = sphi 0, %s192
    %s207 = sphi 0, %s193
    %s211 = sphi 0, %s211
    %s213 = sphi 0, %s211
    %s214 = sphi 0, %s213
    %s228 = sphi 0, %s214
    %s232 = sphi 0, %s232
    %s234 = sphi 0, %s232
    %s235 = sphi 0, %s234
    %s249 = sphi 0, %s235
    %s257 = sphi 0, %s259
    %s260 = sphi 0, %s257
    %s261 = sphi 0, %s260
    %s277 = sphi 0, %s261
    %s285 = sphi 0, %s287
    %s288 = sphi 0, %s285
    %s289 = sphi 0, %s288
    %s305 = sphi 0, %s289
    %s313 = sphi 0, %s315
    %s316 = sphi 0, %s313
    %s317 = sphi 0, %s316
    %s333 = sphi 0, %s317
  $region4: #{rnn_layer_sequence_forward.1} parent=0 // loop_header_branch
    %21 = sbr.rel (%p19) target = $region8
  $region5: #{rnn_layer_sequence_forward.1} parent=0 // loop_body
    %s23 = ssub.s32 %s18, 1
    %s24 = ssub.s32 %s18, 2
    %s31 = sadd.s32 1, %s26
    %p32 = scmp.ge.s32.totalorder %s31, 3
    %s33 = scalar_select %p32, 0, %s31
    %s34 = sadd.s32 1, %s25
    %s35 = scalar_select %p32, %s34, %s25
    %p36 = scmp.ge.s32.totalorder %s35, 1
    %s37 = scalar_select %p36, 0, %s35
    %s38 = ssub.s32 %s25, %s37
    %p39 = scmp.eq.s32.totalorder %s38, 0
    %s41 = sadd.s32 %s40, 1
    %s42 = scalar_select %p39, %s40, %s41
    %p45 = pneg %p39
    %p46 = scmp.eq.s32.totalorder %s18, 2
    %p47 = por %p45, %p46
    %p48 = scmp.ne.s32.totalorder %s40, %s43
    %p49 = scmp.eq.s32.totalorder %s18, 0
    %p50 = por %p48, %p49
    %p51 = scmp.ne.s32.totalorder %s40, %s43
    %p52 = scmp.eq.s32.totalorder %s23, 2
    %p53 = por %p51, %p52
    %p54 = scmp.ne.s32.totalorder %s43, %s44
    %p55 = scmp.eq.s32.totalorder %s23, 0
    %p56 = por %p54, %p55
    %p57 = scmp.ne.s32.totalorder %s43, %s44
    %p58 = scmp.eq.s32.totalorder %s24, 2
    %p59 = por %p57, %p58
    %p61 = scmp.ne.s32.totalorder %s44, %s60
    %p62 = scmp.eq.s32.totalorder %s24, 0
    %p63 = por %p61, %p62
    %s64 = ssub.s32 %s26, %s33
    %s65 = ssub.s32 %s25, %s37
    %s66 = sor.u32 %s64, %s65
    %p67 = scmp.eq.s32.totalorder %s66, 0
    %s69 = sadd.s32 %s68, 1
    %s70 = scalar_select %p67, %s68, %s69
    %p73 = pneg %p67
    %p74 = scmp.eq.s32.totalorder %s18, 2
    %p75 = por %p73, %p74
    %p76 = scmp.ne.s32.totalorder %s68, %s71
    %p77 = scmp.eq.s32.totalorder %s18, 0
    %p78 = por %p76, %p77
    %p79 = scmp.ne.s32.totalorder %s68, %s71
    %p80 = scmp.eq.s32.totalorder %s23, 2
    %p81 = por %p79, %p80
    %p82 = scmp.ne.s32.totalorder %s71, %s72
    %p83 = scmp.eq.s32.totalorder %s23, 0
    %p84 = por %p82, %p83
    %p85 = scmp.ne.s32.totalorder %s71, %s72
    %p86 = scmp.eq.s32.totalorder %s24, 2
    %p87 = por %p85, %p86
    %p89 = scmp.ne.s32.totalorder %s72, %s88
    %p90 = scmp.eq.s32.totalorder %s24, 0
    %p91 = por %p89, %p90
    %s92 = ssub.s32 %s26, %s33
    %s93 = ssub.s32 %s25, %s37
    %s94 = sor.u32 %s92, %s93
    %p95 = scmp.eq.s32.totalorder %s94, 0
    %s97 = sadd.s32 %s96, 1
    %s98 = scalar_select %p95, %s96, %s97
    %p101 = pneg %p95
    %p102 = scmp.eq.s32.totalorder %s18, 2
    %p103 = por %p101, %p102
    %p104 = scmp.ne.s32.totalorder %s96, %s99
    %p105 = scmp.eq.s32.totalorder %s18, 0
    %p106 = por %p104, %p105
    %p107 = scmp.ne.s32.totalorder %s96, %s99
    %p108 = scmp.eq.s32.totalorder %s23, 2
    %p109 = por %p107, %p108
    %p110 = scmp.ne.s32.totalorder %s99, %s100
    %p111 = scmp.eq.s32.totalorder %s23, 0
    %p112 = por %p110, %p111
    %p113 = scmp.ne.s32.totalorder %s99, %s100
    %p114 = scmp.eq.s32.totalorder %s24, 2
    %p115 = por %p113, %p114
    %p117 = scmp.ne.s32.totalorder %s100, %s116
    %p118 = scmp.eq.s32.totalorder %s24, 0
    %p119 = por %p117, %p118
    %s120 = ssub.s32 %s26, %s33
    %s121 = ssub.s32 %s25, %s37
    %s122 = sor.u32 %s120, %s121
    %p123 = scmp.eq.s32.totalorder %s122, 0
    %s125 = sadd.s32 %s124, 1
    %s126 = scalar_select %p123, %s124, %s125
    %p129 = pneg %p123
    %p130 = scmp.eq.s32.totalorder %s18, 2
    %p131 = por %p129, %p130
    %p132 = scmp.ne.s32.totalorder %s124, %s127
    %p133 = scmp.eq.s32.totalorder %s18, 0
    %p134 = por %p132, %p133
    %p135 = scmp.ne.s32.totalorder %s124, %s127
    %p136 = scmp.eq.s32.totalorder %s23, 2
    %p137 = por %p135, %p136
    %p138 = scmp.ne.s32.totalorder %s127, %s128
    %p139 = scmp.eq.s32.totalorder %s23, 0
    %p140 = por %p138, %p139
    %p141 = scmp.ne.s32.totalorder %s127, %s128
    %p142 = scmp.eq.s32.totalorder %s24, 2
    %p143 = por %p141, %p142
    %p145 = scmp.ne.s32.totalorder %s128, %s144
    %p146 = scmp.eq.s32.totalorder %s24, 0
    %p147 = por %p145, %p146
    %s149 = sadd.s32 %s148, 1
    %p152 = scmp.eq.s32.totalorder %s18, 2
    %p153 = scmp.ne.s32.totalorder %s148, %s150
    %p154 = scmp.eq.s32.totalorder %s18, 0
    %p155 = por %p153, %p154
    %p156 = scmp.ne.s32.totalorder %s148, %s150
    %p157 = scmp.eq.s32.totalorder %s23, 2
    %p158 = por %p156, %p157
    %p159 = scmp.ne.s32.totalorder %s150, %s151
    %p160 = scmp.eq.s32.totalorder %s23, 0
    %p161 = por %p159, %p160
    %p162 = scmp.ne.s32.totalorder %s150, %s151
    %p163 = scmp.eq.s32.totalorder %s24, 2
    %p164 = por %p162, %p163
    %p166 = scmp.ne.s32.totalorder %s151, %s165
    %p167 = scmp.eq.s32.totalorder %s24, 0
    %p168 = por %p166, %p167
    %s170 = sadd.s32 %s169, 1
    %p173 = scmp.eq.s32.totalorder %s18, 2
    %p174 = scmp.ne.s32.totalorder %s169, %s171
    %p175 = scmp.eq.s32.totalorder %s18, 0
    %p176 = por %p174, %p175
    %p177 = scmp.ne.s32.totalorder %s169, %s171
    %p178 = scmp.eq.s32.totalorder %s23, 2
    %p179 = por %p177, %p178
    %p180 = scmp.ne.s32.totalorder %s171, %s172
    %p181 = scmp.eq.s32.totalorder %s23, 0
    %p182 = por %p180, %p181
    %p183 = scmp.ne.s32.totalorder %s171, %s172
    %p184 = scmp.eq.s32.totalorder %s24, 2
    %p185 = por %p183, %p184
    %p187 = scmp.ne.s32.totalorder %s172, %s186
    %p188 = scmp.eq.s32.totalorder %s24, 0
    %p189 = por %p187, %p188
    %s191 = sadd.s32 %s190, 1
    %p194 = scmp.eq.s32.totalorder %s18, 2
    %p195 = scmp.ne.s32.totalorder %s190, %s192
    %p196 = scmp.eq.s32.totalorder %s18, 0
    %p197 = por %p195, %p196
    %p198 = scmp.ne.s32.totalorder %s190, %s192
    %p199 = scmp.eq.s32.totalorder %s23, 2
    %p200 = por %p198, %p199
    %p201 = scmp.ne.s32.totalorder %s192, %s193
    %p202 = scmp.eq.s32.totalorder %s23, 0
    %p203 = por %p201, %p202
    %p204 = scmp.ne.s32.totalorder %s192, %s193
    %p205 = scmp.eq.s32.totalorder %s24, 2
    %p206 = por %p204, %p205
    %p208 = scmp.ne.s32.totalorder %s193, %s207
    %p209 = scmp.eq.s32.totalorder %s24, 0
    %p210 = por %p208, %p209
    %s212 = sadd.s32 %s211, 1
    %p215 = scmp.eq.s32.totalorder %s18, 2
    %p216 = scmp.ne.s32.totalorder %s211, %s213
    %p217 = scmp.eq.s32.totalorder %s18, 0
    %p218 = por %p216, %p217
    %p219 = scmp.ne.s32.totalorder %s211, %s213
    %p220 = scmp.eq.s32.totalorder %s23, 2
    %p221 = por %p219, %p220
    %p222 = scmp.ne.s32.totalorder %s213, %s214
    %p223 = scmp.eq.s32.totalorder %s23, 0
    %p224 = por %p222, %p223
    %p225 = scmp.ne.s32.totalorder %s213, %s214
    %p226 = scmp.eq.s32.totalorder %s24, 2
    %p227 = por %p225, %p226
    %p229 = scmp.ne.s32.totalorder %s214, %s228
    %p230 = scmp.eq.s32.totalorder %s24, 0
    %p231 = por %p229, %p230
    %s233 = sadd.s32 %s232, 1
    %p236 = scmp.eq.s32.totalorder %s18, 2
    %p237 = scmp.ne.s32.totalorder %s232, %s234
    %p238 = scmp.eq.s32.totalorder %s18, 0
    %p239 = por %p237, %p238
    %p240 = scmp.ne.s32.totalorder %s232, %s234
    %p241 = scmp.eq.s32.totalorder %s23, 2
    %p242 = por %p240, %p241
    %p243 = scmp.ne.s32.totalorder %s234, %s235
    %p244 = scmp.eq.s32.totalorder %s23, 0
    %p245 = por %p243, %p244
    %p246 = scmp.ne.s32.totalorder %s234, %s235
    %p247 = scmp.eq.s32.totalorder %s24, 2
    %p248 = por %p246, %p247
    %p250 = scmp.ne.s32.totalorder %s235, %s249
    %p251 = scmp.eq.s32.totalorder %s24, 0
    %p252 = por %p250, %p251
    %s253 = ssub.s32 %s26, %s33
    %s254 = ssub.s32 %s25, %s37
    %s255 = sor.u32 %s253, %s254
    %p256 = scmp.eq.s32.totalorder %s255, 0
    %s258 = sadd.s32 %s257, 1
    %s259 = scalar_select %p256, %s257, %s258
    %p262 = pneg %p256
    %p263 = scmp.eq.s32.totalorder %s18, 2
    %p264 = por %p262, %p263
    %p265 = scmp.ne.s32.totalorder %s257, %s260
    %p266 = scmp.eq.s32.totalorder %s18, 0
    %p267 = por %p265, %p266
    %p268 = scmp.ne.s32.totalorder %s257, %s260
    %p269 = scmp.eq.s32.totalorder %s23, 2
    %p270 = por %p268, %p269
    %p271 = scmp.ne.s32.totalorder %s260, %s261
    %p272 = scmp.eq.s32.totalorder %s23, 0
    %p273 = por %p271, %p272
    %p274 = scmp.ne.s32.totalorder %s260, %s261
    %p275 = scmp.eq.s32.totalorder %s24, 2
    %p276 = por %p274, %p275
    %p278 = scmp.ne.s32.totalorder %s261, %s277
    %p279 = scmp.eq.s32.totalorder %s24, 0
    %p280 = por %p278, %p279
    %s281 = ssub.s32 %s26, %s33
    %s282 = ssub.s32 %s25, %s37
    %s283 = sor.u32 %s281, %s282
    %p284 = scmp.eq.s32.totalorder %s283, 0
    %s286 = sadd.s32 %s285, 1
    %s287 = scalar_select %p284, %s285, %s286
    %p290 = pneg %p284
    %p291 = scmp.eq.s32.totalorder %s18, 2
    %p292 = por %p290, %p291
    %p293 = scmp.ne.s32.totalorder %s285, %s288
    %p294 = scmp.eq.s32.totalorder %s18, 0
    %p295 = por %p293, %p294
    %p296 = scmp.ne.s32.totalorder %s285, %s288
    %p297 = scmp.eq.s32.totalorder %s23, 2
    %p298 = por %p296, %p297
    %p299 = scmp.ne.s32.totalorder %s288, %s289
    %p300 = scmp.eq.s32.totalorder %s23, 0
    %p301 = por %p299, %p300
    %p302 = scmp.ne.s32.totalorder %s288, %s289
    %p303 = scmp.eq.s32.totalorder %s24, 2
    %p304 = por %p302, %p303
    %p306 = scmp.ne.s32.totalorder %s289, %s305
    %p307 = scmp.eq.s32.totalorder %s24, 0
    %p308 = por %p306, %p307
    %s309 = ssub.s32 %s26, %s33
    %s310 = ssub.s32 %s25, %s37
    %s311 = sor.u32 %s309, %s310
    %p312 = scmp.eq.s32.totalorder %s311, 0
    %s314 = sadd.s32 %s313, 1
    %s315 = scalar_select %p312, %s313, %s314
    %p318 = pneg %p312
    %p319 = scmp.eq.s32.totalorder %s18, 2
    %p320 = por %p318, %p319
    %p321 = scmp.ne.s32.totalorder %s313, %s316
    %p322 = scmp.eq.s32.totalorder %s18, 0
    %p323 = por %p321, %p322
    %p324 = scmp.ne.s32.totalorder %s313, %s316
    %p325 = scmp.eq.s32.totalorder %s23, 2
    %p326 = por %p324, %p325
    %p327 = scmp.ne.s32.totalorder %s316, %s317
    %p328 = scmp.eq.s32.totalorder %s23, 0
    %p329 = por %p327, %p328
    %p330 = scmp.ne.s32.totalorder %s316, %s317
    %p331 = scmp.eq.s32.totalorder %s24, 2
    %p332 = por %p330, %p331
    %p334 = scmp.ne.s32.totalorder %s317, %s333
    %p335 = scmp.eq.s32.totalorder %s24, 0
    %p336 = por %p334, %p335
    %p337 = scmp.le.s32.totalorder 1, %s18
    %p338 = scmp.lt.s32.totalorder %s18, 4
    %p339 = pnand %p337, %p338
    %p340 = pneg %p339
    // Predicated region
    $region9: #{rnn_layer_sequence_forward.1} parent=5 // pred_check
      _
    $region10: #{rnn_layer_sequence_forward.1} parent=5 // pred_check_branch
      %342 = sbr.rel (%p339) target = $region12
    $region11: #{rnn_layer_sequence_forward.1} parent=5 // pred_region
      %s343 = ssub.s32 %s18, 1
      // Predicated region
      $region13: #{rnn_layer_sequence_forward.1} parent=11 // pred_check
        %p344 = pneg %p56
      $region14: #{rnn_layer_sequence_forward.1} parent=11 // pred_check_branch
        %346 = sbr.rel (%p344) target = $region16
      $region15: #{rnn_layer_sequence_forward.1} parent=11 // pred_region
        %s347 = smul.u32 2, %s27
        %p348 = scmp.lt.s32.totalorder %s347, 1
        %s349 = scalar_select %p348, %s347, 1
        %s350 = smul.addr %s349, 8
        %s351 = scalar_lea.vmem %s0, %s350
        %s352 = smul.u32 2, %s27
      $region16: #{rnn_layer_sequence_forward.1} parent=11 // pred_fallthru
        _
      // Predicated region
      $region17: #{rnn_layer_sequence_forward.1} parent=11 // pred_check
        %p353 = pneg %p161
      $region18: #{rnn_layer_sequence_forward.1} parent=11 // pred_check_branch
        %355 = sbr.rel (%p353) target = $region20
      $region19: #{rnn_layer_sequence_forward.1} parent=11 // pred_region
        _
      $region20: #{rnn_layer_sequence_forward.1} parent=11 // pred_fallthru
        _
      // Predicated region
      $region21: #{rnn_layer_sequence_forward.1} parent=11 // pred_check
        %p356 = pneg %p182
      $region22: #{rnn_layer_sequence_forward.1} parent=11 // pred_check_branch
        %358 = sbr.rel (%p356) target = $region24
      $region23: #{rnn_layer_sequence_forward.1} parent=11 // pred_region
        _
      $region24: #{rnn_layer_sequence_forward.1} parent=11 // pred_fallthru
        _
      // Predicated region
      $region25: #{rnn_layer_sequence_forward.1} parent=11 // pred_check
        %p359 = pneg %p203
      $region26: #{rnn_layer_sequence_forward.1} parent=11 // pred_check_branch
        %361 = sbr.rel (%p359) target = $region28
      $region27: #{rnn_layer_sequence_forward.1} parent=11 // pred_region
        _
      $region28: #{rnn_layer_sequence_forward.1} parent=11 // pred_fallthru
        _
      // Predicated region
      $region29: #{rnn_layer_sequence_forward.1} parent=11 // pred_check
        %p362 = pneg %p224
      $region30: #{rnn_layer_sequence_forward.1} parent=11 // pred_check_branch
        %364 = sbr.rel (%p362) target = $region32
      $region31: #{rnn_layer_sequence_forward.1} parent=11 // pred_region
        _
      $region32: #{rnn_layer_sequence_forward.1} parent=11 // pred_fallthru
        _
      // Predicated region
      $region33: #{rnn_layer_sequence_forward.1} parent=11 // pred_check
        %p365 = pneg %p245
      $region34: #{rnn_layer_sequence_forward.1} parent=11 // pred_check_branch
        %367 = sbr.rel (%p365) target = $region36
      $region35: #{rnn_layer_sequence_forward.1} parent=11 // pred_region
        _
      $region36: #{rnn_layer_sequence_forward.1} parent=11 // pred_fallthru
        _
    $region12: #{rnn_layer_sequence_forward.1} parent=5 // pred_fallthru
      _
    %p368 = scmp.lt.s32.totalorder %s18, 3
    // Predicated region
    $region37: #{rnn_layer_sequence_forward.1} parent=5 // pred_check
      %p369 = pneg %p368
    $region38: #{rnn_layer_sequence_forward.1} parent=5 // pred_check_branch
      %371 = sbr.rel (%p369) target = $region40
    $region39: #{rnn_layer_sequence_forward.1} parent=5 // pred_region
      // Predicated region
      $region41: #{rnn_layer_sequence_forward.1} parent=39 // pred_check
        %p372 = pneg %p78
      $region42: #{rnn_layer_sequence_forward.1} parent=39 // pred_check_branch
        %374 = sbr.rel (%p372) target = $region44
      $region43: #{rnn_layer_sequence_forward.1} parent=39 // pred_region
        %s375 = smul.u32 8, %s26
        %s376 = smul.u32 2, %s25
        %p377 = scmp.lt.s32.totalorder %s375, 23
        %s378 = scalar_select %p377, %s375, 23
        %p379 = scmp.lt.s32.totalorder %s376, 1
        %s380 = scalar_select %p379, %s376, 1
        %s381 = smul.addr %s378, 2
        %s382 = sadd.s32 %s380, %s381
        %s383 = smul.addr %s382, 8
        %s384 = scalar_lea.vmem %s1, %s383
        %s385 = smul.u32 8, %s26
        %s386 = smul.u32 2, %s25
      $region44: #{rnn_layer_sequence_forward.1} parent=39 // pred_fallthru
        _
      // Predicated region
      $region45: #{rnn_layer_sequence_forward.1} parent=39 // pred_check
        %p387 = pneg %p106
      $region46: #{rnn_layer_sequence_forward.1} parent=39 // pred_check_branch
        %389 = sbr.rel (%p387) target = $region48
      $region47: #{rnn_layer_sequence_forward.1} parent=39 // pred_region
        %s390 = smul.u32 8, %s26
        %s391 = smul.u32 2, %s25
        %p392 = scmp.lt.s32.totalorder %s390, 23
        %s393 = scalar_select %p392, %s390, 23
        %p394 = scmp.lt.s32.totalorder %s391, 1
        %s395 = scalar_select %p394, %s391, 1
        %s396 = smul.addr %s393, 2
        %s397 = sadd.s32 %s395, %s396
        %s398 = smul.addr %s397, 8
        %s399 = scalar_lea.vmem %s2, %s398
        %s400 = smul.u32 8, %s26
        %s401 = smul.u32 2, %s25
      $region48: #{rnn_layer_sequence_forward.1} parent=39 // pred_fallthru
        _
      // Predicated region
      $region49: #{rnn_layer_sequence_forward.1} parent=39 // pred_check
        %p402 = pneg %p134
      $region50: #{rnn_layer_sequence_forward.1} parent=39 // pred_check_branch
        %404 = sbr.rel (%p402) target = $region52
      $region51: #{rnn_layer_sequence_forward.1} parent=39 // pred_region
        %s405 = smul.u32 8, %s26
        %s406 = smul.u32 2, %s25
        %p407 = scmp.lt.s32.totalorder %s405, 23
        %s408 = scalar_select %p407, %s405, 23
        %p409 = scmp.lt.s32.totalorder %s406, 1
        %s410 = scalar_select %p409, %s406, 1
        %s411 = smul.addr %s408, 2
        %s412 = sadd.s32 %s410, %s411
        %s413 = smul.addr %s412, 8
        %s414 = scalar_lea.vmem %s3, %s413
        %s415 = smul.u32 8, %s26
        %s416 = smul.u32 2, %s25
      $region52: #{rnn_layer_sequence_forward.1} parent=39 // pred_fallthru
        _
    $region40: #{rnn_layer_sequence_forward.1} parent=5 // pred_fallthru
      _
    %p417 = scmp.le.s32.totalorder 1, %s18
    %p418 = scmp.lt.s32.totalorder %s18, 4
    %p419 = pnand %p417, %p418
    %p420 = pneg %p419
    // Predicated region
    $region53: #{rnn_layer_sequence_forward.1} parent=5 // pred_check
      _
    $region54: #{rnn_layer_sequence_forward.1} parent=5 // pred_check_branch
      %422 = sbr.rel (%p419) target = $region56
    $region55: #{rnn_layer_sequence_forward.1} parent=5 // pred_region
      %s423 = ssub.s32 %s18, 1
      %s424 = smul.u32 2, %s27
      %p425 = scmp.lt.s32.totalorder %s424, 1
      %s426 = scalar_select %p425, %s424, 1
      %s427 = smul.addr %s426, 8
      %s428 = scalar_lea.vmem %s0, %s427
      %p429 = pneg %p56
      %p430 = pneg %p53
      %s431 = smul.u32 8, %s28
      %s432 = smul.u32 2, %s27
      %p433 = scmp.lt.s32.totalorder %s431, 23
      %s434 = scalar_select %p433, %s431, 23
      %p435 = scmp.lt.s32.totalorder %s432, 1
      %s436 = scalar_select %p435, %s432, 1
      %s437 = smul.addr %s434, 2
      %s438 = sadd.s32 %s436, %s437
      %s439 = smul.addr %s438, 8
      %s440 = scalar_lea.vmem %s1, %s439
      %p441 = pneg %p84
      %p442 = pneg %p81
      %s443 = smul.u32 8, %s28
      %s444 = smul.u32 2, %s27
      %p445 = scmp.lt.s32.totalorder %s443, 23
      %s446 = scalar_select %p445, %s443, 23
      %p447 = scmp.lt.s32.totalorder %s444, 1
      %s448 = scalar_select %p447, %s444, 1
      %s449 = smul.addr %s446, 2
      %s450 = sadd.s32 %s448, %s449
      %s451 = smul.addr %s450, 8
      %s452 = scalar_lea.vmem %s2, %s451
      %p453 = pneg %p112
      %p454 = pneg %p109
      %s455 = smul.u32 8, %s28
      %s456 = smul.u32 2, %s27
      %p457 = scmp.lt.s32.totalorder %s455, 23
      %s458 = scalar_select %p457, %s455, 23
      %p459 = scmp.lt.s32.totalorder %s456, 1
      %s460 = scalar_select %p459, %s456, 1
      %s461 = smul.addr %s458, 2
      %s462 = sadd.s32 %s460, %s461
      %s463 = smul.addr %s462, 8
      %s464 = scalar_lea.vmem %s3, %s463
      %p465 = pneg %p140
      %p466 = pneg %p137
      %p467 = pneg %p161
      %p468 = pneg %p158
      %p469 = pneg %p182
      %p470 = pneg %p179
      %p471 = pneg %p203
      %p472 = pneg %p200
      %p473 = pneg %p224
      %p474 = pneg %p221
      %p475 = pneg %p245
      %p476 = pneg %p242
      %p477 = pneg %p273
      %p478 = pneg %p270
      %p479 = scmp.lt.s32.totalorder %s28, 2
      %s480 = scalar_select %p479, %s28, 2
      %p481 = scmp.lt.s32.totalorder %s27, 0
      %s482 = scalar_select %p481, %s27, 0
      %s483 = sadd.s32 %s482, %s480
      %s484 = smul.addr %s483, 8
      %s485 = scalar_lea.vmem %s9, %s484
      %p486 = pneg %p301
      %p487 = pneg %p298
      %p488 = scmp.lt.s32.totalorder %s28, 2
      %s489 = scalar_select %p488, %s28, 2
      %p490 = scmp.lt.s32.totalorder %s27, 0
      %s491 = scalar_select %p490, %s27, 0
      %s492 = sadd.s32 %s491, %s489
      %s493 = smul.addr %s492, 8
      %s494 = scalar_lea.vmem %s10, %s493
      %p495 = pneg %p329
      %p496 = pneg %p326
      %s497 = smul.u32 8, %s28
      %s498 = smul.u32 2, %s27
      %p499 = scmp.lt.s32.totalorder %s497, 23
      %s500 = scalar_select %p499, %s497, 23
      %p501 = scmp.lt.s32.totalorder %s498, 1
      %s502 = scalar_select %p501, %s498, 1
      %s503 = smul.addr %s500, 2
      %s504 = sadd.s32 %s502, %s503
      %s505 = smul.addr %s504, 8
      %s506 = scalar_lea.vmem %s11, %s505
      %s507 = smul.u32 2, %s27
      %p508 = scmp.lt.s32.totalorder %s507, 1
      %s509 = scalar_select %p508, %s507, 1
      %s510 = smul.addr %s509, 8
      %s511 = scalar_lea.vmem %s0, %s510
      %s512 = smul.u32 2, %s27
      %s513 = smul.u32 8, %s28
      %s514 = smul.u32 2, %s27
      %p515 = scmp.lt.s32.totalorder %s513, 23
      %s516 = scalar_select %p515, %s513, 23
      %p517 = scmp.lt.s32.totalorder %s514, 1
      %s518 = scalar_select %p517, %s514, 1
      %s519 = smul.addr %s516, 2
      %s520 = sadd.s32 %s518, %s519
      %s521 = smul.addr %s520, 8
      %s522 = scalar_lea.vmem %s1, %s521
      %s523 = smul.u32 8, %s28
      %s524 = smul.u32 2, %s27
      %s525 = smul.u32 8, %s28
      %s526 = smul.u32 2, %s27
      %p527 = scmp.lt.s32.totalorder %s525, 23
      %s528 = scalar_select %p527, %s525, 23
      %p529 = scmp.lt.s32.totalorder %s526, 1
      %s530 = scalar_select %p529, %s526, 1
      %s531 = smul.addr %s528, 2
      %s532 = sadd.s32 %s530, %s531
      %s533 = smul.addr %s532, 8
      %s534 = scalar_lea.vmem %s2, %s533
      %s535 = smul.u32 8, %s28
      %s536 = smul.u32 2, %s27
      %s537 = smul.u32 8, %s28
      %s538 = smul.u32 2, %s27
      %p539 = scmp.lt.s32.totalorder %s537, 23
      %s540 = scalar_select %p539, %s537, 23
      %p541 = scmp.lt.s32.totalorder %s538, 1
      %s542 = scalar_select %p541, %s538, 1
      %s543 = smul.addr %s540, 2
      %s544 = sadd.s32 %s542, %s543
      %s545 = smul.addr %s544, 8
      %s546 = scalar_lea.vmem %s3, %s545
      %s547 = smul.u32 8, %s28
      %s548 = smul.u32 2, %s27
      %p549 = scmp.lt.s32.totalorder %s28, 2
      %s550 = scalar_select %p549, %s28, 2
      %p551 = scmp.lt.s32.totalorder %s27, 0
      %s552 = scalar_select %p551, %s27, 0
      %s553 = sadd.s32 %s552, %s550
      %s554 = smul.addr %s553, 8
      %s555 = scalar_lea.vmem %s9, %s554
      %p556 = scmp.lt.s32.totalorder %s28, 2
      %s557 = scalar_select %p556, %s28, 2
      %p558 = scmp.lt.s32.totalorder %s27, 0
      %s559 = scalar_select %p558, %s27, 0
      %s560 = sadd.s32 %s559, %s557
      %s561 = smul.addr %s560, 8
      %s562 = scalar_lea.vmem %s10, %s561
      %s563 = smul.u32 8, %s28
      %s564 = smul.u32 2, %s27
      %p565 = scmp.lt.s32.totalorder %s563, 23
      %s566 = scalar_select %p565, %s563, 23
      %p567 = scmp.lt.s32.totalorder %s564, 1
      %s568 = scalar_select %p567, %s564, 1
      %s569 = smul.addr %s566, 2
      %s570 = sadd.s32 %s568, %s569
      %s571 = smul.addr %s570, 8
      %s572 = scalar_lea.vmem %s11, %s571
      %s573 = smul.u32 8, %s28
      %s574 = smul.u32 2, %s27
      %p575 = scmp.eq.s32.totalorder %s28, 0
      // Predicated region
      $region57: #{rnn_layer_sequence_forward.1} parent=55 // pred_check
        %p576 = pneg %p575
      $region58: #{rnn_layer_sequence_forward.1} parent=55 // pred_check_branch
        %578 = sbr.rel (%p576) target = $region60
      $region59: #{rnn_layer_sequence_forward.1} parent=55 // pred_region
        %v579 = vld [vmem:[%s511] sm:$0xff]
        %v580 = vld [vmem:[%s511 + $0x8] sm:$0xff]
        %vm581 = vcmask 261120
        %582 = vst.msk [vmem:[#allocation2] sm:$0xff] %vm581, %v579
        %583 = vst.msk [vmem:[#allocation2 + $0x8] sm:$0xff] %vm581, %v580
      $region60: #{rnn_layer_sequence_forward.1} parent=55 // pred_fallthru
        _
      %v584 = vlaneseq
      %v585 = vand.u32 %v584, 127
      %v586 = vld [vmem:[#allocation2] sm:$0xff]
      %v587 = vld [vmem:[#allocation2 + $0x8] sm:$0xff]
      %v588 = vld [vmem:[%s522] sm:$0xff]
      %v589 = vld [vmem:[%s522 + $0x8] sm:$0xff]
      %v590 = vld [vmem:[%s534] sm:$0xff]
      %v591 = vld [vmem:[%s534 + $0x8] sm:$0xff]
      %v592 = vld [vmem:[%s546] sm:$0xff]
      %v593 = vld [vmem:[%s546 + $0x8] sm:$0xff]
      %v594 = vld [vmem:[%s4] sm:$0xff]
      %v595 = vld [vmem:[%s4 + $0x8] sm:$0xff]
      %v596 = vld [vmem:[%s4 + $0x10] sm:$0xff]
      %v597 = vld [vmem:[%s4 + $0x18] sm:$0xff]
      %v598 = vld [vmem:[%s5] sm:$0xff]
      %v599 = vld [vmem:[%s5 + $0x8] sm:$0xff]
      %vm600 = vcmask 130048
      %v602 = vsel %vm600, %v588, 0
      %v605 = vsel %vm600, %v589, 0
      %607 = vmatpush.msra.mxu0 0.0
      %608 = vmatpush.msra.mxu0 0.0
      %609 = vmatpush.msra.mxu0 0.0
      %610 = vmatpush.msra.mxu0 0.0
      %611 = vmatpush.msra.mxu0 0.0
      %612 = vmatpush.msra.mxu0 0.0
      %613 = vmatpush.msra.mxu0 0.0
      %614 = vmatpush.msra.mxu0 0.0
      %615 = vmatpush.msra.mxu0 0.0
      %616 = vmatpush.msra.mxu0 0.0
      %617 = vmatpush.msra.mxu0 0.0
      %618 = vmatpush.msra.mxu0 0.0
      %619 = vmatpush.msra.mxu0 0.0
      %620 = vmatpush.msra.mxu0 0.0
      %621 = vmatpush.msra.mxu0 %v599
      %622 = vmatpush.msra.mxu0 %v598
      %623 = vmatmul.f32.gmra.mxu0 %v602
      %v624 = vpop.f32.mrf.mxu0
      %v625 = vadd.f32 0.0, %v624
      %626 = vmatmul.f32.gmra.mxu0 %v605
      %v627 = vpop.f32.mrf.mxu0
      %v628 = vadd.f32 0.0, %v627
      %629 = vdwg.mxu0
      %vm630 = vcmask 261120
      %v632 = vsel %vm630, %v586, 0
      %v635 = vsel %vm630, %v587, 0
      %637 = vmatpush.msra.mxu0 0.0
      %638 = vmatpush.msra.mxu0 0.0
      %639 = vmatpush.msra.mxu0 0.0
      %640 = vmatpush.msra.mxu0 0.0
      %641 = vmatpush.msra.mxu0 0.0
      %642 = vmatpush.msra.mxu0 0.0
      %643 = vmatpush.msra.mxu0 0.0
      %644 = vmatpush.msra.mxu0 0.0
      %645 = vmatpush.msra.mxu0 0.0
      %646 = vmatpush.msra.mxu0 0.0
      %647 = vmatpush.msra.mxu0 0.0
      %648 = vmatpush.msra.mxu0 0.0
      %649 = vmatpush.msra.mxu0 %v597
      %650 = vmatpush.msra.mxu0 %v596
      %651 = vmatpush.msra.mxu0 %v595
      %652 = vmatpush.msra.mxu0 %v594
      %653 = vmatmul.f32.gmra.mxu0 %v632
      %v654 = vpop.f32.mrf.mxu0
      %v655 = vadd.f32 %v625, %v654
      %656 = vmatmul.f32.gmra.mxu0 %v635
      %v657 = vpop.f32.mrf.mxu0
      %v658 = vadd.f32 %v628, %v657
      %659 = vdwg.mxu0
      %v660 = vld [vmem:[%s6] sm:$0x1]
      %v662 = vperm.slane %v660, 0
      %v664 = vadd.f32 %v655, %v662
      %v665 = vadd.f32 %v658, %v662
      %v666 = vtanh.pop %v664
      %v667 = vtanh.pop %v665
      %668 = vst.msk [vmem:[%s572] sm:$0xff] %vm630, %v666
      %669 = vst.msk [vmem:[%s572 + $0x8] sm:$0xff] %vm630, %v667
      %v670 = vld [vmem:[%s7] sm:$0xff]
      %v671 = vld [vmem:[%s7 + $0x8] sm:$0xff]
      %v672 = vld [vmem:[%s7 + $0x10] sm:$0xff]
      %v673 = vld [vmem:[%s7 + $0x18] sm:$0xff]
      %v674 = vld [vmem:[%s8] sm:$0x1]
      %v676 = vperm.slane %v674, 0
      %v679 = vsel %vm630, %v666, 0
      %v682 = vsel %vm630, %v667, 0
      %684 = vmatpush.msra.mxu0 0.0
      %685 = vmatpush.msra.mxu0 0.0
      %686 = vmatpush.msra.mxu0 0.0
      %687 = vmatpush.msra.mxu0 0.0
      %688 = vmatpush.msra.mxu0 0.0
      %689 = vmatpush.msra.mxu0 0.0
      %690 = vmatpush.msra.mxu0 0.0
      %691 = vmatpush.msra.mxu0 0.0
      %692 = vmatpush.msra.mxu0 0.0
      %693 = vmatpush.msra.mxu0 0.0
      %694 = vmatpush.msra.mxu0 0.0
      %695 = vmatpush.msra.mxu0 0.0
      %696 = vmatpush.msra.mxu0 %v673
      %697 = vmatpush.msra.mxu0 %v672
      %698 = vmatpush.msra.mxu0 %v671
      %699 = vmatpush.msra.mxu0 %v670
      %700 = vmatmul.f32.gmra.mxu0 %v679
      %v701 = vpop.f32.mrf.mxu0
      %v702 = vadd.f32 %v676, %v701
      %703 = vmatmul.f32.gmra.mxu0 %v682
      %v704 = vpop.f32.mrf.mxu0
      %v705 = vadd.f32 %v676, %v704
      %706 = vdwg.mxu0
      %v707 = vxor.u32 %v702, 2147483648
      %v708 = vxor.u32 %v705, 2147483648
      %v709 = vmul.f32 %v707, 1.442695
      %v710 = vpow.pop %v709
      %v711 = vmul.f32 %v708, 1.442695
      %v712 = vpow.pop %v711
      %v713 = vadd.f32 %v710, 1.0
      %v714 = vadd.f32 %v712, 1.0
      %v715 = vrcp.pop %v713
      %v716 = vmul.f32 %v713, %v715
      %v717 = vsub.f32 1.0, %v716
      %v718 = vmul.f32 %v715, %v717
      %v719 = vadd.f32 %v715, %v718
      %vm720 = vweird.f32 %v713
      %vm721 = vweird.f32 %v715
      %vm722 = vmor %vm720, %vm721
      %v723 = vsel %vm722, %v715, %v719
      %v724 = vand.u32 2147483647, %v713
      %vm725 = vcmp.eq.f32.partialorder %v724, 8.507059e+37
      %v726 = vand.u32 %v713, 2147483648
      %v727 = vor.u32 1.1754944e-38, %v726
      %v728 = vsel %vm725, %v727, %v723
      %v729 = vmul.f32 1.0, %v728
      %v730 = vrcp.pop %v714
      %v731 = vmul.f32 %v714, %v730
      %v732 = vsub.f32 1.0, %v731
      %v733 = vmul.f32 %v730, %v732
      %v734 = vadd.f32 %v730, %v733
      %vm735 = vweird.f32 %v714
      %vm736 = vweird.f32 %v730
      %vm737 = vmor %vm735, %vm736
      %v738 = vsel %vm737, %v730, %v734
      %v739 = vand.u32 2147483647, %v714
      %vm740 = vcmp.eq.f32.partialorder %v739, 8.507059e+37
      %v741 = vand.u32 %v714, 2147483648
      %v742 = vor.u32 1.1754944e-38, %v741
      %v743 = vsel %vm740, %v742, %v738
      %v744 = vmul.f32 1.0, %v743
      %v745 = vmul.f32 %v729, %v590
      %v746 = vmul.f32 %v744, %v591
      %vm747 = vcmask 195584
      %v748 = vsel %vm747, %v745, 0.0
      %749 = vadd.xlane.f32.xlu0 %v748
      %v750 = vpop.xlane.xlu0 %749
      %v751 = vsel %vm747, %v746, 0.0
      %752 = vadd.xlane.f32.xlu0 %v751
      %v753 = vpop.xlane.xlu0 %752
      %v754 = vlog2.pop %v750
      %v755 = vmul.f32 %v754, 0.6931472
      %v756 = vlog2.pop %v753
      %v757 = vmul.f32 %v756, 0.6931472
      %v758 = vmax.f32 %v755, -100.0
      %v759 = vmax.f32 %v757, -100.0
      %v760 = vsub.f32 1.0, %v750
      %v761 = vsub.f32 1.0, %v753
      %v762 = vlog2.pop %v760
      %v763 = vmul.f32 %v762, 0.6931472
      %v764 = vlog2.pop %v761
      %v765 = vmul.f32 %v764, 0.6931472
      %v766 = vmax.f32 %v763, -100.0
      %v767 = vmax.f32 %v765, -100.0
      %v768 = vmul.f32 %v592, %v758
      %v769 = vmul.f32 %v593, %v759
      %v770 = vsub.f32 1.0, %v592
      %v771 = vsub.f32 1.0, %v593
      %v772 = vmul.f32 %v770, %v766
      %v773 = vmul.f32 %v771, %v767
      %v774 = vadd.f32 %v768, %v772
      %v775 = vadd.f32 %v769, %v773
      %v776 = vsub.f32 0.0, %v774
      %v777 = vsub.f32 0.0, %v775
      %vm778 = vcmp.eq.s32.totalorder %v585, 0
      %v779 = vsel %vm778, %v750, 0.0
      %v780 = vsel %vm778, %v753, 0.0
      %782 = vset.pattern.permute.xlu0 0
      %783 = vperm.xlu0 %782, %v776
      %v784 = vpop.permute.xlu0 %783
      %787 = vset.pattern.permute.xlu0 0
      %788 = vperm.xlu0 %787, %v777
      %v789 = vpop.permute.xlu0 %788
      %v791 = vsel %vm778, %v784, 0.0
      %v792 = vsel %vm778, %v789, 0.0
      %s793 = scalar_lea.vmem %s522, 16
      %v794 = vld [vmem:[%s793] sm:$0xff]
      %v795 = vld [vmem:[%s793 + $0x8] sm:$0xff]
      %s796 = scalar_lea.vmem %s534, 16
      %v797 = vld [vmem:[%s796] sm:$0xff]
      %v798 = vld [vmem:[%s796 + $0x8] sm:$0xff]
      %s799 = scalar_lea.vmem %s546, 16
      %v800 = vld [vmem:[%s799] sm:$0xff]
      %v801 = vld [vmem:[%s799 + $0x8] sm:$0xff]
      %v802 = vld [vmem:[%s4] sm:$0xff]
      %v803 = vld [vmem:[%s4 + $0x8] sm:$0xff]
      %v804 = vld [vmem:[%s4 + $0x10] sm:$0xff]
      %v805 = vld [vmem:[%s4 + $0x18] sm:$0xff]
      %v806 = vld [vmem:[%s5] sm:$0xff]
      %v807 = vld [vmem:[%s5 + $0x8] sm:$0xff]
      %v809 = vsel %vm600, %v794, 0
      %v812 = vsel %vm600, %v795, 0
      %814 = vmatpush.msra.mxu0 0.0
      %815 = vmatpush.msra.mxu0 0.0
      %816 = vmatpush.msra.mxu0 0.0
      %817 = vmatpush.msra.mxu0 0.0
      %818 = vmatpush.msra.mxu0 0.0
      %819 = vmatpush.msra.mxu0 0.0
      %820 = vmatpush.msra.mxu0 0.0
      %821 = vmatpush.msra.mxu0 0.0
      %822 = vmatpush.msra.mxu0 0.0
      %823 = vmatpush.msra.mxu0 0.0
      %824 = vmatpush.msra.mxu0 0.0
      %825 = vmatpush.msra.mxu0 0.0
      %826 = vmatpush.msra.mxu0 0.0
      %827 = vmatpush.msra.mxu0 0.0
      %828 = vmatpush.msra.mxu0 %v807
      %829 = vmatpush.msra.mxu0 %v806
      %830 = vmatmul.f32.gmra.mxu0 %v809
      %v831 = vpop.f32.mrf.mxu0
      %v832 = vadd.f32 0.0, %v831
      %833 = vmatmul.f32.gmra.mxu0 %v812
      %v834 = vpop.f32.mrf.mxu0
      %v835 = vadd.f32 0.0, %v834
      %836 = vdwg.mxu0
      %837 = vmatpush.msra.mxu0 0.0
      %838 = vmatpush.msra.mxu0 0.0
      %839 = vmatpush.msra.mxu0 0.0
      %840 = vmatpush.msra.mxu0 0.0
      %841 = vmatpush.msra.mxu0 0.0
      %842 = vmatpush.msra.mxu0 0.0
      %843 = vmatpush.msra.mxu0 0.0
      %844 = vmatpush.msra.mxu0 0.0
      %845 = vmatpush.msra.mxu0 0.0
      %846 = vmatpush.msra.mxu0 0.0
      %847 = vmatpush.msra.mxu0 0.0
      %848 = vmatpush.msra.mxu0 0.0
      %849 = vmatpush.msra.mxu0 %v805
      %850 = vmatpush.msra.mxu0 %v804
      %851 = vmatpush.msra.mxu0 %v803
      %852 = vmatpush.msra.mxu0 %v802
      %853 = vmatmul.f32.gmra.mxu0 %v679
      %v854 = vpop.f32.mrf.mxu0
      %v855 = vadd.f32 %v832, %v854
      %856 = vmatmul.f32.gmra.mxu0 %v682
      %v857 = vpop.f32.mrf.mxu0
      %v858 = vadd.f32 %v835, %v857
      %859 = vdwg.mxu0
      %v860 = vld [vmem:[%s6] sm:$0x1]
      %v862 = vperm.slane %v860, 0
      %v864 = vadd.f32 %v855, %v862
      %v865 = vadd.f32 %v858, %v862
      %v866 = vtanh.pop %v864
      %v867 = vtanh.pop %v865
      %s868 = scalar_lea.vmem %s572, 16
      %869 = vst.msk [vmem:[%s868] sm:$0xff] %vm630, %v866
      %870 = vst.msk [vmem:[%s868 + $0x8] sm:$0xff] %vm630, %v867
      %v871 = vld [vmem:[%s7] sm:$0xff]
      %v872 = vld [vmem:[%s7 + $0x8] sm:$0xff]
      %v873 = vld [vmem:[%s7 + $0x10] sm:$0xff]
      %v874 = vld [vmem:[%s7 + $0x18] sm:$0xff]
      %v875 = vld [vmem:[%s8] sm:$0x1]
      %v877 = vperm.slane %v875, 0
      %v880 = vsel %vm630, %v866, 0
      %v883 = vsel %vm630, %v867, 0
      %885 = vmatpush.msra.mxu0 0.0
      %886 = vmatpush.msra.mxu0 0.0
      %887 = vmatpush.msra.mxu0 0.0
      %888 = vmatpush.msra.mxu0 0.0
      %889 = vmatpush.msra.mxu0 0.0
      %890 = vmatpush.msra.mxu0 0.0
      %891 = vmatpush.msra.mxu0 0.0
      %892 = vmatpush.msra.mxu0 0.0
      %893 = vmatpush.msra.mxu0 0.0
      %894 = vmatpush.msra.mxu0 0.0
      %895 = vmatpush.msra.mxu0 0.0
      %896 = vmatpush.msra.mxu0 0.0
      %897 = vmatpush.msra.mxu0 %v874
      %898 = vmatpush.msra.mxu0 %v873
      %899 = vmatpush.msra.mxu0 %v872
      %900 = vmatpush.msra.mxu0 %v871
      %901 = vmatmul.f32.gmra.mxu0 %v880
      %v902 = vpop.f32.mrf.mxu0
      %v903 = vadd.f32 %v877, %v902
      %904 = vmatmul.f32.gmra.mxu0 %v883
      %v905 = vpop.f32.mrf.mxu0
      %v906 = vadd.f32 %v877, %v905
      %907 = vdwg.mxu0
      %v908 = vxor.u32 %v903, 2147483648
      %v909 = vxor.u32 %v906, 2147483648
      %v910 = vmul.f32 %v908, 1.442695
      %v911 = vpow.pop %v910
      %v912 = vmul.f32 %v909, 1.442695
      %v913 = vpow.pop %v912
      %v914 = vadd.f32 %v911, 1.0
      %v915 = vadd.f32 %v913, 1.0
      %v916 = vrcp.pop %v914
      %v917 = vmul.f32 %v914, %v916
      %v918 = vsub.f32 1.0, %v917
      %v919 = vmul.f32 %v916, %v918
      %v920 = vadd.f32 %v916, %v919
      %vm921 = vweird.f32 %v914
      %vm922 = vweird.f32 %v916
      %vm923 = vmor %vm921, %vm922
      %v924 = vsel %vm923, %v916, %v920
      %v925 = vand.u32 2147483647, %v914
      %vm926 = vcmp.eq.f32.partialorder %v925, 8.507059e+37
      %v927 = vand.u32 %v914, 2147483648
      %v928 = vor.u32 1.1754944e-38, %v927
      %v929 = vsel %vm926, %v928, %v924
      %v930 = vmul.f32 1.0, %v929
      %v931 = vrcp.pop %v915
      %v932 = vmul.f32 %v915, %v931
      %v933 = vsub.f32 1.0, %v932
      %v934 = vmul.f32 %v931, %v933
      %v935 = vadd.f32 %v931, %v934
      %vm936 = vweird.f32 %v915
      %vm937 = vweird.f32 %v931
      %vm938 = vmor %vm936, %vm937
      %v939 = vsel %vm938, %v931, %v935
      %v940 = vand.u32 2147483647, %v915
      %vm941 = vcmp.eq.f32.partialorder %v940, 8.507059e+37
      %v942 = vand.u32 %v915, 2147483648
      %v943 = vor.u32 1.1754944e-38, %v942
      %v944 = vsel %vm941, %v943, %v939
      %v945 = vmul.f32 1.0, %v944
      %v946 = vmul.f32 %v930, %v797
      %v947 = vmul.f32 %v945, %v798
      %v948 = vsel %vm747, %v946, 0.0
      %949 = vadd.xlane.f32.xlu0 %v948
      %v950 = vpop.xlane.xlu0 %949
      %v951 = vsel %vm747, %v947, 0.0
      %952 = vadd.xlane.f32.xlu0 %v951
      %v953 = vpop.xlane.xlu0 %952
      %v954 = vlog2.pop %v950
      %v955 = vmul.f32 %v954, 0.6931472
      %v956 = vlog2.pop %v953
      %v957 = vmul.f32 %v956, 0.6931472
      %v958 = vmax.f32 %v955, -100.0
      %v959 = vmax.f32 %v957, -100.0
      %v960 = vsub.f32 1.0, %v950
      %v961 = vsub.f32 1.0, %v953
      %v962 = vlog2.pop %v960
      %v963 = vmul.f32 %v962, 0.6931472
      %v964 = vlog2.pop %v961
      %v965 = vmul.f32 %v964, 0.6931472
      %v966 = vmax.f32 %v963, -100.0
      %v967 = vmax.f32 %v965, -100.0
      %v968 = vmul.f32 %v800, %v958
      %v969 = vmul.f32 %v801, %v959
      %v970 = vsub.f32 1.0, %v800
      %v971 = vsub.f32 1.0, %v801
      %v972 = vmul.f32 %v970, %v966
      %v973 = vmul.f32 %v971, %v967
      %v974 = vadd.f32 %v968, %v972
      %v975 = vadd.f32 %v969, %v973
      %v976 = vsub.f32 0.0, %v974
      %v977 = vsub.f32 0.0, %v975
      %vm978 = vcmp.eq.s32.totalorder %v585, 1
      %v979 = vsel %vm978, %v950, %v779
      %v980 = vsel %vm978, %v953, %v780
      %982 = vset.pattern.permute.xlu0 0
      %983 = vperm.xlu0 %982, %v976
      %v984 = vpop.permute.xlu0 %983
      %987 = vset.pattern.permute.xlu0 0
      %988 = vperm.xlu0 %987, %v977
      %v989 = vpop.permute.xlu0 %988
      %v991 = vsel %vm978, %v984, %v791
      %v992 = vsel %vm978, %v989, %v792
      %s993 = scalar_lea.vmem %s522, 32
      %v994 = vld [vmem:[%s993] sm:$0xff]
      %v995 = vld [vmem:[%s993 + $0x8] sm:$0xff]
      %s996 = scalar_lea.vmem %s534, 32
      %v997 = vld [vmem:[%s996] sm:$0xff]
      %v998 = vld [vmem:[%s996 + $0x8] sm:$0xff]
      %s999 = scalar_lea.vmem %s546, 32
      %v1000 = vld [vmem:[%s999] sm:$0xff]
      %v1001 = vld [vmem:[%s999 + $0x8] sm:$0xff]
      %v1002 = vld [vmem:[%s4] sm:$0xff]
      %v1003 = vld [vmem:[%s4 + $0x8] sm:$0xff]
      %v1004 = vld [vmem:[%s4 + $0x10] sm:$0xff]
      %v1005 = vld [vmem:[%s4 + $0x18] sm:$0xff]
      %v1006 = vld [vmem:[%s5] sm:$0xff]
      %v1007 = vld [vmem:[%s5 + $0x8] sm:$0xff]
      %v1009 = vsel %vm600, %v994, 0
      %v1012 = vsel %vm600, %v995, 0
      %1014 = vmatpush.msra.mxu0 0.0
      %1015 = vmatpush.msra.mxu0 0.0
      %1016 = vmatpush.msra.mxu0 0.0
      %1017 = vmatpush.msra.mxu0 0.0
      %1018 = vmatpush.msra.mxu0 0.0
      %1019 = vmatpush.msra.mxu0 0.0
      %1020 = vmatpush.msra.mxu0 0.0
      %1021 = vmatpush.msra.mxu0 0.0
      %1022 = vmatpush.msra.mxu0 0.0
      %1023 = vmatpush.msra.mxu0 0.0
      %1024 = vmatpush.msra.mxu0 0.0
      %1025 = vmatpush.msra.mxu0 0.0
      %1026 = vmatpush.msra.mxu0 0.0
      %1027 = vmatpush.msra.mxu0 0.0
      %1028 = vmatpush.msra.mxu0 %v1007
      %1029 = vmatpush.msra.mxu0 %v1006
      %1030 = vmatmul.f32.gmra.mxu0 %v1009
      %v1031 = vpop.f32.mrf.mxu0
      %v1032 = vadd.f32 0.0, %v1031
      %1033 = vmatmul.f32.gmra.mxu0 %v1012
      %v1034 = vpop.f32.mrf.mxu0
      %v1035 = vadd.f32 0.0, %v1034
      %1036 = vdwg.mxu0
      %1037 = vmatpush.msra.mxu0 0.0
      %1038 = vmatpush.msra.mxu0 0.0
      %1039 = vmatpush.msra.mxu0 0.0
      %1040 = vmatpush.msra.mxu0 0.0
      %1041 = vmatpush.msra.mxu0 0.0
      %1042 = vmatpush.msra.mxu0 0.0
      %1043 = vmatpush.msra.mxu0 0.0
      %1044 = vmatpush.msra.mxu0 0.0
      %1045 = vmatpush.msra.mxu0 0.0
      %1046 = vmatpush.msra.mxu0 0.0
      %1047 = vmatpush.msra.mxu0 0.0
      %1048 = vmatpush.msra.mxu0 0.0
      %1049 = vmatpush.msra.mxu0 %v1005
      %1050 = vmatpush.msra.mxu0 %v1004
      %1051 = vmatpush.msra.mxu0 %v1003
      %1052 = vmatpush.msra.mxu0 %v1002
      %1053 = vmatmul.f32.gmra.mxu0 %v880
      %v1054 = vpop.f32.mrf.mxu0
      %v1055 = vadd.f32 %v1032, %v1054
      %1056 = vmatmul.f32.gmra.mxu0 %v883
      %v1057 = vpop.f32.mrf.mxu0
      %v1058 = vadd.f32 %v1035, %v1057
      %1059 = vdwg.mxu0
      %v1060 = vld [vmem:[%s6] sm:$0x1]
      %v1062 = vperm.slane %v1060, 0
      %v1064 = vadd.f32 %v1055, %v1062
      %v1065 = vadd.f32 %v1058, %v1062
      %v1066 = vtanh.pop %v1064
      %v1067 = vtanh.pop %v1065
      %s1068 = scalar_lea.vmem %s572, 32
      %1069 = vst.msk [vmem:[%s1068] sm:$0xff] %vm630, %v1066
      %1070 = vst.msk [vmem:[%s1068 + $0x8] sm:$0xff] %vm630, %v1067
      %v1071 = vld [vmem:[%s7] sm:$0xff]
      %v1072 = vld [vmem:[%s7 + $0x8] sm:$0xff]
      %v1073 = vld [vmem:[%s7 + $0x10] sm:$0xff]
      %v1074 = vld [vmem:[%s7 + $0x18] sm:$0xff]
      %v1075 = vld [vmem:[%s8] sm:$0x1]
      %v1077 = vperm.slane %v1075, 0
      %v1080 = vsel %vm630, %v1066, 0
      %v1083 = vsel %vm630, %v1067, 0
      %1085 = vmatpush.msra.mxu0 0.0
      %1086 = vmatpush.msra.mxu0 0.0
      %1087 = vmatpush.msra.mxu0 0.0
      %1088 = vmatpush.msra.mxu0 0.0
      %1089 = vmatpush.msra.mxu0 0.0
      %1090 = vmatpush.msra.mxu0 0.0
      %1091 = vmatpush.msra.mxu0 0.0
      %1092 = vmatpush.msra.mxu0 0.0
      %1093 = vmatpush.msra.mxu0 0.0
      %1094 = vmatpush.msra.mxu0 0.0
      %1095 = vmatpush.msra.mxu0 0.0
      %1096 = vmatpush.msra.mxu0 0.0
      %1097 = vmatpush.msra.mxu0 %v1074
      %1098 = vmatpush.msra.mxu0 %v1073
      %1099 = vmatpush.msra.mxu0 %v1072
      %1100 = vmatpush.msra.mxu0 %v1071
      %1101 = vmatmul.f32.gmra.mxu0 %v1080
      %v1102 = vpop.f32.mrf.mxu0
      %v1103 = vadd.f32 %v1077, %v1102
      %1104 = vmatmul.f32.gmra.mxu0 %v1083
      %v1105 = vpop.f32.mrf.mxu0
      %v1106 = vadd.f32 %v1077, %v1105
      %1107 = vdwg.mxu0
      %v1108 = vxor.u32 %v1103, 2147483648
      %v1109 = vxor.u32 %v1106, 2147483648
      %v1110 = vmul.f32 %v1108, 1.442695
      %v1111 = vpow.pop %v1110
      %v1112 = vmul.f32 %v1109, 1.442695
      %v1113 = vpow.pop %v1112
      %v1114 = vadd.f32 %v1111, 1.0
      %v1115 = vadd.f32 %v1113, 1.0
      %v1116 = vrcp.pop %v1114
      %v1117 = vmul.f32 %v1114, %v1116
      %v1118 = vsub.f32 1.0, %v1117
      %v1119 = vmul.f32 %v1116, %v1118
      %v1120 = vadd.f32 %v1116, %v1119
      %vm1121 = vweird.f32 %v1114
      %vm1122 = vweird.f32 %v1116
      %vm1123 = vmor %vm1121, %vm1122
      %v1124 = vsel %vm1123, %v1116, %v1120
      %v1125 = vand.u32 2147483647, %v1114
      %vm1126 = vcmp.eq.f32.partialorder %v1125, 8.507059e+37
      %v1127 = vand.u32 %v1114, 2147483648
      %v1128 = vor.u32 1.1754944e-38, %v1127
      %v1129 = vsel %vm1126, %v1128, %v1124
      %v1130 = vmul.f32 1.0, %v1129
      %v1131 = vrcp.pop %v1115
      %v1132 = vmul.f32 %v1115, %v1131
      %v1133 = vsub.f32 1.0, %v1132
      %v1134 = vmul.f32 %v1131, %v1133
      %v1135 = vadd.f32 %v1131, %v1134
      %vm1136 = vweird.f32 %v1115
      %vm1137 = vweird.f32 %v1131
      %vm1138 = vmor %vm1136, %vm1137
      %v1139 = vsel %vm1138, %v1131, %v1135
      %v1140 = vand.u32 2147483647, %v1115
      %vm1141 = vcmp.eq.f32.partialorder %v1140, 8.507059e+37
      %v1142 = vand.u32 %v1115, 2147483648
      %v1143 = vor.u32 1.1754944e-38, %v1142
      %v1144 = vsel %vm1141, %v1143, %v1139
      %v1145 = vmul.f32 1.0, %v1144
      %v1146 = vmul.f32 %v1130, %v997
      %v1147 = vmul.f32 %v1145, %v998
      %v1148 = vsel %vm747, %v1146, 0.0
      %1149 = vadd.xlane.f32.xlu0 %v1148
      %v1150 = vpop.xlane.xlu0 %1149
      %v1151 = vsel %vm747, %v1147, 0.0
      %1152 = vadd.xlane.f32.xlu0 %v1151
      %v1153 = vpop.xlane.xlu0 %1152
      %v1154 = vlog2.pop %v1150
      %v1155 = vmul.f32 %v1154, 0.6931472
      %v1156 = vlog2.pop %v1153
      %v1157 = vmul.f32 %v1156, 0.6931472
      %v1158 = vmax.f32 %v1155, -100.0
      %v1159 = vmax.f32 %v1157, -100.0
      %v1160 = vsub.f32 1.0, %v1150
      %v1161 = vsub.f32 1.0, %v1153
      %v1162 = vlog2.pop %v1160
      %v1163 = vmul.f32 %v1162, 0.6931472
      %v1164 = vlog2.pop %v1161
      %v1165 = vmul.f32 %v1164, 0.6931472
      %v1166 = vmax.f32 %v1163, -100.0
      %v1167 = vmax.f32 %v1165, -100.0
      %v1168 = vmul.f32 %v1000, %v1158
      %v1169 = vmul.f32 %v1001, %v1159
      %v1170 = vsub.f32 1.0, %v1000
      %v1171 = vsub.f32 1.0, %v1001
      %v1172 = vmul.f32 %v1170, %v1166
      %v1173 = vmul.f32 %v1171, %v1167
      %v1174 = vadd.f32 %v1168, %v1172
      %v1175 = vadd.f32 %v1169, %v1173
      %v1176 = vsub.f32 0.0, %v1174
      %v1177 = vsub.f32 0.0, %v1175
      %vm1178 = vcmp.eq.s32.totalorder %v585, 2
      %v1179 = vsel %vm1178, %v1150, %v979
      %v1180 = vsel %vm1178, %v1153, %v980
      %1182 = vset.pattern.permute.xlu0 0
      %1183 = vperm.xlu0 %1182, %v1176
      %v1184 = vpop.permute.xlu0 %1183
      %1187 = vset.pattern.permute.xlu0 0
      %1188 = vperm.xlu0 %1187, %v1177
      %v1189 = vpop.permute.xlu0 %1188
      %v1191 = vsel %vm1178, %v1184, %v991
      %v1192 = vsel %vm1178, %v1189, %v992
      %s1193 = scalar_lea.vmem %s522, 48
      %v1194 = vld [vmem:[%s1193] sm:$0xff]
      %v1195 = vld [vmem:[%s1193 + $0x8] sm:$0xff]
      %s1196 = scalar_lea.vmem %s534, 48
      %v1197 = vld [vmem:[%s1196] sm:$0xff]
      %v1198 = vld [vmem:[%s1196 + $0x8] sm:$0xff]
      %s1199 = scalar_lea.vmem %s546, 48
      %v1200 = vld [vmem:[%s1199] sm:$0xff]
      %v1201 = vld [vmem:[%s1199 + $0x8] sm:$0xff]
      %v1202 = vld [vmem:[%s4] sm:$0xff]
      %v1203 = vld [vmem:[%s4 + $0x8] sm:$0xff]
      %v1204 = vld [vmem:[%s4 + $0x10] sm:$0xff]
      %v1205 = vld [vmem:[%s4 + $0x18] sm:$0xff]
      %v1206 = vld [vmem:[%s5] sm:$0xff]
      %v1207 = vld [vmem:[%s5 + $0x8] sm:$0xff]
      %v1209 = vsel %vm600, %v1194, 0
      %v1212 = vsel %vm600, %v1195, 0
      %1214 = vmatpush.msra.mxu0 0.0
      %1215 = vmatpush.msra.mxu0 0.0
      %1216 = vmatpush.msra.mxu0 0.0
      %1217 = vmatpush.msra.mxu0 0.0
      %1218 = vmatpush.msra.mxu0 0.0
      %1219 = vmatpush.msra.mxu0 0.0
      %1220 = vmatpush.msra.mxu0 0.0
      %1221 = vmatpush.msra.mxu0 0.0
      %1222 = vmatpush.msra.mxu0 0.0
      %1223 = vmatpush.msra.mxu0 0.0
      %1224 = vmatpush.msra.mxu0 0.0
      %1225 = vmatpush.msra.mxu0 0.0
      %1226 = vmatpush.msra.mxu0 0.0
      %1227 = vmatpush.msra.mxu0 0.0
      %1228 = vmatpush.msra.mxu0 %v1207
      %1229 = vmatpush.msra.mxu0 %v1206
      %1230 = vmatmul.f32.gmra.mxu0 %v1209
      %v1231 = vpop.f32.mrf.mxu0
      %v1232 = vadd.f32 0.0, %v1231
      %1233 = vmatmul.f32.gmra.mxu0 %v1212
      %v1234 = vpop.f32.mrf.mxu0
      %v1235 = vadd.f32 0.0, %v1234
      %1236 = vdwg.mxu0
      %1237 = vmatpush.msra.mxu0 0.0
      %1238 = vmatpush.msra.mxu0 0.0
      %1239 = vmatpush.msra.mxu0 0.0
      %1240 = vmatpush.msra.mxu0 0.0
      %1241 = vmatpush.msra.mxu0 0.0
      %1242 = vmatpush.msra.mxu0 0.0
      %1243 = vmatpush.msra.mxu0 0.0
      %1244 = vmatpush.msra.mxu0 0.0
      %1245 = vmatpush.msra.mxu0 0.0
      %1246 = vmatpush.msra.mxu0 0.0
      %1247 = vmatpush.msra.mxu0 0.0
      %1248 = vmatpush.msra.mxu0 0.0
      %1249 = vmatpush.msra.mxu0 %v1205
      %1250 = vmatpush.msra.mxu0 %v1204
      %1251 = vmatpush.msra.mxu0 %v1203
      %1252 = vmatpush.msra.mxu0 %v1202
      %1253 = vmatmul.f32.gmra.mxu0 %v1080
      %v1254 = vpop.f32.mrf.mxu0
      %v1255 = vadd.f32 %v1232, %v1254
      %1256 = vmatmul.f32.gmra.mxu0 %v1083
      %v1257 = vpop.f32.mrf.mxu0
      %v1258 = vadd.f32 %v1235, %v1257
      %1259 = vdwg.mxu0
      %v1260 = vld [vmem:[%s6] sm:$0x1]
      %v1262 = vperm.slane %v1260, 0
      %v1264 = vadd.f32 %v1255, %v1262
      %v1265 = vadd.f32 %v1258, %v1262
      %v1266 = vtanh.pop %v1264
      %v1267 = vtanh.pop %v1265
      %s1268 = scalar_lea.vmem %s572, 48
      %1269 = vst.msk [vmem:[%s1268] sm:$0xff] %vm630, %v1266
      %1270 = vst.msk [vmem:[%s1268 + $0x8] sm:$0xff] %vm630, %v1267
      %v1271 = vld [vmem:[%s7] sm:$0xff]
      %v1272 = vld [vmem:[%s7 + $0x8] sm:$0xff]
      %v1273 = vld [vmem:[%s7 + $0x10] sm:$0xff]
      %v1274 = vld [vmem:[%s7 + $0x18] sm:$0xff]
      %v1275 = vld [vmem:[%s8] sm:$0x1]
      %v1277 = vperm.slane %v1275, 0
      %v1280 = vsel %vm630, %v1266, 0
      %v1283 = vsel %vm630, %v1267, 0
      %1285 = vmatpush.msra.mxu0 0.0
      %1286 = vmatpush.msra.mxu0 0.0
      %1287 = vmatpush.msra.mxu0 0.0
      %1288 = vmatpush.msra.mxu0 0.0
      %1289 = vmatpush.msra.mxu0 0.0
      %1290 = vmatpush.msra.mxu0 0.0
      %1291 = vmatpush.msra.mxu0 0.0
      %1292 = vmatpush.msra.mxu0 0.0
      %1293 = vmatpush.msra.mxu0 0.0
      %1294 = vmatpush.msra.mxu0 0.0
      %1295 = vmatpush.msra.mxu0 0.0
      %1296 = vmatpush.msra.mxu0 0.0
      %1297 = vmatpush.msra.mxu0 %v1274
      %1298 = vmatpush.msra.mxu0 %v1273
      %1299 = vmatpush.msra.mxu0 %v1272
      %1300 = vmatpush.msra.mxu0 %v1271
      %1301 = vmatmul.f32.gmra.mxu0 %v1280
      %v1302 = vpop.f32.mrf.mxu0
      %v1303 = vadd.f32 %v1277, %v1302
      %1304 = vmatmul.f32.gmra.mxu0 %v1283
      %v1305 = vpop.f32.mrf.mxu0
      %v1306 = vadd.f32 %v1277, %v1305
      %1307 = vdwg.mxu0
      %v1308 = vxor.u32 %v1303, 2147483648
      %v1309 = vxor.u32 %v1306, 2147483648
      %v1310 = vmul.f32 %v1308, 1.442695
      %v1311 = vpow.pop %v1310
      %v1312 = vmul.f32 %v1309, 1.442695
      %v1313 = vpow.pop %v1312
      %v1314 = vadd.f32 %v1311, 1.0
      %v1315 = vadd.f32 %v1313, 1.0
      %v1316 = vrcp.pop %v1314
      %v1317 = vmul.f32 %v1314, %v1316
      %v1318 = vsub.f32 1.0, %v1317
      %v1319 = vmul.f32 %v1316, %v1318
      %v1320 = vadd.f32 %v1316, %v1319
      %vm1321 = vweird.f32 %v1314
      %vm1322 = vweird.f32 %v1316
      %vm1323 = vmor %vm1321, %vm1322
      %v1324 = vsel %vm1323, %v1316, %v1320
      %v1325 = vand.u32 2147483647, %v1314
      %vm1326 = vcmp.eq.f32.partialorder %v1325, 8.507059e+37
      %v1327 = vand.u32 %v1314, 2147483648
      %v1328 = vor.u32 1.1754944e-38, %v1327
      %v1329 = vsel %vm1326, %v1328, %v1324
      %v1330 = vmul.f32 1.0, %v1329
      %v1331 = vrcp.pop %v1315
      %v1332 = vmul.f32 %v1315, %v1331
      %v1333 = vsub.f32 1.0, %v1332
      %v1334 = vmul.f32 %v1331, %v1333
      %v1335 = vadd.f32 %v1331, %v1334
      %vm1336 = vweird.f32 %v1315
      %vm1337 = vweird.f32 %v1331
      %vm1338 = vmor %vm1336, %vm1337
      %v1339 = vsel %vm1338, %v1331, %v1335
      %v1340 = vand.u32 2147483647, %v1315
      %vm1341 = vcmp.eq.f32.partialorder %v1340, 8.507059e+37
      %v1342 = vand.u32 %v1315, 2147483648
      %v1343 = vor.u32 1.1754944e-38, %v1342
      %v1344 = vsel %vm1341, %v1343, %v1339
      %v1345 = vmul.f32 1.0, %v1344
      %v1346 = vmul.f32 %v1330, %v1197
      %v1347 = vmul.f32 %v1345, %v1198
      %v1348 = vsel %vm747, %v1346, 0.0
      %1349 = vadd.xlane.f32.xlu0 %v1348
      %v1350 = vpop.xlane.xlu0 %1349
      %v1351 = vsel %vm747, %v1347, 0.0
      %1352 = vadd.xlane.f32.xlu0 %v1351
      %v1353 = vpop.xlane.xlu0 %1352
      %v1354 = vlog2.pop %v1350
      %v1355 = vmul.f32 %v1354, 0.6931472
      %v1356 = vlog2.pop %v1353
      %v1357 = vmul.f32 %v1356, 0.6931472
      %v1358 = vmax.f32 %v1355, -100.0
      %v1359 = vmax.f32 %v1357, -100.0
      %v1360 = vsub.f32 1.0, %v1350
      %v1361 = vsub.f32 1.0, %v1353
      %v1362 = vlog2.pop %v1360
      %v1363 = vmul.f32 %v1362, 0.6931472
      %v1364 = vlog2.pop %v1361
      %v1365 = vmul.f32 %v1364, 0.6931472
      %v1366 = vmax.f32 %v1363, -100.0
      %v1367 = vmax.f32 %v1365, -100.0
      %v1368 = vmul.f32 %v1200, %v1358
      %v1369 = vmul.f32 %v1201, %v1359
      %v1370 = vsub.f32 1.0, %v1200
      %v1371 = vsub.f32 1.0, %v1201
      %v1372 = vmul.f32 %v1370, %v1366
      %v1373 = vmul.f32 %v1371, %v1367
      %v1374 = vadd.f32 %v1368, %v1372
      %v1375 = vadd.f32 %v1369, %v1373
      %v1376 = vsub.f32 0.0, %v1374
      %v1377 = vsub.f32 0.0, %v1375
      %vm1378 = vcmp.eq.s32.totalorder %v585, 3
      %v1379 = vsel %vm1378, %v1350, %v1179
      %v1380 = vsel %vm1378, %v1353, %v1180
      %1382 = vset.pattern.permute.xlu0 0
      %1383 = vperm.xlu0 %1382, %v1376
      %v1384 = vpop.permute.xlu0 %1383
      %1387 = vset.pattern.permute.xlu0 0
      %1388 = vperm.xlu0 %1387, %v1377
      %v1389 = vpop.permute.xlu0 %1388
      %v1391 = vsel %vm1378, %v1384, %v1191
      %v1392 = vsel %vm1378, %v1389, %v1192
      %s1393 = scalar_lea.vmem %s522, 64
      %v1394 = vld [vmem:[%s1393] sm:$0xff]
      %v1395 = vld [vmem:[%s1393 + $0x8] sm:$0xff]
      %s1396 = scalar_lea.vmem %s534, 64
      %v1397 = vld [vmem:[%s1396] sm:$0xff]
      %v1398 = vld [vmem:[%s1396 + $0x8] sm:$0xff]
      %s1399 = scalar_lea.vmem %s546, 64
      %v1400 = vld [vmem:[%s1399] sm:$0xff]
      %v1401 = vld [vmem:[%s1399 + $0x8] sm:$0xff]
      %v1402 = vld [vmem:[%s4] sm:$0xff]
      %v1403 = vld [vmem:[%s4 + $0x8] sm:$0xff]
      %v1404 = vld [vmem:[%s4 + $0x10] sm:$0xff]
      %v1405 = vld [vmem:[%s4 + $0x18] sm:$0xff]
      %v1406 = vld [vmem:[%s5] sm:$0xff]
      %v1407 = vld [vmem:[%s5 + $0x8] sm:$0xff]
      %v1409 = vsel %vm600, %v1394, 0
      %v1412 = vsel %vm600, %v1395, 0
      %1414 = vmatpush.msra.mxu0 0.0
      %1415 = vmatpush.msra.mxu0 0.0
      %1416 = vmatpush.msra.mxu0 0.0
      %1417 = vmatpush.msra.mxu0 0.0
      %1418 = vmatpush.msra.mxu0 0.0
      %1419 = vmatpush.msra.mxu0 0.0
      %1420 = vmatpush.msra.mxu0 0.0
      %1421 = vmatpush.msra.mxu0 0.0
      %1422 = vmatpush.msra.mxu0 0.0
      %1423 = vmatpush.msra.mxu0 0.0
      %1424 = vmatpush.msra.mxu0 0.0
      %1425 = vmatpush.msra.mxu0 0.0
      %1426 = vmatpush.msra.mxu0 0.0
      %1427 = vmatpush.msra.mxu0 0.0
      %1428 = vmatpush.msra.mxu0 %v1407
      %1429 = vmatpush.msra.mxu0 %v1406
      %1430 = vmatmul.f32.gmra.mxu0 %v1409
      %v1431 = vpop.f32.mrf.mxu0
      %v1432 = vadd.f32 0.0, %v1431
      %1433 = vmatmul.f32.gmra.mxu0 %v1412
      %v1434 = vpop.f32.mrf.mxu0
      %v1435 = vadd.f32 0.0, %v1434
      %1436 = vdwg.mxu0
      %1437 = vmatpush.msra.mxu0 0.0
      %1438 = vmatpush.msra.mxu0 0.0
      %1439 = vmatpush.msra.mxu0 0.0
      %1440 = vmatpush.msra.mxu0 0.0
      %1441 = vmatpush.msra.mxu0 0.0
      %1442 = vmatpush.msra.mxu0 0.0
      %1443 = vmatpush.msra.mxu0 0.0
      %1444 = vmatpush.msra.mxu0 0.0
      %1445 = vmatpush.msra.mxu0 0.0
      %1446 = vmatpush.msra.mxu0 0.0
      %1447 = vmatpush.msra.mxu0 0.0
      %1448 = vmatpush.msra.mxu0 0.0
      %1449 = vmatpush.msra.mxu0 %v1405
      %1450 = vmatpush.msra.mxu0 %v1404
      %1451 = vmatpush.msra.mxu0 %v1403
      %1452 = vmatpush.msra.mxu0 %v1402
      %1453 = vmatmul.f32.gmra.mxu0 %v1280
      %v1454 = vpop.f32.mrf.mxu0
      %v1455 = vadd.f32 %v1432, %v1454
      %1456 = vmatmul.f32.gmra.mxu0 %v1283
      %v1457 = vpop.f32.mrf.mxu0
      %v1458 = vadd.f32 %v1435, %v1457
      %1459 = vdwg.mxu0
      %v1460 = vld [vmem:[%s6] sm:$0x1]
      %v1462 = vperm.slane %v1460, 0
      %v1464 = vadd.f32 %v1455, %v1462
      %v1465 = vadd.f32 %v1458, %v1462
      %v1466 = vtanh.pop %v1464
      %v1467 = vtanh.pop %v1465
      %s1468 = scalar_lea.vmem %s572, 64
      %1469 = vst.msk [vmem:[%s1468] sm:$0xff] %vm630, %v1466
      %1470 = vst.msk [vmem:[%s1468 + $0x8] sm:$0xff] %vm630, %v1467
      %v1471 = vld [vmem:[%s7] sm:$0xff]
      %v1472 = vld [vmem:[%s7 + $0x8] sm:$0xff]
      %v1473 = vld [vmem:[%s7 + $0x10] sm:$0xff]
      %v1474 = vld [vmem:[%s7 + $0x18] sm:$0xff]
      %v1475 = vld [vmem:[%s8] sm:$0x1]
      %v1477 = vperm.slane %v1475, 0
      %v1480 = vsel %vm630, %v1466, 0
      %v1483 = vsel %vm630, %v1467, 0
      %1485 = vmatpush.msra.mxu0 0.0
      %1486 = vmatpush.msra.mxu0 0.0
      %1487 = vmatpush.msra.mxu0 0.0
      %1488 = vmatpush.msra.mxu0 0.0
      %1489 = vmatpush.msra.mxu0 0.0
      %1490 = vmatpush.msra.mxu0 0.0
      %1491 = vmatpush.msra.mxu0 0.0
      %1492 = vmatpush.msra.mxu0 0.0
      %1493 = vmatpush.msra.mxu0 0.0
      %1494 = vmatpush.msra.mxu0 0.0
      %1495 = vmatpush.msra.mxu0 0.0
      %1496 = vmatpush.msra.mxu0 0.0
      %1497 = vmatpush.msra.mxu0 %v1474
      %1498 = vmatpush.msra.mxu0 %v1473
      %1499 = vmatpush.msra.mxu0 %v1472
      %1500 = vmatpush.msra.mxu0 %v1471
      %1501 = vmatmul.f32.gmra.mxu0 %v1480
      %v1502 = vpop.f32.mrf.mxu0
      %v1503 = vadd.f32 %v1477, %v1502
      %1504 = vmatmul.f32.gmra.mxu0 %v1483
      %v1505 = vpop.f32.mrf.mxu0
      %v1506 = vadd.f32 %v1477, %v1505
      %1507 = vdwg.mxu0
      %v1508 = vxor.u32 %v1503, 2147483648
      %v1509 = vxor.u32 %v1506, 2147483648
      %v1510 = vmul.f32 %v1508, 1.442695
      %v1511 = vpow.pop %v1510
      %v1512 = vmul.f32 %v1509, 1.442695
      %v1513 = vpow.pop %v1512
      %v1514 = vadd.f32 %v1511, 1.0
      %v1515 = vadd.f32 %v1513, 1.0
      %v1516 = vrcp.pop %v1514
      %v1517 = vmul.f32 %v1514, %v1516
      %v1518 = vsub.f32 1.0, %v1517
      %v1519 = vmul.f32 %v1516, %v1518
      %v1520 = vadd.f32 %v1516, %v1519
      %vm1521 = vweird.f32 %v1514
      %vm1522 = vweird.f32 %v1516
      %vm1523 = vmor %vm1521, %vm1522
      %v1524 = vsel %vm1523, %v1516, %v1520
      %v1525 = vand.u32 2147483647, %v1514
      %vm1526 = vcmp.eq.f32.partialorder %v1525, 8.507059e+37
      %v1527 = vand.u32 %v1514, 2147483648
      %v1528 = vor.u32 1.1754944e-38, %v1527
      %v1529 = vsel %vm1526, %v1528, %v1524
      %v1530 = vmul.f32 1.0, %v1529
      %v1531 = vrcp.pop %v1515
      %v1532 = vmul.f32 %v1515, %v1531
      %v1533 = vsub.f32 1.0, %v1532
      %v1534 = vmul.f32 %v1531, %v1533
      %v1535 = vadd.f32 %v1531, %v1534
      %vm1536 = vweird.f32 %v1515
      %vm1537 = vweird.f32 %v1531
      %vm1538 = vmor %vm1536, %vm1537
      %v1539 = vsel %vm1538, %v1531, %v1535
      %v1540 = vand.u32 2147483647, %v1515
      %vm1541 = vcmp.eq.f32.partialorder %v1540, 8.507059e+37
      %v1542 = vand.u32 %v1515, 2147483648
      %v1543 = vor.u32 1.1754944e-38, %v1542
      %v1544 = vsel %vm1541, %v1543, %v1539
      %v1545 = vmul.f32 1.0, %v1544
      %v1546 = vmul.f32 %v1530, %v1397
      %v1547 = vmul.f32 %v1545, %v1398
      %v1548 = vsel %vm747, %v1546, 0.0
      %1549 = vadd.xlane.f32.xlu0 %v1548
      %v1550 = vpop.xlane.xlu0 %1549
      %v1551 = vsel %vm747, %v1547, 0.0
      %1552 = vadd.xlane.f32.xlu0 %v1551
      %v1553 = vpop.xlane.xlu0 %1552
      %v1554 = vlog2.pop %v1550
      %v1555 = vmul.f32 %v1554, 0.6931472
      %v1556 = vlog2.pop %v1553
      %v1557 = vmul.f32 %v1556, 0.6931472
      %v1558 = vmax.f32 %v1555, -100.0
      %v1559 = vmax.f32 %v1557, -100.0
      %v1560 = vsub.f32 1.0, %v1550
      %v1561 = vsub.f32 1.0, %v1553
      %v1562 = vlog2.pop %v1560
      %v1563 = vmul.f32 %v1562, 0.6931472
      %v1564 = vlog2.pop %v1561
      %v1565 = vmul.f32 %v1564, 0.6931472
      %v1566 = vmax.f32 %v1563, -100.0
      %v1567 = vmax.f32 %v1565, -100.0
      %v1568 = vmul.f32 %v1400, %v1558
      %v1569 = vmul.f32 %v1401, %v1559
      %v1570 = vsub.f32 1.0, %v1400
      %v1571 = vsub.f32 1.0, %v1401
      %v1572 = vmul.f32 %v1570, %v1566
      %v1573 = vmul.f32 %v1571, %v1567
      %v1574 = vadd.f32 %v1568, %v1572
      %v1575 = vadd.f32 %v1569, %v1573
      %v1576 = vsub.f32 0.0, %v1574
      %v1577 = vsub.f32 0.0, %v1575
      %vm1578 = vcmp.eq.s32.totalorder %v585, 4
      %v1579 = vsel %vm1578, %v1550, %v1379
      %v1580 = vsel %vm1578, %v1553, %v1380
      %1582 = vset.pattern.permute.xlu0 0
      %1583 = vperm.xlu0 %1582, %v1576
      %v1584 = vpop.permute.xlu0 %1583
      %1587 = vset.pattern.permute.xlu0 0
      %1588 = vperm.xlu0 %1587, %v1577
      %v1589 = vpop.permute.xlu0 %1588
      %v1591 = vsel %vm1578, %v1584, %v1391
      %v1592 = vsel %vm1578, %v1589, %v1392
      %s1593 = scalar_lea.vmem %s522, 80
      %v1594 = vld [vmem:[%s1593] sm:$0xff]
      %v1595 = vld [vmem:[%s1593 + $0x8] sm:$0xff]
      %s1596 = scalar_lea.vmem %s534, 80
      %v1597 = vld [vmem:[%s1596] sm:$0xff]
      %v1598 = vld [vmem:[%s1596 + $0x8] sm:$0xff]
      %s1599 = scalar_lea.vmem %s546, 80
      %v1600 = vld [vmem:[%s1599] sm:$0xff]
      %v1601 = vld [vmem:[%s1599 + $0x8] sm:$0xff]
      %v1602 = vld [vmem:[%s4] sm:$0xff]
      %v1603 = vld [vmem:[%s4 + $0x8] sm:$0xff]
      %v1604 = vld [vmem:[%s4 + $0x10] sm:$0xff]
      %v1605 = vld [vmem:[%s4 + $0x18] sm:$0xff]
      %v1606 = vld [vmem:[%s5] sm:$0xff]
      %v1607 = vld [vmem:[%s5 + $0x8] sm:$0xff]
      %v1609 = vsel %vm600, %v1594, 0
      %v1612 = vsel %vm600, %v1595, 0
      %1614 = vmatpush.msra.mxu0 0.0
      %1615 = vmatpush.msra.mxu0 0.0
      %1616 = vmatpush.msra.mxu0 0.0
      %1617 = vmatpush.msra.mxu0 0.0
      %1618 = vmatpush.msra.mxu0 0.0
      %1619 = vmatpush.msra.mxu0 0.0
      %1620 = vmatpush.msra.mxu0 0.0
      %1621 = vmatpush.msra.mxu0 0.0
      %1622 = vmatpush.msra.mxu0 0.0
      %1623 = vmatpush.msra.mxu0 0.0
      %1624 = vmatpush.msra.mxu0 0.0
      %1625 = vmatpush.msra.mxu0 0.0
      %1626 = vmatpush.msra.mxu0 0.0
      %1627 = vmatpush.msra.mxu0 0.0
      %1628 = vmatpush.msra.mxu0 %v1607
      %1629 = vmatpush.msra.mxu0 %v1606
      %1630 = vmatmul.f32.gmra.mxu0 %v1609
      %v1631 = vpop.f32.mrf.mxu0
      %v1632 = vadd.f32 0.0, %v1631
      %1633 = vmatmul.f32.gmra.mxu0 %v1612
      %v1634 = vpop.f32.mrf.mxu0
      %v1635 = vadd.f32 0.0, %v1634
      %1636 = vdwg.mxu0
      %1637 = vmatpush.msra.mxu0 0.0
      %1638 = vmatpush.msra.mxu0 0.0
      %1639 = vmatpush.msra.mxu0 0.0
      %1640 = vmatpush.msra.mxu0 0.0
      %1641 = vmatpush.msra.mxu0 0.0
      %1642 = vmatpush.msra.mxu0 0.0
      %1643 = vmatpush.msra.mxu0 0.0
      %1644 = vmatpush.msra.mxu0 0.0
      %1645 = vmatpush.msra.mxu0 0.0
      %1646 = vmatpush.msra.mxu0 0.0
      %1647 = vmatpush.msra.mxu0 0.0
      %1648 = vmatpush.msra.mxu0 0.0
      %1649 = vmatpush.msra.mxu0 %v1605
      %1650 = vmatpush.msra.mxu0 %v1604
      %1651 = vmatpush.msra.mxu0 %v1603
      %1652 = vmatpush.msra.mxu0 %v1602
      %1653 = vmatmul.f32.gmra.mxu0 %v1480
      %v1654 = vpop.f32.mrf.mxu0
      %v1655 = vadd.f32 %v1632, %v1654
      %1656 = vmatmul.f32.gmra.mxu0 %v1483
      %v1657 = vpop.f32.mrf.mxu0
      %v1658 = vadd.f32 %v1635, %v1657
      %1659 = vdwg.mxu0
      %v1660 = vld [vmem:[%s6] sm:$0x1]
      %v1662 = vperm.slane %v1660, 0
      %v1664 = vadd.f32 %v1655, %v1662
      %v1665 = vadd.f32 %v1658, %v1662
      %v1666 = vtanh.pop %v1664
      %v1667 = vtanh.pop %v1665
      %s1668 = scalar_lea.vmem %s572, 80
      %1669 = vst.msk [vmem:[%s1668] sm:$0xff] %vm630, %v1666
      %1670 = vst.msk [vmem:[%s1668 + $0x8] sm:$0xff] %vm630, %v1667
      %v1671 = vld [vmem:[%s7] sm:$0xff]
      %v1672 = vld [vmem:[%s7 + $0x8] sm:$0xff]
      %v1673 = vld [vmem:[%s7 + $0x10] sm:$0xff]
      %v1674 = vld [vmem:[%s7 + $0x18] sm:$0xff]
      %v1675 = vld [vmem:[%s8] sm:$0x1]
      %v1677 = vperm.slane %v1675, 0
      %v1680 = vsel %vm630, %v1666, 0
      %v1683 = vsel %vm630, %v1667, 0
      %1685 = vmatpush.msra.mxu0 0.0
      %1686 = vmatpush.msra.mxu0 0.0
      %1687 = vmatpush.msra.mxu0 0.0
      %1688 = vmatpush.msra.mxu0 0.0
      %1689 = vmatpush.msra.mxu0 0.0
      %1690 = vmatpush.msra.mxu0 0.0
      %1691 = vmatpush.msra.mxu0 0.0
      %1692 = vmatpush.msra.mxu0 0.0
      %1693 = vmatpush.msra.mxu0 0.0
      %1694 = vmatpush.msra.mxu0 0.0
      %1695 = vmatpush.msra.mxu0 0.0
      %1696 = vmatpush.msra.mxu0 0.0
      %1697 = vmatpush.msra.mxu0 %v1674
      %1698 = vmatpush.msra.mxu0 %v1673
      %1699 = vmatpush.msra.mxu0 %v1672
      %1700 = vmatpush.msra.mxu0 %v1671
      %1701 = vmatmul.f32.gmra.mxu0 %v1680
      %v1702 = vpop.f32.mrf.mxu0
      %v1703 = vadd.f32 %v1677, %v1702
      %1704 = vmatmul.f32.gmra.mxu0 %v1683
      %v1705 = vpop.f32.mrf.mxu0
      %v1706 = vadd.f32 %v1677, %v1705
      %1707 = vdwg.mxu0
      %v1708 = vxor.u32 %v1703, 2147483648
      %v1709 = vxor.u32 %v1706, 2147483648
      %v1710 = vmul.f32 %v1708, 1.442695
      %v1711 = vpow.pop %v1710
      %v1712 = vmul.f32 %v1709, 1.442695
      %v1713 = vpow.pop %v1712
      %v1714 = vadd.f32 %v1711, 1.0
      %v1715 = vadd.f32 %v1713, 1.0
      %v1716 = vrcp.pop %v1714
      %v1717 = vmul.f32 %v1714, %v1716
      %v1718 = vsub.f32 1.0, %v1717
      %v1719 = vmul.f32 %v1716, %v1718
      %v1720 = vadd.f32 %v1716, %v1719
      %vm1721 = vweird.f32 %v1714
      %vm1722 = vweird.f32 %v1716
      %vm1723 = vmor %vm1721, %vm1722
      %v1724 = vsel %vm1723, %v1716, %v1720
      %v1725 = vand.u32 2147483647, %v1714
      %vm1726 = vcmp.eq.f32.partialorder %v1725, 8.507059e+37
      %v1727 = vand.u32 %v1714, 2147483648
      %v1728 = vor.u32 1.1754944e-38, %v1727
      %v1729 = vsel %vm1726, %v1728, %v1724
      %v1730 = vmul.f32 1.0, %v1729
      %v1731 = vrcp.pop %v1715
      %v1732 = vmul.f32 %v1715, %v1731
      %v1733 = vsub.f32 1.0, %v1732
      %v1734 = vmul.f32 %v1731, %v1733
      %v1735 = vadd.f32 %v1731, %v1734
      %vm1736 = vweird.f32 %v1715
      %vm1737 = vweird.f32 %v1731
      %vm1738 = vmor %vm1736, %vm1737
      %v1739 = vsel %vm1738, %v1731, %v1735
      %v1740 = vand.u32 2147483647, %v1715
      %vm1741 = vcmp.eq.f32.partialorder %v1740, 8.507059e+37
      %v1742 = vand.u32 %v1715, 2147483648
      %v1743 = vor.u32 1.1754944e-38, %v1742
      %v1744 = vsel %vm1741, %v1743, %v1739
      %v1745 = vmul.f32 1.0, %v1744
      %v1746 = vmul.f32 %v1730, %v1597
      %v1747 = vmul.f32 %v1745, %v1598
      %v1748 = vsel %vm747, %v1746, 0.0
      %1749 = vadd.xlane.f32.xlu0 %v1748
      %v1750 = vpop.xlane.xlu0 %1749
      %v1751 = vsel %vm747, %v1747, 0.0
      %1752 = vadd.xlane.f32.xlu0 %v1751
      %v1753 = vpop.xlane.xlu0 %1752
      %v1754 = vlog2.pop %v1750
      %v1755 = vmul.f32 %v1754, 0.6931472
      %v1756 = vlog2.pop %v1753
      %v1757 = vmul.f32 %v1756, 0.6931472
      %v1758 = vmax.f32 %v1755, -100.0
      %v1759 = vmax.f32 %v1757, -100.0
      %v1760 = vsub.f32 1.0, %v1750
      %v1761 = vsub.f32 1.0, %v1753
      %v1762 = vlog2.pop %v1760
      %v1763 = vmul.f32 %v1762, 0.6931472
      %v1764 = vlog2.pop %v1761
      %v1765 = vmul.f32 %v1764, 0.6931472
      %v1766 = vmax.f32 %v1763, -100.0
      %v1767 = vmax.f32 %v1765, -100.0
      %v1768 = vmul.f32 %v1600, %v1758
      %v1769 = vmul.f32 %v1601, %v1759
      %v1770 = vsub.f32 1.0, %v1600
      %v1771 = vsub.f32 1.0, %v1601
      %v1772 = vmul.f32 %v1770, %v1766
      %v1773 = vmul.f32 %v1771, %v1767
      %v1774 = vadd.f32 %v1768, %v1772
      %v1775 = vadd.f32 %v1769, %v1773
      %v1776 = vsub.f32 0.0, %v1774
      %v1777 = vsub.f32 0.0, %v1775
      %vm1778 = vcmp.eq.s32.totalorder %v585, 5
      %v1779 = vsel %vm1778, %v1750, %v1579
      %v1780 = vsel %vm1778, %v1753, %v1580
      %1782 = vset.pattern.permute.xlu0 0
      %1783 = vperm.xlu0 %1782, %v1776
      %v1784 = vpop.permute.xlu0 %1783
      %1787 = vset.pattern.permute.xlu0 0
      %1788 = vperm.xlu0 %1787, %v1777
      %v1789 = vpop.permute.xlu0 %1788
      %v1791 = vsel %vm1778, %v1784, %v1591
      %v1792 = vsel %vm1778, %v1789, %v1592
      %s1793 = scalar_lea.vmem %s522, 96
      %v1794 = vld [vmem:[%s1793] sm:$0xff]
      %v1795 = vld [vmem:[%s1793 + $0x8] sm:$0xff]
      %s1796 = scalar_lea.vmem %s534, 96
      %v1797 = vld [vmem:[%s1796] sm:$0xff]
      %v1798 = vld [vmem:[%s1796 + $0x8] sm:$0xff]
      %s1799 = scalar_lea.vmem %s546, 96
      %v1800 = vld [vmem:[%s1799] sm:$0xff]
      %v1801 = vld [vmem:[%s1799 + $0x8] sm:$0xff]
      %v1802 = vld [vmem:[%s4] sm:$0xff]
      %v1803 = vld [vmem:[%s4 + $0x8] sm:$0xff]
      %v1804 = vld [vmem:[%s4 + $0x10] sm:$0xff]
      %v1805 = vld [vmem:[%s4 + $0x18] sm:$0xff]
      %v1806 = vld [vmem:[%s5] sm:$0xff]
      %v1807 = vld [vmem:[%s5 + $0x8] sm:$0xff]
      %v1809 = vsel %vm600, %v1794, 0
      %v1812 = vsel %vm600, %v1795, 0
      %1814 = vmatpush.msra.mxu0 0.0
      %1815 = vmatpush.msra.mxu0 0.0
      %1816 = vmatpush.msra.mxu0 0.0
      %1817 = vmatpush.msra.mxu0 0.0
      %1818 = vmatpush.msra.mxu0 0.0
      %1819 = vmatpush.msra.mxu0 0.0
      %1820 = vmatpush.msra.mxu0 0.0
      %1821 = vmatpush.msra.mxu0 0.0
      %1822 = vmatpush.msra.mxu0 0.0
      %1823 = vmatpush.msra.mxu0 0.0
      %1824 = vmatpush.msra.mxu0 0.0
      %1825 = vmatpush.msra.mxu0 0.0
      %1826 = vmatpush.msra.mxu0 0.0
      %1827 = vmatpush.msra.mxu0 0.0
      %1828 = vmatpush.msra.mxu0 %v1807
      %1829 = vmatpush.msra.mxu0 %v1806
      %1830 = vmatmul.f32.gmra.mxu0 %v1809
      %v1831 = vpop.f32.mrf.mxu0
      %v1832 = vadd.f32 0.0, %v1831
      %1833 = vmatmul.f32.gmra.mxu0 %v1812
      %v1834 = vpop.f32.mrf.mxu0
      %v1835 = vadd.f32 0.0, %v1834
      %1836 = vdwg.mxu0
      %1837 = vmatpush.msra.mxu0 0.0
      %1838 = vmatpush.msra.mxu0 0.0
      %1839 = vmatpush.msra.mxu0 0.0
      %1840 = vmatpush.msra.mxu0 0.0
      %1841 = vmatpush.msra.mxu0 0.0
      %1842 = vmatpush.msra.mxu0 0.0
      %1843 = vmatpush.msra.mxu0 0.0
      %1844 = vmatpush.msra.mxu0 0.0
      %1845 = vmatpush.msra.mxu0 0.0
      %1846 = vmatpush.msra.mxu0 0.0
      %1847 = vmatpush.msra.mxu0 0.0
      %1848 = vmatpush.msra.mxu0 0.0
      %1849 = vmatpush.msra.mxu0 %v1805
      %1850 = vmatpush.msra.mxu0 %v1804
      %1851 = vmatpush.msra.mxu0 %v1803
      %1852 = vmatpush.msra.mxu0 %v1802
      %1853 = vmatmul.f32.gmra.mxu0 %v1680
      %v1854 = vpop.f32.mrf.mxu0
      %v1855 = vadd.f32 %v1832, %v1854
      %1856 = vmatmul.f32.gmra.mxu0 %v1683
      %v1857 = vpop.f32.mrf.mxu0
      %v1858 = vadd.f32 %v1835, %v1857
      %1859 = vdwg.mxu0
      %v1860 = vld [vmem:[%s6] sm:$0x1]
      %v1862 = vperm.slane %v1860, 0
      %v1864 = vadd.f32 %v1855, %v1862
      %v1865 = vadd.f32 %v1858, %v1862
      %v1866 = vtanh.pop %v1864
      %v1867 = vtanh.pop %v1865
      %s1868 = scalar_lea.vmem %s572, 96
      %1869 = vst.msk [vmem:[%s1868] sm:$0xff] %vm630, %v1866
      %1870 = vst.msk [vmem:[%s1868 + $0x8] sm:$0xff] %vm630, %v1867
      %v1871 = vld [vmem:[%s7] sm:$0xff]
      %v1872 = vld [vmem:[%s7 + $0x8] sm:$0xff]
      %v1873 = vld [vmem:[%s7 + $0x10] sm:$0xff]
      %v1874 = vld [vmem:[%s7 + $0x18] sm:$0xff]
      %v1875 = vld [vmem:[%s8] sm:$0x1]
      %v1877 = vperm.slane %v1875, 0
      %v1880 = vsel %vm630, %v1866, 0
      %v1883 = vsel %vm630, %v1867, 0
      %1885 = vmatpush.msra.mxu0 0.0
      %1886 = vmatpush.msra.mxu0 0.0
      %1887 = vmatpush.msra.mxu0 0.0
      %1888 = vmatpush.msra.mxu0 0.0
      %1889 = vmatpush.msra.mxu0 0.0
      %1890 = vmatpush.msra.mxu0 0.0
      %1891 = vmatpush.msra.mxu0 0.0
      %1892 = vmatpush.msra.mxu0 0.0
      %1893 = vmatpush.msra.mxu0 0.0
      %1894 = vmatpush.msra.mxu0 0.0
      %1895 = vmatpush.msra.mxu0 0.0
      %1896 = vmatpush.msra.mxu0 0.0
      %1897 = vmatpush.msra.mxu0 %v1874
      %1898 = vmatpush.msra.mxu0 %v1873
      %1899 = vmatpush.msra.mxu0 %v1872
      %1900 = vmatpush.msra.mxu0 %v1871
      %1901 = vmatmul.f32.gmra.mxu0 %v1880
      %v1902 = vpop.f32.mrf.mxu0
      %v1903 = vadd.f32 %v1877, %v1902
      %1904 = vmatmul.f32.gmra.mxu0 %v1883
      %v1905 = vpop.f32.mrf.mxu0
      %v1906 = vadd.f32 %v1877, %v1905
      %1907 = vdwg.mxu0
      %v1908 = vxor.u32 %v1903, 2147483648
      %v1909 = vxor.u32 %v1906, 2147483648
      %v1910 = vmul.f32 %v1908, 1.442695
      %v1911 = vpow.pop %v1910
      %v1912 = vmul.f32 %v1909, 1.442695
      %v1913 = vpow.pop %v1912
      %v1914 = vadd.f32 %v1911, 1.0
      %v1915 = vadd.f32 %v1913, 1.0
      %v1916 = vrcp.pop %v1914
      %v1917 = vmul.f32 %v1914, %v1916
      %v1918 = vsub.f32 1.0, %v1917
      %v1919 = vmul.f32 %v1916, %v1918
      %v1920 = vadd.f32 %v1916, %v1919
      %vm1921 = vweird.f32 %v1914
      %vm1922 = vweird.f32 %v1916
      %vm1923 = vmor %vm1921, %vm1922
      %v1924 = vsel %vm1923, %v1916, %v1920
      %v1925 = vand.u32 2147483647, %v1914
      %vm1926 = vcmp.eq.f32.partialorder %v1925, 8.507059e+37
      %v1927 = vand.u32 %v1914, 2147483648
      %v1928 = vor.u32 1.1754944e-38, %v1927
      %v1929 = vsel %vm1926, %v1928, %v1924
      %v1930 = vmul.f32 1.0, %v1929
      %v1931 = vrcp.pop %v1915
      %v1932 = vmul.f32 %v1915, %v1931
      %v1933 = vsub.f32 1.0, %v1932
      %v1934 = vmul.f32 %v1931, %v1933
      %v1935 = vadd.f32 %v1931, %v1934
      %vm1936 = vweird.f32 %v1915
      %vm1937 = vweird.f32 %v1931
      %vm1938 = vmor %vm1936, %vm1937
      %v1939 = vsel %vm1938, %v1931, %v1935
      %v1940 = vand.u32 2147483647, %v1915
      %vm1941 = vcmp.eq.f32.partialorder %v1940, 8.507059e+37
      %v1942 = vand.u32 %v1915, 2147483648
      %v1943 = vor.u32 1.1754944e-38, %v1942
      %v1944 = vsel %vm1941, %v1943, %v1939
      %v1945 = vmul.f32 1.0, %v1944
      %v1946 = vmul.f32 %v1930, %v1797
      %v1947 = vmul.f32 %v1945, %v1798
      %v1948 = vsel %vm747, %v1946, 0.0
      %1949 = vadd.xlane.f32.xlu0 %v1948
      %v1950 = vpop.xlane.xlu0 %1949
      %v1951 = vsel %vm747, %v1947, 0.0
      %1952 = vadd.xlane.f32.xlu0 %v1951
      %v1953 = vpop.xlane.xlu0 %1952
      %v1954 = vlog2.pop %v1950
      %v1955 = vmul.f32 %v1954, 0.6931472
      %v1956 = vlog2.pop %v1953
      %v1957 = vmul.f32 %v1956, 0.6931472
      %v1958 = vmax.f32 %v1955, -100.0
      %v1959 = vmax.f32 %v1957, -100.0
      %v1960 = vsub.f32 1.0, %v1950
      %v1961 = vsub.f32 1.0, %v1953
      %v1962 = vlog2.pop %v1960
      %v1963 = vmul.f32 %v1962, 0.6931472
      %v1964 = vlog2.pop %v1961
      %v1965 = vmul.f32 %v1964, 0.6931472
      %v1966 = vmax.f32 %v1963, -100.0
      %v1967 = vmax.f32 %v1965, -100.0
      %v1968 = vmul.f32 %v1800, %v1958
      %v1969 = vmul.f32 %v1801, %v1959
      %v1970 = vsub.f32 1.0, %v1800
      %v1971 = vsub.f32 1.0, %v1801
      %v1972 = vmul.f32 %v1970, %v1966
      %v1973 = vmul.f32 %v1971, %v1967
      %v1974 = vadd.f32 %v1968, %v1972
      %v1975 = vadd.f32 %v1969, %v1973
      %v1976 = vsub.f32 0.0, %v1974
      %v1977 = vsub.f32 0.0, %v1975
      %vm1978 = vcmp.eq.s32.totalorder %v585, 6
      %v1979 = vsel %vm1978, %v1950, %v1779
      %v1980 = vsel %vm1978, %v1953, %v1780
      %1982 = vset.pattern.permute.xlu0 0
      %1983 = vperm.xlu0 %1982, %v1976
      %v1984 = vpop.permute.xlu0 %1983
      %1987 = vset.pattern.permute.xlu0 0
      %1988 = vperm.xlu0 %1987, %v1977
      %v1989 = vpop.permute.xlu0 %1988
      %v1991 = vsel %vm1978, %v1984, %v1791
      %v1992 = vsel %vm1978, %v1989, %v1792
      %s1993 = scalar_lea.vmem %s522, 112
      %v1994 = vld [vmem:[%s1993] sm:$0xff]
      %v1995 = vld [vmem:[%s1993 + $0x8] sm:$0xff]
      %s1996 = scalar_lea.vmem %s534, 112
      %v1997 = vld [vmem:[%s1996] sm:$0xff]
      %v1998 = vld [vmem:[%s1996 + $0x8] sm:$0xff]
      %s1999 = scalar_lea.vmem %s546, 112
      %v2000 = vld [vmem:[%s1999] sm:$0xff]
      %v2001 = vld [vmem:[%s1999 + $0x8] sm:$0xff]
      %v2002 = vld [vmem:[%s4] sm:$0xff]
      %v2003 = vld [vmem:[%s4 + $0x8] sm:$0xff]
      %v2004 = vld [vmem:[%s4 + $0x10] sm:$0xff]
      %v2005 = vld [vmem:[%s4 + $0x18] sm:$0xff]
      %v2006 = vld [vmem:[%s5] sm:$0xff]
      %v2007 = vld [vmem:[%s5 + $0x8] sm:$0xff]
      %v2009 = vsel %vm600, %v1994, 0
      %v2012 = vsel %vm600, %v1995, 0
      %2014 = vmatpush.msra.mxu0 0.0
      %2015 = vmatpush.msra.mxu0 0.0
      %2016 = vmatpush.msra.mxu0 0.0
      %2017 = vmatpush.msra.mxu0 0.0
      %2018 = vmatpush.msra.mxu0 0.0
      %2019 = vmatpush.msra.mxu0 0.0
      %2020 = vmatpush.msra.mxu0 0.0
      %2021 = vmatpush.msra.mxu0 0.0
      %2022 = vmatpush.msra.mxu0 0.0
      %2023 = vmatpush.msra.mxu0 0.0
      %2024 = vmatpush.msra.mxu0 0.0
      %2025 = vmatpush.msra.mxu0 0.0
      %2026 = vmatpush.msra.mxu0 0.0
      %2027 = vmatpush.msra.mxu0 0.0
      %2028 = vmatpush.msra.mxu0 %v2007
      %2029 = vmatpush.msra.mxu0 %v2006
      %2030 = vmatmul.f32.gmra.mxu0 %v2009
      %v2031 = vpop.f32.mrf.mxu0
      %v2032 = vadd.f32 0.0, %v2031
      %2033 = vmatmul.f32.gmra.mxu0 %v2012
      %v2034 = vpop.f32.mrf.mxu0
      %v2035 = vadd.f32 0.0, %v2034
      %2036 = vdwg.mxu0
      %2037 = vmatpush.msra.mxu0 0.0
      %2038 = vmatpush.msra.mxu0 0.0
      %2039 = vmatpush.msra.mxu0 0.0
      %2040 = vmatpush.msra.mxu0 0.0
      %2041 = vmatpush.msra.mxu0 0.0
      %2042 = vmatpush.msra.mxu0 0.0
      %2043 = vmatpush.msra.mxu0 0.0
      %2044 = vmatpush.msra.mxu0 0.0
      %2045 = vmatpush.msra.mxu0 0.0
      %2046 = vmatpush.msra.mxu0 0.0
      %2047 = vmatpush.msra.mxu0 0.0
      %2048 = vmatpush.msra.mxu0 0.0
      %2049 = vmatpush.msra.mxu0 %v2005
      %2050 = vmatpush.msra.mxu0 %v2004
      %2051 = vmatpush.msra.mxu0 %v2003
      %2052 = vmatpush.msra.mxu0 %v2002
      %2053 = vmatmul.f32.gmra.mxu0 %v1880
      %v2054 = vpop.f32.mrf.mxu0
      %v2055 = vadd.f32 %v2032, %v2054
      %2056 = vmatmul.f32.gmra.mxu0 %v1883
      %v2057 = vpop.f32.mrf.mxu0
      %v2058 = vadd.f32 %v2035, %v2057
      %2059 = vdwg.mxu0
      %v2060 = vld [vmem:[%s6] sm:$0x1]
      %v2062 = vperm.slane %v2060, 0
      %v2064 = vadd.f32 %v2055, %v2062
      %v2065 = vadd.f32 %v2058, %v2062
      %v2066 = vtanh.pop %v2064
      %v2067 = vtanh.pop %v2065
      %s2068 = scalar_lea.vmem %s572, 112
      %2069 = vst.msk [vmem:[%s2068] sm:$0xff] %vm630, %v2066
      %2070 = vst.msk [vmem:[%s2068 + $0x8] sm:$0xff] %vm630, %v2067
      %v2071 = vld [vmem:[%s7] sm:$0xff]
      %v2072 = vld [vmem:[%s7 + $0x8] sm:$0xff]
      %v2073 = vld [vmem:[%s7 + $0x10] sm:$0xff]
      %v2074 = vld [vmem:[%s7 + $0x18] sm:$0xff]
      %v2075 = vld [vmem:[%s8] sm:$0x1]
      %v2077 = vperm.slane %v2075, 0
      %v2080 = vsel %vm630, %v2066, 0
      %v2083 = vsel %vm630, %v2067, 0
      %2085 = vmatpush.msra.mxu0 0.0
      %2086 = vmatpush.msra.mxu0 0.0
      %2087 = vmatpush.msra.mxu0 0.0
      %2088 = vmatpush.msra.mxu0 0.0
      %2089 = vmatpush.msra.mxu0 0.0
      %2090 = vmatpush.msra.mxu0 0.0
      %2091 = vmatpush.msra.mxu0 0.0
      %2092 = vmatpush.msra.mxu0 0.0
      %2093 = vmatpush.msra.mxu0 0.0
      %2094 = vmatpush.msra.mxu0 0.0
      %2095 = vmatpush.msra.mxu0 0.0
      %2096 = vmatpush.msra.mxu0 0.0
      %2097 = vmatpush.msra.mxu0 %v2074
      %2098 = vmatpush.msra.mxu0 %v2073
      %2099 = vmatpush.msra.mxu0 %v2072
      %2100 = vmatpush.msra.mxu0 %v2071
      %2101 = vmatmul.f32.gmra.mxu0 %v2080
      %v2102 = vpop.f32.mrf.mxu0
      %v2103 = vadd.f32 %v2077, %v2102
      %2104 = vmatmul.f32.gmra.mxu0 %v2083
      %v2105 = vpop.f32.mrf.mxu0
      %v2106 = vadd.f32 %v2077, %v2105
      %2107 = vdwg.mxu0
      %v2108 = vxor.u32 %v2103, 2147483648
      %v2109 = vxor.u32 %v2106, 2147483648
      %v2110 = vmul.f32 %v2108, 1.442695
      %v2111 = vpow.pop %v2110
      %v2112 = vmul.f32 %v2109, 1.442695
      %v2113 = vpow.pop %v2112
      %v2114 = vadd.f32 %v2111, 1.0
      %v2115 = vadd.f32 %v2113, 1.0
      %v2116 = vrcp.pop %v2114
      %v2117 = vmul.f32 %v2114, %v2116
      %v2118 = vsub.f32 1.0, %v2117
      %v2119 = vmul.f32 %v2116, %v2118
      %v2120 = vadd.f32 %v2116, %v2119
      %vm2121 = vweird.f32 %v2114
      %vm2122 = vweird.f32 %v2116
      %vm2123 = vmor %vm2121, %vm2122
      %v2124 = vsel %vm2123, %v2116, %v2120
      %v2125 = vand.u32 2147483647, %v2114
      %vm2126 = vcmp.eq.f32.partialorder %v2125, 8.507059e+37
      %v2127 = vand.u32 %v2114, 2147483648
      %v2128 = vor.u32 1.1754944e-38, %v2127
      %v2129 = vsel %vm2126, %v2128, %v2124
      %v2130 = vmul.f32 1.0, %v2129
      %v2131 = vrcp.pop %v2115
      %v2132 = vmul.f32 %v2115, %v2131
      %v2133 = vsub.f32 1.0, %v2132
      %v2134 = vmul.f32 %v2131, %v2133
      %v2135 = vadd.f32 %v2131, %v2134
      %vm2136 = vweird.f32 %v2115
      %vm2137 = vweird.f32 %v2131
      %vm2138 = vmor %vm2136, %vm2137
      %v2139 = vsel %vm2138, %v2131, %v2135
      %v2140 = vand.u32 2147483647, %v2115
      %vm2141 = vcmp.eq.f32.partialorder %v2140, 8.507059e+37
      %v2142 = vand.u32 %v2115, 2147483648
      %v2143 = vor.u32 1.1754944e-38, %v2142
      %v2144 = vsel %vm2141, %v2143, %v2139
      %v2145 = vmul.f32 1.0, %v2144
      %v2146 = vmul.f32 %v2130, %v1997
      %v2147 = vmul.f32 %v2145, %v1998
      %v2148 = vsel %vm747, %v2146, 0.0
      %2149 = vadd.xlane.f32.xlu0 %v2148
      %v2150 = vpop.xlane.xlu0 %2149
      %v2151 = vsel %vm747, %v2147, 0.0
      %2152 = vadd.xlane.f32.xlu0 %v2151
      %v2153 = vpop.xlane.xlu0 %2152
      %v2154 = vlog2.pop %v2150
      %v2155 = vmul.f32 %v2154, 0.6931472
      %v2156 = vlog2.pop %v2153
      %v2157 = vmul.f32 %v2156, 0.6931472
      %v2158 = vmax.f32 %v2155, -100.0
      %v2159 = vmax.f32 %v2157, -100.0
      %v2160 = vsub.f32 1.0, %v2150
      %v2161 = vsub.f32 1.0, %v2153
      %v2162 = vlog2.pop %v2160
      %v2163 = vmul.f32 %v2162, 0.6931472
      %v2164 = vlog2.pop %v2161
      %v2165 = vmul.f32 %v2164, 0.6931472
      %v2166 = vmax.f32 %v2163, -100.0
      %v2167 = vmax.f32 %v2165, -100.0
      %v2168 = vmul.f32 %v2000, %v2158
      %v2169 = vmul.f32 %v2001, %v2159
      %v2170 = vsub.f32 1.0, %v2000
      %v2171 = vsub.f32 1.0, %v2001
      %v2172 = vmul.f32 %v2170, %v2166
      %v2173 = vmul.f32 %v2171, %v2167
      %v2174 = vadd.f32 %v2168, %v2172
      %v2175 = vadd.f32 %v2169, %v2173
      %v2176 = vsub.f32 0.0, %v2174
      %v2177 = vsub.f32 0.0, %v2175
      %vm2178 = vcmp.eq.s32.totalorder %v585, 7
      %v2179 = vsel %vm2178, %v2150, %v1979
      %v2180 = vsel %vm2178, %v2153, %v1980
      %2182 = vset.pattern.permute.xlu0 0
      %2183 = vperm.xlu0 %2182, %v2176
      %v2184 = vpop.permute.xlu0 %2183
      %2187 = vset.pattern.permute.xlu0 0
      %2188 = vperm.xlu0 %2187, %v2177
      %v2189 = vpop.permute.xlu0 %2188
      %v2191 = vsel %vm2178, %v2184, %v1991
      %v2192 = vsel %vm2178, %v2189, %v1992
      %2193 = vst.msk [vmem:[#allocation2] sm:$0xff] %vm630, %v2066
      %2194 = vst.msk [vmem:[#allocation2 + $0x8] sm:$0xff] %vm630, %v2067
      %2195 = vxpose.xlu0.b32.start [1/16] %v2179, 128
      %2196 = vxpose.xlu0.b32.cont [2/16] %v2180, 128
      %2197 = vxpose.xlu0.b32.cont [3/16] 0.0, 128
      %2198 = vxpose.xlu0.b32.cont [4/16] 0.0, 128
      %2199 = vxpose.xlu0.b32.cont [5/16] 0.0, 128
      %2200 = vxpose.xlu0.b32.cont [6/16] 0.0, 128
      %2201 = vxpose.xlu0.b32.cont [7/16] 0.0, 128
      %2202 = vxpose.xlu0.b32.cont [8/16] 0.0, 128
      %2203 = vxpose.xlu0.b32.cont [9/16] 0.0, 128
      %2204 = vxpose.xlu0.b32.cont [10/16] 0.0, 128
      %2205 = vxpose.xlu0.b32.cont [11/16] 0.0, 128
      %2206 = vxpose.xlu0.b32.cont [12/16] 0.0, 128
      %2207 = vxpose.xlu0.b32.cont [13/16] 0.0, 128
      %2208 = vxpose.xlu0.b32.cont [14/16] 0.0, 128
      %2209 = vxpose.xlu0.b32.cont [15/16] 0.0, 128
      %2210 = vxpose.xlu0.b32.end [16/16] 0.0, 128
      %v2211 = vpop.trf.xlu0
      %v2212 = vpop.trf.xlu0
      %v2213 = vpop.trf.xlu0
      %v2214 = vpop.trf.xlu0
      %v2215 = vpop.trf.xlu0
      %v2216 = vpop.trf.xlu0
      %v2217 = vpop.trf.xlu0
      %v2218 = vpop.trf.xlu0
      %v2219 = vpop.trf.xlu0
      %v2220 = vpop.trf.xlu0
      %v2221 = vpop.trf.xlu0
      %v2222 = vpop.trf.xlu0
      %v2223 = vpop.trf.xlu0
      %v2224 = vpop.trf.xlu0
      %v2225 = vpop.trf.xlu0
      %v2226 = vpop.trf.xlu0
      %2227 = vst.msk [vmem:[%s555] sm:$0xff] %vm600, %v2211
      %2228 = vxpose.xlu0.b32.start [1/16] %v2191, 128
      %2229 = vxpose.xlu0.b32.cont [2/16] %v2192, 128
      %2230 = vxpose.xlu0.b32.cont [3/16] 0.0, 128
      %2231 = vxpose.xlu0.b32.cont [4/16] 0.0, 128
      %2232 = vxpose.xlu0.b32.cont [5/16] 0.0, 128
      %2233 = vxpose.xlu0.b32.cont [6/16] 0.0, 128
      %2234 = vxpose.xlu0.b32.cont [7/16] 0.0, 128
      %2235 = vxpose.xlu0.b32.cont [8/16] 0.0, 128
      %2236 = vxpose.xlu0.b32.cont [9/16] 0.0, 128
      %2237 = vxpose.xlu0.b32.cont [10/16] 0.0, 128
      %2238 = vxpose.xlu0.b32.cont [11/16] 0.0, 128
      %2239 = vxpose.xlu0.b32.cont [12/16] 0.0, 128
      %2240 = vxpose.xlu0.b32.cont [13/16] 0.0, 128
      %2241 = vxpose.xlu0.b32.cont [14/16] 0.0, 128
      %2242 = vxpose.xlu0.b32.cont [15/16] 0.0, 128
      %2243 = vxpose.xlu0.b32.end [16/16] 0.0, 128
      %v2244 = vpop.trf.xlu0
      %v2245 = vpop.trf.xlu0
      %v2246 = vpop.trf.xlu0
      %v2247 = vpop.trf.xlu0
      %v2248 = vpop.trf.xlu0
      %v2249 = vpop.trf.xlu0
      %v2250 = vpop.trf.xlu0
      %v2251 = vpop.trf.xlu0
      %v2252 = vpop.trf.xlu0
      %v2253 = vpop.trf.xlu0
      %v2254 = vpop.trf.xlu0
      %v2255 = vpop.trf.xlu0
      %v2256 = vpop.trf.xlu0
      %v2257 = vpop.trf.xlu0
      %v2258 = vpop.trf.xlu0
      %v2259 = vpop.trf.xlu0
      %2260 = vst.msk [vmem:[%s562] sm:$0xff] %vm600, %v2244
      %p2261 = scmp.lt.s32.totalorder %s28, 2
      %s2262 = scalar_select %p2261, %s28, 2
      %p2263 = scmp.lt.s32.totalorder %s27, 0
      %s2264 = scalar_select %p2263, %s27, 0
      %s2265 = sadd.s32 %s2264, %s2262
      %s2266 = smul.addr %s2265, 8
      %s2267 = scalar_lea.vmem %s9, %s2266
      %p2268 = scmp.lt.s32.totalorder %s28, 2
      %s2269 = scalar_select %p2268, %s28, 2
      %p2270 = scmp.lt.s32.totalorder %s27, 0
      %s2271 = scalar_select %p2270, %s27, 0
      %s2272 = sadd.s32 %s2271, %s2269
      %s2273 = smul.addr %s2272, 8
      %s2274 = scalar_lea.vmem %s10, %s2273
      %s2275 = smul.u32 8, %s28
      %s2276 = smul.u32 2, %s27
      %p2277 = scmp.lt.s32.totalorder %s2275, 23
      %s2278 = scalar_select %p2277, %s2275, 23
      %p2279 = scmp.lt.s32.totalorder %s2276, 1
      %s2280 = scalar_select %p2279, %s2276, 1
      %s2281 = smul.addr %s2278, 2
      %s2282 = sadd.s32 %s2280, %s2281
      %s2283 = smul.addr %s2282, 8
      %s2284 = scalar_lea.vmem %s11, %s2283
      // Predicated region
      $region61: #{rnn_layer_sequence_forward.1} parent=55 // pred_check
        %p2285 = pneg %p270
      $region62: #{rnn_layer_sequence_forward.1} parent=55 // pred_check_branch
        %2287 = sbr.rel (%p2285) target = $region64
      $region63: #{rnn_layer_sequence_forward.1} parent=55 // pred_region
        _
      $region64: #{rnn_layer_sequence_forward.1} parent=55 // pred_fallthru
        _
      // Predicated region
      $region65: #{rnn_layer_sequence_forward.1} parent=55 // pred_check
        %p2288 = pneg %p298
      $region66: #{rnn_layer_sequence_forward.1} parent=55 // pred_check_branch
        %2290 = sbr.rel (%p2288) target = $region68
      $region67: #{rnn_layer_sequence_forward.1} parent=55 // pred_region
        _
      $region68: #{rnn_layer_sequence_forward.1} parent=55 // pred_fallthru
        _
      // Predicated region
      $region69: #{rnn_layer_sequence_forward.1} parent=55 // pred_check
        %p2291 = pneg %p326
      $region70: #{rnn_layer_sequence_forward.1} parent=55 // pred_check_branch
        %2293 = sbr.rel (%p2291) target = $region72
      $region71: #{rnn_layer_sequence_forward.1} parent=55 // pred_region
        %s2294 = smul.u32 8, %s28
        %s2295 = smul.u32 2, %s27
      $region72: #{rnn_layer_sequence_forward.1} parent=55 // pred_fallthru
        _
    $region56: #{rnn_layer_sequence_forward.1} parent=5 // pred_fallthru
      _
    %p2296 = scmp.le.s32.totalorder 2, %s18
    // Predicated region
    $region73: #{rnn_layer_sequence_forward.1} parent=5 // pred_check
      %p2297 = pneg %p2296
    $region74: #{rnn_layer_sequence_forward.1} parent=5 // pred_check_branch
      %2299 = sbr.rel (%p2297) target = $region76
    $region75: #{rnn_layer_sequence_forward.1} parent=5 // pred_region
      %s2300 = ssub.s32 %s18, 2
      // Predicated region
      $region77: #{rnn_layer_sequence_forward.1} parent=75 // pred_check
        %p2301 = pneg %p276
      $region78: #{rnn_layer_sequence_forward.1} parent=75 // pred_check_branch
        %2303 = sbr.rel (%p2301) target = $region80
      $region79: #{rnn_layer_sequence_forward.1} parent=75 // pred_region
        %p2304 = scmp.lt.s32.totalorder %s30, 2
        %s2305 = scalar_select %p2304, %s30, 2
        %p2306 = scmp.lt.s32.totalorder %s29, 0
        %s2307 = scalar_select %p2306, %s29, 0
        %s2308 = sadd.s32 %s2307, %s2305
        %s2309 = smul.addr %s2308, 8
        %s2310 = scalar_lea.vmem %s9, %s2309
      $region80: #{rnn_layer_sequence_forward.1} parent=75 // pred_fallthru
        _
      // Predicated region
      $region81: #{rnn_layer_sequence_forward.1} parent=75 // pred_check
        %p2311 = pneg %p304
      $region82: #{rnn_layer_sequence_forward.1} parent=75 // pred_check_branch
        %2313 = sbr.rel (%p2311) target = $region84
      $region83: #{rnn_layer_sequence_forward.1} parent=75 // pred_region
        %p2314 = scmp.lt.s32.totalorder %s30, 2
        %s2315 = scalar_select %p2314, %s30, 2
        %p2316 = scmp.lt.s32.totalorder %s29, 0
        %s2317 = scalar_select %p2316, %s29, 0
        %s2318 = sadd.s32 %s2317, %s2315
        %s2319 = smul.addr %s2318, 8
        %s2320 = scalar_lea.vmem %s10, %s2319
      $region84: #{rnn_layer_sequence_forward.1} parent=75 // pred_fallthru
        _
      // Predicated region
      $region85: #{rnn_layer_sequence_forward.1} parent=75 // pred_check
        %p2321 = pneg %p332
      $region86: #{rnn_layer_sequence_forward.1} parent=75 // pred_check_branch
        %2323 = sbr.rel (%p2321) target = $region88
      $region87: #{rnn_layer_sequence_forward.1} parent=75 // pred_region
        %s2324 = smul.u32 8, %s30
        %s2325 = smul.u32 2, %s29
        %p2326 = scmp.lt.s32.totalorder %s2324, 23
        %s2327 = scalar_select %p2326, %s2324, 23
        %p2328 = scmp.lt.s32.totalorder %s2325, 1
        %s2329 = scalar_select %p2328, %s2325, 1
        %s2330 = smul.addr %s2327, 2
        %s2331 = sadd.s32 %s2329, %s2330
        %s2332 = smul.addr %s2331, 8
        %s2333 = scalar_lea.vmem %s11, %s2332
      $region88: #{rnn_layer_sequence_forward.1} parent=75 // pred_fallthru
        _
    $region76: #{rnn_layer_sequence_forward.1} parent=5 // pred_fallthru
      _
  $region6: #{rnn_layer_sequence_forward.1} parent=0 // loop_footer
    %s22 = sadd.s32 1, %s18
  $region7: #{rnn_layer_sequence_forward.1} parent=0 // loop_footer_branch
    %17 = sbr.rel target = $region3
  $region8: #{rnn_layer_sequence_forward.1} parent=0 // loop_exit
    _

</llo_original>
